<compile_context>
chip_gen: v6e
topology: v6e:2x2x1
jax: 0.10.0
libtpu: 0.0.40
codegen_flags: <defaults>
</compile_context>

<pallas_src>
import functools
import math

import jax
import jax.numpy as jnp
from jax import lax
from jax.experimental import pallas as pl
from jax.experimental.pallas import tpu as pltpu

# ----------------------------- config ---------------------------------------
PATCH = 8          # patch size (CLIP ViT uses 16; small synthetic value here)
WIDTH = 32         # transformer width
LAYERS = 2         # transformer depth
HEADS = 4          # attention heads
EMBED_DIM = 16     # output projection dim
IMG = 32           # input spatial size (stands in for 224)
GRID = IMG // PATCH


# --------------------------- small helpers ----------------------------------
def _row_tiles(m):
    """Pick an M tile: whole array when small, else 256-row tiles."""
    if m <= 512:
        return m, 1
    return 256, pl.cdiv(m, 256)


def _ln_rows(x, g, b, eps=1e-5):
    """LayerNorm over the last dim (f32 math). g/b are (1, D)."""
    mean = jnp.mean(x, axis=-1, keepdims=True)
    var = jnp.mean(jnp.square(x - mean), axis=-1, keepdims=True)
    return (x - mean) * lax.rsqrt(var + eps) * g + b


def _quick_gelu(x):
    return x * jax.nn.sigmoid(1.702 * x)


# ------------------------- Pallas kernels -----------------------------------
def _mm_kernel(x_ref, w_ref, bias_ref, o_ref, *, act):
    """y = act(x @ W + bias); bf16 MXU operands, f32 accumulation."""
    y = jnp.dot(x_ref[...].astype(jnp.bfloat16), w_ref[...],
                preferred_element_type=jnp.float32) + bias_ref[...]
    if act == "quick_gelu":
        y = _quick_gelu(y)
    o_ref[...] = y.astype(o_ref.dtype)


def _ln_mm_kernel(x_ref, g_ref, b_ref, w_ref, bias_ref, o_ref, *, act):
    """y = act(LN(x) @ W + bias) -- LayerNorm fused into the matmul."""
    xn = _ln_rows(x_ref[...].astype(jnp.float32), g_ref[...], b_ref[...])
    y = jnp.dot(xn.astype(jnp.bfloat16), w_ref[...],
                preferred_element_type=jnp.float32) + bias_ref[...]
    if act == "quick_gelu":
        y = _quick_gelu(y)
    o_ref[...] = y.astype(o_ref.dtype)


def _ln_kernel(x_ref, g_ref, b_ref, o_ref):
    o_ref[...] = _ln_rows(x_ref[...].astype(jnp.float32),
                          g_ref[...], b_ref[...]).astype(o_ref.dtype)


def _attn_block_kernel(x_ref, g_ref, b_ref, wq_ref, wk_ref, wv_ref,
                       bq_ref, bk_ref, bv_ref, wo_ref, bo_ref, o_ref,
                       *, scale, value_only):
    """Fused: h + out_proj(MHA(LN1(h)))   (or value-only path for MaskCLIP).

    One batch element per grid step.  Per-head weights are stacked on the
    leading ref axis so all in-kernel slicing is leading-axis ref indexing.
    """
    x = x_ref[...].astype(jnp.float32)                      # (T, D)
    xn = _ln_rows(x, g_ref[...], b_ref[...])
    xb = xn.astype(jnp.bfloat16)
    heads = wv_ref.shape[0]
    T, D = x.shape

    out = jnp.zeros((T, D), jnp.float32)
    for h in range(heads):
        v_h = jnp.dot(xb, wv_ref[h],
                      preferred_element_type=jnp.float32) + bv_ref[h]   # (T, Dh)
        if value_only:
            # MaskCLIP trick: last block attention == out_proj(v_proj(ln1(x)))
            o_h = v_h
        else:
            q_h = (jnp.dot(xb, wq_ref[h], preferred_element_type=jnp.float32)
                   + bq_ref[h]) * scale                                 # scale on q
            k_h = jnp.dot(xb, wk_ref[h],
                          preferred_element_type=jnp.float32) + bk_ref[h]
            s = jnp.dot(q_h, k_h.T, preferred_element_type=jnp.float32)  # (T, T)
            s = s - jnp.max(s, axis=-1, keepdims=True)
            p = jnp.exp(s)
            p = p * pl.reciprocal(jnp.sum(p, axis=-1, keepdims=True), approx=True)
            o_h = jnp.dot(p, v_h, preferred_element_type=jnp.float32)    # (T, Dh)
        # out_proj of the concatenated heads == sum_h o_h @ Wo[h*Dh:(h+1)*Dh, :]
        out = out + jnp.dot(o_h.astype(jnp.bfloat16), wo_ref[h],
                            preferred_element_type=jnp.float32)
    out = out + bo_ref[...]
    o_ref[...] = (x + out).astype(o_ref.dtype)


def _mlp_block_kernel(x_ref, g_ref, b_ref, wfc_ref, bfc_ref, wpr_ref, bpr_ref,
                      o_ref):
    """Fused: h + proj(QuickGELU(fc(LN2(h)))).  One batch element per step."""
    x = x_ref[...].astype(jnp.float32)                      # (T, D)
    xn = _ln_rows(x, g_ref[...], b_ref[...])
    hid = jnp.dot(xn.astype(jnp.bfloat16), wfc_ref[...],
                  preferred_element_type=jnp.float32) + bfc_ref[...]
    hid = _quick_gelu(hid)                                  # f32 elementwise
    m = jnp.dot(hid.astype(jnp.bfloat16), wpr_ref[...],
                preferred_element_type=jnp.float32) + bpr_ref[...]
    o_ref[...] = (x + m).astype(o_ref.dtype)


# --------------------------- Pallas wrappers --------------------------------
def pallas_matmul(x, w, bias=None, act=None):
    """act(x @ W + bias).  x: (M, K) f32, W: (K, N).  No K/M padding."""
    M, K = x.shape
    _, N = w.shape
    if bias is None:
        bias = jnp.zeros((N,), jnp.float32)
    tm, gm = _row_tiles(M)
    return pl.pallas_call(
        functools.partial(_mm_kernel, act=act),
        out_shape=jax.ShapeDtypeStruct((M, N), jnp.float32),
        grid=(gm,),
        in_specs=[
            pl.BlockSpec((tm, K), lambda i: (i, 0)),
            pl.BlockSpec((K, N), lambda i: (0, 0)),     # weight resident in VMEM
            pl.BlockSpec((1, N), lambda i: (0, 0)),
        ],
        out_specs=pl.BlockSpec((tm, N), lambda i: (i, 0)),
        compiler_params=pltpu.CompilerParams(dimension_semantics=("parallel",)),
    )(x.astype(jnp.float32), w.astype(jnp.bfloat16),
      bias.reshape(1, N).astype(jnp.float32))


def pallas_ln_matmul(x, gamma, beta, w, bias=None, act=None):
    """act(LayerNorm(x) @ W + bias) in a single kernel."""
    M, K = x.shape
    _, N = w.shape
    if bias is None:
        bias = jnp.zeros((N,), jnp.float32)
    tm, gm = _row_tiles(M)
    return pl.pallas_call(
        functools.partial(_ln_mm_kernel, act=act),
        out_shape=jax.ShapeDtypeStruct((M, N), jnp.float32),
        grid=(gm,),
        in_specs=[
            pl.BlockSpec((tm, K), lambda i: (i, 0)),
            pl.BlockSpec((1, K), lambda i: (0, 0)),
            pl.BlockSpec((1, K), lambda i: (0, 0)),
            pl.BlockSpec((K, N), lambda i: (0, 0)),
            pl.BlockSpec((1, N), lambda i: (0, 0)),
        ],
        out_specs=pl.BlockSpec((tm, N), lambda i: (i, 0)),
        compiler_params=pltpu.CompilerParams(dimension_semantics=("parallel",)),
    )(x.astype(jnp.float32),
      gamma.reshape(1, K).astype(jnp.float32),
      beta.reshape(1, K).astype(jnp.float32),
      w.astype(jnp.bfloat16),
      bias.reshape(1, N).astype(jnp.float32))


def pallas_layernorm(x, gamma, beta):
    """Standalone row-tiled LayerNorm (used only for ln_pre)."""
    M, D = x.shape
    tm, gm = _row_tiles(M)
    return pl.pallas_call(
        _ln_kernel,
        out_shape=jax.ShapeDtypeStruct((M, D), jnp.float32),
        grid=(gm,),
        in_specs=[
            pl.BlockSpec((tm, D), lambda i: (i, 0)),
            pl.BlockSpec((1, D), lambda i: (0, 0)),
            pl.BlockSpec((1, D), lambda i: (0, 0)),
        ],
        out_specs=pl.BlockSpec((tm, D), lambda i: (i, 0)),
        compiler_params=pltpu.CompilerParams(dimension_semantics=("parallel",)),
    )(x.astype(jnp.float32), gamma.reshape(1, D).astype(jnp.float32),
      beta.reshape(1, D).astype(jnp.float32))


def pallas_attn_block(x, blk, *, value_only):
    """x: (B, T, D).  Fused ln1 + QKV + MHA (or value-only) + out_proj + res."""
    B, T, D = x.shape
    heads = HEADS
    Dh = D // heads

    w_in = blk["in_proj_w"]        # (D, 3D), columns ordered [q | k | v]
    b_in = blk["in_proj_b"]        # (3D,)

    def stack_w(w2d):              # (D, D) -> (H, D, Dh), bf16 MXU operand
        return (w2d.reshape(D, heads, Dh).transpose(1, 0, 2)
                .astype(jnp.bfloat16))

    def stack_b(b1d):              # (D,) -> (H, 1, Dh), f32
        return b1d.reshape(heads, 1, Dh).astype(jnp.float32)

    wq, wk, wv = (stack_w(w_in[:, 0 * D:1 * D]),
                  stack_w(w_in[:, 1 * D:2 * D]),
                  stack_w(w_in[:, 2 * D:3 * D]))
    bq, bk, bv = (stack_b(b_in[0 * D:1 * D]),
                  stack_b(b_in[1 * D:2 * D]),
                  stack_b(b_in[2 * D:3 * D]))
    wo = blk["out_w"].reshape(heads, Dh, D).astype(jnp.bfloat16)   # (H, Dh, D)
    bo = blk["out_b"].reshape(1, D).astype(jnp.float32)

    tok_spec = pl.BlockSpec((None, T, D), lambda b: (b, 0, 0))

    def rep(shape):                # replicated (weight) block across batch grid
        return pl.BlockSpec(shape, lambda b, _s=shape: (0,) * len(_s))

    kernel = functools.partial(_attn_block_kernel,
                               scale=1.0 / math.sqrt(Dh),
                               value_only=value_only)
    return pl.pallas_call(
        kernel,
        out_shape=jax.ShapeDtypeStruct((B, T, D), jnp.float32),
        grid=(B,),
        in_specs=[
            tok_spec,
            rep((1, D)), rep((1, D)),                                  # ln1 g, b
            rep((heads, D, Dh)), rep((heads, D, Dh)), rep((heads, D, Dh)),
            rep((heads, 1, Dh)), rep((heads, 1, Dh)), rep((heads, 1, Dh)),
            rep((heads, Dh, D)), rep((1, D)),                          # out proj
        ],
        out_specs=tok_spec,
        compiler_params=pltpu.CompilerParams(dimension_semantics=("parallel",)),
    )(x.astype(jnp.float32),
      blk["ln1_g"].reshape(1, D).astype(jnp.float32),
      blk["ln1_b"].reshape(1, D).astype(jnp.float32),
      wq, wk, wv, bq, bk, bv, wo, bo)


def pallas_mlp_block(x, blk):
    """x: (B, T, D).  Fused ln2 + fc + QuickGELU + proj + residual add."""
    B, T, D = x.shape
    Dff = blk["fc_w"].shape[1]
    tok_spec = pl.BlockSpec((None, T, D), lambda b: (b, 0, 0))

    def rep(shape):
        return pl.BlockSpec(shape, lambda b, _s=shape: (0,) * len(_s))

    return pl.pallas_call(
        _mlp_block_kernel,
        out_shape=jax.ShapeDtypeStruct((B, T, D), jnp.float32),
        grid=(B,),
        in_specs=[
            tok_spec,
            rep((1, D)), rep((1, D)),
            rep((D, Dff)), rep((1, Dff)),
            rep((Dff, D)), rep((1, D)),
        ],
        out_specs=tok_spec,
        compiler_params=pltpu.CompilerParams(dimension_semantics=("parallel",)),
    )(x.astype(jnp.float32),
      blk["ln2_g"].reshape(1, D).astype(jnp.float32),
      blk["ln2_b"].reshape(1, D).astype(jnp.float32),
      blk["fc_w"].astype(jnp.bfloat16),
      blk["fc_b"].reshape(1, Dff).astype(jnp.float32),
      blk["proj_w"].astype(jnp.bfloat16),
      blk["proj_b"].reshape(1, D).astype(jnp.float32))


# ----------------------------- model ----------------------------------------
def maskclip_featurizer(x, params):
    """x: (B, 3, H, W) float32 in [0, 1] (NCHW, already resized).

    Returns (B, EMBED_DIM, H // PATCH, W // PATCH) float32 (NCHW)."""
    B, C, H, W = x.shape
    ph, pw = H // PATCH, W // PATCH
    N = ph * pw
    T = N + 1
    D = WIDTH

    # transform (Normalize); Resize is assumed already applied.  The per-channel
    # normalize is folded into the patch-embed matmul:
    #   ((x - m)/s) @ W  ==  x @ (W * (1/s) per row)  -  ((m/s) per row) @ W
    mean = jnp.array([0.485, 0.456, 0.406], jnp.float32)
    std = jnp.array([0.229, 0.224, 0.225], jnp.float32)
    row_inv_std = jnp.repeat(1.0 / std, PATCH * PATCH)          # rows = (c,ki,kj)
    row_mean_over_std = jnp.repeat(mean / std, PATCH * PATCH)
    conv_w = params["conv1_w"] * row_inv_std[:, None]
    conv_b = -(row_mean_over_std @ params["conv1_w"])

    # conv1 (kernel=stride=PATCH, no bias) as a matmul over flattened patches,
    # flattened in (c, ki, kj) order to match the PyTorch conv weight layout.
    patches = (x.reshape(B, C, ph, PATCH, pw, PATCH)
                 .transpose(0, 2, 4, 1, 3, 5)
                 .reshape(B * N, C * PATCH * PATCH))
    tok = pallas_matmul(patches, conv_w, conv_b)                # (B*N, WIDTH)
    tok = tok.reshape(B, N, D)

    cls = jnp.broadcast_to(params["class_embedding"].reshape(1, 1, D), (B, 1, D))
    tok = jnp.concatenate([cls, tok], axis=1)                   # (B, T, WIDTH)
    tok = tok + params["pos_embedding"][None]                   # (T, WIDTH)

    h = pallas_layernorm(tok.reshape(B * T, D),
                         params["ln_pre_g"], params["ln_pre_b"]).reshape(B, T, D)

    n_layers = len(params["blocks"])
    for li, blk in enumerate(params["blocks"]):
        # MaskCLIP: last block uses value-only attention (out_proj(v_proj(ln1)))
        h = pallas_attn_block(h, blk, value_only=(li == n_layers - 1))
        h = pallas_mlp_block(h, blk)

    # ln_post fused into the final projection.
    feats = pallas_ln_matmul(h.reshape(B * T, D),
                             params["ln_post_g"], params["ln_post_b"],
                             params["proj"])                    # (B*T, EMBED_DIM)
    feats = feats.reshape(B, T, EMBED_DIM)[:, 1:]               # drop CLS
    feats = feats.astype(jnp.float32)
    # reshape(b, ph, pw, -1).permute(0, 3, 1, 2)
    return feats.reshape(B, ph, pw, EMBED_DIM).transpose(0, 3, 1, 2)


# --------------------------- parameters -------------------------------------
def init_params(key):
    keys = iter(jax.random.split(key, 64))

    def nrm(shape, scale=0.02):
        return jax.random.normal(next(keys), shape, jnp.float32) * scale

    params = dict(
        conv1_w=nrm((3 * PATCH * PATCH, WIDTH)),
        class_embedding=nrm((WIDTH,)),
        pos_embedding=nrm((GRID * GRID + 1, WIDTH)),
        ln_pre_g=jnp.ones((WIDTH,), jnp.float32),
        ln_pre_b=jnp.zeros((WIDTH,), jnp.float32),
        ln_post_g=jnp.ones((WIDTH,), jnp.float32),
        ln_post_b=jnp.zeros((WIDTH,), jnp.float32),
        proj=nrm((WIDTH, EMBED_DIM)),
        blocks=[],
    )
    for _ in range(LAYERS):
        params["blocks"].append(dict(
            ln1_g=jnp.ones((WIDTH,), jnp.float32),
            ln1_b=jnp.zeros((WIDTH,), jnp.float32),
            in_proj_w=nrm((WIDTH, 3 * WIDTH)),
            in_proj_b=jnp.zeros((3 * WIDTH,), jnp.float32),
            out_w=nrm((WIDTH, WIDTH)),
            out_b=jnp.zeros((WIDTH,), jnp.float32),
            ln2_g=jnp.ones((WIDTH,), jnp.float32),
            ln2_b=jnp.zeros((WIDTH,), jnp.float32),
            fc_w=nrm((WIDTH, 4 * WIDTH)),
            fc_b=jnp.zeros((4 * WIDTH,), jnp.float32),
            proj_w=nrm((4 * WIDTH, WIDTH)),
            proj_b=jnp.zeros((WIDTH,), jnp.float32),
        ))
    return params


# ------------------------------ main -----------------------------------------
if __name__ == "__main__":
    key = jax.random.PRNGKey(0)
    k_img, k_par = jax.random.split(key)
    x = jax.random.uniform(k_img, (2, 3, IMG, IMG), jnp.float32)  # NCHW "image"
    params = init_params(k_par)

    fwd = jax.jit(maskclip_featurizer)
    out = jax.block_until_ready(fwd(x, params))

    assert out.shape == (2, EMBED_DIM, IMG // PATCH, IMG // PATCH), out.shape
    assert out.dtype == jnp.float32
    assert bool(jnp.all(jnp.isfinite(out)))
    print("KERNEL_OK")
</pallas_src>

<mosaic_0001>
module attributes {stable_mosaic.version = 11 : i64} {
  func.func @_mm_kernel(%arg0: i32, %arg1: memref<32x192xf32, #tpu.memory_space<vmem>>, %arg2: memref<192x32xbf16, #tpu.memory_space<vmem>>, %arg3: memref<1x32xf32, #tpu.memory_space<vmem>>, %arg4: memref<32x32xf32, #tpu.memory_space<vmem>>) attributes {dimension_semantics = [#tpu.dimension_semantics<parallel>], iteration_bounds = array<i64: 1>, scalar_prefetch = 0 : i64, scratch_operands = 0 : i64, tpu.core_type = #tpu.core_type<tc>, window_params = [{transform_indices = @transform_0, window_bounds = array<i64: 32, 192>}, {pipeline_mode = #tpu.pipeline_mode<synchronous>, transform_indices = @transform_1, window_bounds = array<i64: 192, 32>}, {pipeline_mode = #tpu.pipeline_mode<synchronous>, transform_indices = @transform_2, window_bounds = array<i64: 1, 32>}, {transform_indices = @transform_3, window_bounds = array<i64: 32, 32>}]} {
    %c0 = arith.constant 0 : index
    %c0_0 = arith.constant 0 : index
    %0 = vector.load %arg1[%c0, %c0_0] : memref<32x192xf32, #tpu.memory_space<vmem>>, vector<32x192xf32>
    %1 = arith.truncf %0 : vector<32x192xf32> to vector<32x192xbf16>
    %c0_1 = arith.constant 0 : index
    %c0_2 = arith.constant 0 : index
    %2 = vector.load %arg2[%c0_1, %c0_2] : memref<192x32xbf16, #tpu.memory_space<vmem>>, vector<192x32xbf16>
    %cst = arith.constant dense<0.000000e+00> : vector<32x32xf32>
    %3 = tpu.matmul %1, %2, %cst {dimension_numbers = #tpu.dot_dimension_numbers<[1], [0], [0], [1], [0, 0, 1, 1], [], []>} : vector<32x192xbf16>, vector<192x32xbf16>, vector<32x32xf32> -> vector<32x32xf32>
    %c0_3 = arith.constant 0 : index
    %c0_4 = arith.constant 0 : index
    %4 = vector.load %arg3[%c0_3, %c0_4] : memref<1x32xf32, #tpu.memory_space<vmem>>, vector<1x32xf32>
    %5 = vector.broadcast %4 : vector<1x32xf32> to vector<32x32xf32>
    %6 = arith.addf %3, %5 : vector<32x32xf32>
    %c0_5 = arith.constant 0 : index
    %c0_6 = arith.constant 0 : index
    %7 = vector.load %arg4[%c0_5, %c0_6] : memref<32x32xf32, #tpu.memory_space<vmem>>, vector<32x32xf32>
    tpu.vector_store %arg4[%c0_5, %c0_6], %6 {strides = array<i32>} : memref<32x32xf32, #tpu.memory_space<vmem>>, vector<32x32xf32>,
    return
  }
  func.func @transform_0(%arg0: i32) -> (i32, i32) {
    %c0_i32 = arith.constant 0 : i32
    %c0_i32_0 = arith.constant 0 : i32
    return %arg0, %c0_i32 : i32, i32
  }
  func.func @transform_1(%arg0: i32) -> (i32, i32) {
    %c0_i32 = arith.constant 0 : i32
    %c0_i32_0 = arith.constant 0 : i32
    %c0_i32_1 = arith.constant 0 : i32
    return %c0_i32, %c0_i32_0 : i32, i32
  }
  func.func @transform_2(%arg0: i32) -> (i32, i32) {
    %c0_i32 = arith.constant 0 : i32
    %c0_i32_0 = arith.constant 0 : i32
    %c0_i32_1 = arith.constant 0 : i32
    return %c0_i32, %c0_i32_0 : i32, i32
  }
  func.func @transform_3(%arg0: i32) -> (i32, i32) {
    %c0_i32 = arith.constant 0 : i32
    %c0_i32_0 = arith.constant 0 : i32
    return %arg0, %c0_i32 : i32, i32
  }
}

module attributes {stable_mosaic.version = 11 : i64} {
  func.func @_ln_kernel(%arg0: i32, %arg1: memref<34x32xf32, #tpu.memory_space<vmem>>, %arg2: memref<1x32xf32, #tpu.memory_space<vmem>>, %arg3: memref<1x32xf32, #tpu.memory_space<vmem>>, %arg4: memref<34x32xf32, #tpu.memory_space<vmem>>) attributes {dimension_semantics = [#tpu.dimension_semantics<parallel>], iteration_bounds = array<i64: 1>, scalar_prefetch = 0 : i64, scratch_operands = 0 : i64, tpu.core_type = #tpu.core_type<tc>, window_params = [{transform_indices = @transform_0, window_bounds = array<i64: 34, 32>}, {pipeline_mode = #tpu.pipeline_mode<synchronous>, transform_indices = @transform_1, window_bounds = array<i64: 1, 32>}, {pipeline_mode = #tpu.pipeline_mode<synchronous>, transform_indices = @transform_2, window_bounds = array<i64: 1, 32>}, {transform_indices = @transform_3, window_bounds = array<i64: 34, 32>}]} {
    %c0 = arith.constant 0 : index
    %c0_0 = arith.constant 0 : index
    %0 = vector.load %arg1[%c0, %c0_0] : memref<34x32xf32, #tpu.memory_space<vmem>>, vector<34x32xf32>
    %c0_1 = arith.constant 0 : index
    %c0_2 = arith.constant 0 : index
    %1 = vector.load %arg2[%c0_1, %c0_2] : memref<1x32xf32, #tpu.memory_space<vmem>>, vector<1x32xf32>
    %c0_3 = arith.constant 0 : index
    %c0_4 = arith.constant 0 : index
    %2 = vector.load %arg3[%c0_3, %c0_4] : memref<1x32xf32, #tpu.memory_space<vmem>>, vector<1x32xf32>
    %cst = arith.constant dense<0.000000e+00> : vector<34xf32>
    %3 = vector.multi_reduction <add>, %0, %cst [1] : vector<34x32xf32> to vector<34xf32>
    %4 = vector.shape_cast %3 : vector<34xf32> to vector<34x1xf32>
    %cst_5 = arith.constant 3.200000e+01 : f32
    %5 = vector.broadcast %cst_5 : f32 to vector<34x1xf32>
    %6 = arith.divf %4, %5 : vector<34x1xf32>
    %7 = vector.broadcast %6 : vector<34x1xf32> to vector<34x32xf32>
    %8 = arith.subf %0, %7 : vector<34x32xf32>
    %9 = arith.mulf %8, %8 : vector<34x32xf32>
    %cst_6 = arith.constant dense<0.000000e+00> : vector<34xf32>
    %10 = vector.multi_reduction <add>, %9, %cst_6 [1] : vector<34x32xf32> to vector<34xf32>
    %11 = vector.shape_cast %10 : vector<34xf32> to vector<34x1xf32>
    %cst_7 = arith.constant 3.200000e+01 : f32
    %12 = vector.broadcast %cst_7 : f32 to vector<34x1xf32>
    %13 = arith.divf %11, %12 : vector<34x1xf32>
    %14 = vector.broadcast %6 : vector<34x1xf32> to vector<34x32xf32>
    %15 = arith.subf %0, %14 : vector<34x32xf32>
    %cst_8 = arith.constant 9.99999974E-6 : f32
    %16 = vector.broadcast %cst_8 : f32 to vector<34x1xf32>
    %17 = arith.addf %13, %16 : vector<34x1xf32>
    %18 = math.rsqrt %17 : vector<34x1xf32>
    %19 = vector.broadcast %18 : vector<34x1xf32> to vector<34x32xf32>
    %20 = arith.mulf %15, %19 : vector<34x32xf32>
    %21 = vector.broadcast %1 : vector<1x32xf32> to vector<34x32xf32>
    %22 = arith.mulf %20, %21 : vector<34x32xf32>
    %23 = vector.broadcast %2 : vector<1x32xf32> to vector<34x32xf32>
    %24 = arith.addf %22, %23 : vector<34x32xf32>
    %c0_9 = arith.constant 0 : index
    %c0_10 = arith.constant 0 : index
    %25 = vector.load %arg4[%c0_9, %c0_10] : memref<34x32xf32, #tpu.memory_space<vmem>>, vector<34x32xf32>
    tpu.vector_store %arg4[%c0_9, %c0_10], %24 {strides = array<i32>} : memref<34x32xf32, #tpu.memory_space<vmem>>, vector<34x32xf32>,
    return
  }
  func.func @transform_0(%arg0: i32) -> (i32, i32) {
    %c0_i32 = arith.constant 0 : i32
    %c0_i32_0 = arith.constant 0 : i32
    return %arg0, %c0_i32 : i32, i32
  }
  func.func @transform_1(%arg0: i32) -> (i32, i32) {
    %c0_i32 = arith.constant 0 : i32
    %c0_i32_0 = arith.constant 0 : i32
    %c0_i32_1 = arith.constant 0 : i32
    return %c0_i32, %c0_i32_0 : i32, i32
  }
  func.func @transform_2(%arg0: i32) -> (i32, i32) {
    %c0_i32 = arith.constant 0 : i32
    %c0_i32_0 = arith.constant 0 : i32
    %c0_i32_1 = arith.constant 0 : i32
    return %c0_i32, %c0_i32_0 : i32, i32
  }
  func.func @transform_3(%arg0: i32) -> (i32, i32) {
    %c0_i32 = arith.constant 0 : i32
    %c0_i32_0 = arith.constant 0 : i32
    return %arg0, %c0_i32 : i32, i32
  }
}

module attributes {stable_mosaic.version = 11 : i64} {
  func.func @_attn_block_kernel(%arg0: i32, %arg1: memref<1x17x32xf32, #tpu.memory_space<vmem>>, %arg2: memref<1x32xf32, #tpu.memory_space<vmem>>, %arg3: memref<1x32xf32, #tpu.memory_space<vmem>>, %arg4: memref<4x32x8xbf16, #tpu.memory_space<vmem>>, %arg5: memref<4x32x8xbf16, #tpu.memory_space<vmem>>, %arg6: memref<4x32x8xbf16, #tpu.memory_space<vmem>>, %arg7: memref<4x1x8xf32, #tpu.memory_space<vmem>>, %arg8: memref<4x1x8xf32, #tpu.memory_space<vmem>>, %arg9: memref<4x1x8xf32, #tpu.memory_space<vmem>>, %arg10: memref<4x8x32xbf16, #tpu.memory_space<vmem>>, %arg11: memref<1x32xf32, #tpu.memory_space<vmem>>, %arg12: memref<1x17x32xf32, #tpu.memory_space<vmem>>) attributes {dimension_semantics = [#tpu.dimension_semantics<parallel>], iteration_bounds = array<i64: 2>, scalar_prefetch = 0 : i64, scratch_operands = 0 : i64, tpu.core_type = #tpu.core_type<tc>, window_params = [{transform_indices = @transform_0, window_bounds = array<i64: 1, 17, 32>}, {pipeline_mode = #tpu.pipeline_mode<synchronous>, transform_indices = @transform_1, window_bounds = array<i64: 1, 32>}, {pipeline_mode = #tpu.pipeline_mode<synchronous>, transform_indices = @transform_2, window_bounds = array<i64: 1, 32>}, {pipeline_mode = #tpu.pipeline_mode<synchronous>, transform_indices = @transform_3, window_bounds = array<i64: 4, 32, 8>}, {pipeline_mode = #tpu.pipeline_mode<synchronous>, transform_indices = @transform_4, window_bounds = array<i64: 4, 32, 8>}, {pipeline_mode = #tpu.pipeline_mode<synchronous>, transform_indices = @transform_5, window_bounds = array<i64: 4, 32, 8>}, {pipeline_mode = #tpu.pipeline_mode<synchronous>, transform_indices = @transform_6, window_bounds = array<i64: 4, 1, 8>}, {pipeline_mode = #tpu.pipeline_mode<synchronous>, transform_indices = @transform_7, window_bounds = array<i64: 4, 1, 8>}, {pipeline_mode = #tpu.pipeline_mode<synchronous>, transform_indices = @transform_8, window_bounds = array<i64: 4, 1, 8>}, {pipeline_mode = #tpu.pipeline_mode<synchronous>, transform_indices = @transform_9, window_bounds = array<i64: 4, 8, 32>}, {pipeline_mode = #tpu.pipeline_mode<synchronous>, transform_indices = @transform_10, window_bounds = array<i64: 1, 32>}, {transform_indices = @transform_11, window_bounds = array<i64: 1, 17, 32>}]} {
    %c0 = arith.constant 0 : index
    %c0_0 = arith.constant 0 : index
    %c0_1 = arith.constant 0 : index
    %0 = vector.load %arg1[%c0, %c0_0, %c0_1] : memref<1x17x32xf32, #tpu.memory_space<vmem>>, vector<1x17x32xf32>
    %1 = vector.shape_cast %0 : vector<1x17x32xf32> to vector<17x32xf32>
    %c0_2 = arith.constant 0 : index
    %c0_3 = arith.constant 0 : index
    %2 = vector.load %arg2[%c0_2, %c0_3] : memref<1x32xf32, #tpu.memory_space<vmem>>, vector<1x32xf32>
    %c0_4 = arith.constant 0 : index
    %c0_5 = arith.constant 0 : index
    %3 = vector.load %arg3[%c0_4, %c0_5] : memref<1x32xf32, #tpu.memory_space<vmem>>, vector<1x32xf32>
    %cst = arith.constant dense<0.000000e+00> : vector<17xf32>
    %4 = vector.multi_reduction <add>, %1, %cst [1] : vector<17x32xf32> to vector<17xf32>
    %5 = vector.shape_cast %4 : vector<17xf32> to vector<17x1xf32>
    %cst_6 = arith.constant 3.200000e+01 : f32
    %6 = vector.broadcast %cst_6 : f32 to vector<17x1xf32>
    %7 = arith.divf %5, %6 : vector<17x1xf32>
    %8 = vector.broadcast %7 : vector<17x1xf32> to vector<17x32xf32>
    %9 = arith.subf %1, %8 : vector<17x32xf32>
    %10 = arith.mulf %9, %9 : vector<17x32xf32>
    %cst_7 = arith.constant dense<0.000000e+00> : vector<17xf32>
    %11 = vector.multi_reduction <add>, %10, %cst_7 [1] : vector<17x32xf32> to vector<17xf32>
    %12 = vector.shape_cast %11 : vector<17xf32> to vector<17x1xf32>
    %cst_8 = arith.constant 3.200000e+01 : f32
    %13 = vector.broadcast %cst_8 : f32 to vector<17x1xf32>
    %14 = arith.divf %12, %13 : vector<17x1xf32>
    %15 = vector.broadcast %7 : vector<17x1xf32> to vector<17x32xf32>
    %16 = arith.subf %1, %15 : vector<17x32xf32>
    %cst_9 = arith.constant 9.99999974E-6 : f32
    %17 = vector.broadcast %cst_9 : f32 to vector<17x1xf32>
    %18 = arith.addf %14, %17 : vector<17x1xf32>
    %19 = math.rsqrt %18 : vector<17x1xf32>
    %20 = vector.broadcast %19 : vector<17x1xf32> to vector<17x32xf32>
    %21 = arith.mulf %16, %20 : vector<17x32xf32>
    %22 = vector.broadcast %2 : vector<1x32xf32> to vector<17x32xf32>
    %23 = arith.mulf %21, %22 : vector<17x32xf32>
    %24 = vector.broadcast %3 : vector<1x32xf32> to vector<17x32xf32>
    %25 = arith.addf %23, %24 : vector<17x32xf32>
    %26 = arith.truncf %25 : vector<17x32xf32> to vector<17x32xbf16>
    %cst_10 = arith.constant 0.000000e+00 : f32
    %27 = vector.broadcast %cst_10 : f32 to vector<17x32xf32>
    %c0_11 = arith.constant 0 : index
    %c0_12 = arith.constant 0 : index
    %c0_13 = arith.constant 0 : index
    %28 = vector.load %arg6[%c0_11, %c0_12, %c0_13] : memref<4x32x8xbf16, #tpu.memory_space<vmem>>, vector<1x32x8xbf16>
    %29 = vector.shape_cast %28 : vector<1x32x8xbf16> to vector<32x8xbf16>
    %cst_14 = arith.constant dense<0.000000e+00> : vector<17x8xf32>
    %30 = tpu.matmul %26, %29, %cst_14 {dimension_numbers = #tpu.dot_dimension_numbers<[1], [0], [0], [1], [0, 0, 1, 1], [], []>} : vector<17x32xbf16>, vector<32x8xbf16>, vector<17x8xf32> -> vector<17x8xf32>
    %c0_15 = arith.constant 0 : index
    %c0_16 = arith.constant 0 : index
    %c0_17 = arith.constant 0 : index
    %31 = vector.load %arg9[%c0_15, %c0_16, %c0_17] : memref<4x1x8xf32, #tpu.memory_space<vmem>>, vector<1x1x8xf32>
    %32 = vector.shape_cast %31 : vector<1x1x8xf32> to vector<1x8xf32>
    %33 = vector.broadcast %32 : vector<1x8xf32> to vector<17x8xf32>
    %34 = arith.addf %30, %33 : vector<17x8xf32>
    %c0_18 = arith.constant 0 : index
    %c0_19 = arith.constant 0 : index
    %c0_20 = arith.constant 0 : index
    %35 = vector.load %arg4[%c0_18, %c0_19, %c0_20] : memref<4x32x8xbf16, #tpu.memory_space<vmem>>, vector<1x32x8xbf16>
    %36 = vector.shape_cast %35 : vector<1x32x8xbf16> to vector<32x8xbf16>
    %cst_21 = arith.constant dense<0.000000e+00> : vector<17x8xf32>
    %37 = tpu.matmul %26, %36, %cst_21 {dimension_numbers = #tpu.dot_dimension_numbers<[1], [0], [0], [1], [0, 0, 1, 1], [], []>} : vector<17x32xbf16>, vector<32x8xbf16>, vector<17x8xf32> -> vector<17x8xf32>
    %c0_22 = arith.constant 0 : index
    %c0_23 = arith.constant 0 : index
    %c0_24 = arith.constant 0 : index
    %38 = vector.load %arg7[%c0_22, %c0_23, %c0_24] : memref<4x1x8xf32, #tpu.memory_space<vmem>>, vector<1x1x8xf32>
    %39 = vector.shape_cast %38 : vector<1x1x8xf32> to vector<1x8xf32>
    %40 = vector.broadcast %39 : vector<1x8xf32> to vector<17x8xf32>
    %41 = arith.addf %37, %40 : vector<17x8xf32>
    %cst_25 = arith.constant 0.353553385 : f32
    %42 = vector.broadcast %cst_25 : f32 to vector<17x8xf32>
    %43 = arith.mulf %41, %42 : vector<17x8xf32>
    %c0_26 = arith.constant 0 : index
    %c0_27 = arith.constant 0 : index
    %c0_28 = arith.constant 0 : index
    %44 = vector.load %arg5[%c0_26, %c0_27, %c0_28] : memref<4x32x8xbf16, #tpu.memory_space<vmem>>, vector<1x32x8xbf16>
    %45 = vector.shape_cast %44 : vector<1x32x8xbf16> to vector<32x8xbf16>
    %cst_29 = arith.constant dense<0.000000e+00> : vector<17x8xf32>
    %46 = tpu.matmul %26, %45, %cst_29 {dimension_numbers = #tpu.dot_dimension_numbers<[1], [0], [0], [1], [0, 0, 1, 1], [], []>} : vector<17x32xbf16>, vector<32x8xbf16>, vector<17x8xf32> -> vector<17x8xf32>
    %c0_30 = arith.constant 0 : index
    %c0_31 = arith.constant 0 : index
    %c0_32 = arith.constant 0 : index
    %47 = vector.load %arg8[%c0_30, %c0_31, %c0_32] : memref<4x1x8xf32, #tpu.memory_space<vmem>>, vector<1x1x8xf32>
    %48 = vector.shape_cast %47 : vector<1x1x8xf32> to vector<1x8xf32>
    %49 = vector.broadcast %48 : vector<1x8xf32> to vector<17x8xf32>
    %50 = arith.addf %46, %49 : vector<17x8xf32>
    %51 = tpu.transpose %50, [1, 0] : vector<17x8xf32> -> vector<8x17xf32>
    %cst_33 = arith.constant dense<0.000000e+00> : vector<17x17xf32>
    %52 = tpu.matmul %43, %51, %cst_33 {dimension_numbers = #tpu.dot_dimension_numbers<[1], [0], [0], [1], [0, 0, 1, 1], [], []>} : vector<17x8xf32>, vector<8x17xf32>, vector<17x17xf32> -> vector<17x17xf32>
    %cst_34 = arith.constant dense<0xFF800000> : vector<17xf32>
    %53 = vector.multi_reduction <maximumf>, %52, %cst_34 [1] : vector<17x17xf32> to vector<17xf32>
    %54 = vector.shape_cast %53 : vector<17xf32> to vector<17x1xf32>
    %55 = vector.broadcast %54 : vector<17x1xf32> to vector<17x17xf32>
    %56 = arith.subf %52, %55 : vector<17x17xf32>
    %57 = math.exp %56 : vector<17x17xf32>
    %cst_35 = arith.constant dense<0.000000e+00> : vector<17xf32>
    %58 = vector.multi_reduction <add>, %57, %cst_35 [1] : vector<17x17xf32> to vector<17xf32>
    %59 = vector.shape_cast %58 : vector<17xf32> to vector<17x1xf32>
    %60 = tpu.reciprocal %59 {approx = true} : vector<17x1xf32> -> vector<17x1xf32>
    %61 = vector.broadcast %60 : vector<17x1xf32> to vector<17x17xf32>
    %62 = arith.mulf %57, %61 : vector<17x17xf32>
    %cst_36 = arith.constant dense<0.000000e+00> : vector<17x8xf32>
    %63 = tpu.matmul %62, %34, %cst_36 {dimension_numbers = #tpu.dot_dimension_numbers<[1], [0], [0], [1], [0, 0, 1, 1], [], []>} : vector<17x17xf32>, vector<17x8xf32>, vector<17x8xf32> -> vector<17x8xf32>
    %64 = arith.truncf %63 : vector<17x8xf32> to vector<17x8xbf16>
    %c0_37 = arith.constant 0 : index
    %c0_38 = arith.constant 0 : index
    %c0_39 = arith.constant 0 : index
    %65 = vector.load %arg10[%c0_37, %c0_38, %c0_39] : memref<4x8x32xbf16, #tpu.memory_space<vmem>>, vector<1x8x32xbf16>
    %66 = vector.shape_cast %65 : vector<1x8x32xbf16> to vector<8x32xbf16>
    %cst_40 = arith.constant dense<0.000000e+00> : vector<17x32xf32>
    %67 = tpu.matmul %64, %66, %cst_40 {dimension_numbers = #tpu.dot_dimension_numbers<[1], [0], [0], [1], [0, 0, 1, 1], [], []>} : vector<17x8xbf16>, vector<8x32xbf16>, vector<17x32xf32> -> vector<17x32xf32>
    %68 = arith.addf %27, %67 : vector<17x32xf32>
    %c1 = arith.constant 1 : index
    %c0_41 = arith.constant 0 : index
    %c0_42 = arith.constant 0 : index
    %69 = vector.load %arg6[%c1, %c0_41, %c0_42] : memref<4x32x8xbf16, #tpu.memory_space<vmem>>, vector<1x32x8xbf16>
    %70 = vector.shape_cast %69 : vector<1x32x8xbf16> to vector<32x8xbf16>
    %cst_43 = arith.constant dense<0.000000e+00> : vector<17x8xf32>
    %71 = tpu.matmul %26, %70, %cst_43 {dimension_numbers = #tpu.dot_dimension_numbers<[1], [0], [0], [1], [0, 0, 1, 1], [], []>} : vector<17x32xbf16>, vector<32x8xbf16>, vector<17x8xf32> -> vector<17x8xf32>
    %c1_44 = arith.constant 1 : index
    %c0_45 = arith.constant 0 : index
    %c0_46 = arith.constant 0 : index
    %72 = vector.load %arg9[%c1_44, %c0_45, %c0_46] : memref<4x1x8xf32, #tpu.memory_space<vmem>>, vector<1x1x8xf32>
    %73 = vector.shape_cast %72 : vector<1x1x8xf32> to vector<1x8xf32>
    %74 = vector.broadcast %73 : vector<1x8xf32> to vector<17x8xf32>
    %75 = arith.addf %71, %74 : vector<17x8xf32>
    %c1_47 = arith.constant 1 : index
    %c0_48 = arith.constant 0 : index
    %c0_49 = arith.constant 0 : index
    %76 = vector.load %arg4[%c1_47, %c0_48, %c0_49] : memref<4x32x8xbf16, #tpu.memory_space<vmem>>, vector<1x32x8xbf16>
    %77 = vector.shape_cast %76 : vector<1x32x8xbf16> to vector<32x8xbf16>
    %cst_50 = arith.constant dense<0.000000e+00> : vector<17x8xf32>
    %78 = tpu.matmul %26, %77, %cst_50 {dimension_numbers = #tpu.dot_dimension_numbers<[1], [0], [0], [1], [0, 0, 1, 1], [], []>} : vector<17x32xbf16>, vector<32x8xbf16>, vector<17x8xf32> -> vector<17x8xf32>
    %c1_51 = arith.constant 1 : index
    %c0_52 = arith.constant 0 : index
    %c0_53 = arith.constant 0 : index
    %79 = vector.load %arg7[%c1_51, %c0_52, %c0_53] : memref<4x1x8xf32, #tpu.memory_space<vmem>>, vector<1x1x8xf32>
    %80 = vector.shape_cast %79 : vector<1x1x8xf32> to vector<1x8xf32>
    %81 = vector.broadcast %80 : vector<1x8xf32> to vector<17x8xf32>
    %82 = arith.addf %78, %81 : vector<17x8xf32>
    %cst_54 = arith.constant 0.353553385 : f32
    %83 = vector.broadcast %cst_54 : f32 to vector<17x8xf32>
    %84 = arith.mulf %82, %83 : vector<17x8xf32>
    %c1_55 = arith.constant 1 : index
    %c0_56 = arith.constant 0 : index
    %c0_57 = arith.constant 0 : index
    %85 = vector.load %arg5[%c1_55, %c0_56, %c0_57] : memref<4x32x8xbf16, #tpu.memory_space<vmem>>, vector<1x32x8xbf16>
    %86 = vector.shape_cast %85 : vector<1x32x8xbf16> to vector<32x8xbf16>
    %cst_58 = arith.constant dense<0.000000e+00> : vector<17x8xf32>
    %87 = tpu.matmul %26, %86, %cst_58 {dimension_numbers = #tpu.dot_dimension_numbers<[1], [0], [0], [1], [0, 0, 1, 1], [], []>} : vector<17x32xbf16>, vector<32x8xbf16>, vector<17x8xf32> -> vector<17x8xf32>
    %c1_59 = arith.constant 1 : index
    %c0_60 = arith.constant 0 : index
    %c0_61 = arith.constant 0 : index
    %88 = vector.load %arg8[%c1_59, %c0_60, %c0_61] : memref<4x1x8xf32, #tpu.memory_space<vmem>>, vector<1x1x8xf32>
    %89 = vector.shape_cast %88 : vector<1x1x8xf32> to vector<1x8xf32>
    %90 = vector.broadcast %89 : vector<1x8xf32> to vector<17x8xf32>
    %91 = arith.addf %87, %90 : vector<17x8xf32>
    %92 = tpu.transpose %91, [1, 0] : vector<17x8xf32> -> vector<8x17xf32>
    %cst_62 = arith.constant dense<0.000000e+00> : vector<17x17xf32>
    %93 = tpu.matmul %84, %92, %cst_62 {dimension_numbers = #tpu.dot_dimension_numbers<[1], [0], [0], [1], [0, 0, 1, 1], [], []>} : vector<17x8xf32>, vector<8x17xf32>, vector<17x17xf32> -> vector<17x17xf32>
    %cst_63 = arith.constant dense<0xFF800000> : vector<17xf32>
    %94 = vector.multi_reduction <maximumf>, %93, %cst_63 [1] : vector<17x17xf32> to vector<17xf32>
    %95 = vector.shape_cast %94 : vector<17xf32> to vector<17x1xf32>
    %96 = vector.broadcast %95 : vector<17x1xf32> to vector<17x17xf32>
    %97 = arith.subf %93, %96 : vector<17x17xf32>
    %98 = math.exp %97 : vector<17x17xf32>
    %cst_64 = arith.constant dense<0.000000e+00> : vector<17xf32>
    %99 = vector.multi_reduction <add>, %98, %cst_64 [1] : vector<17x17xf32> to vector<17xf32>
    %100 = vector.shape_cast %99 : vector<17xf32> to vector<17x1xf32>
    %101 = tpu.reciprocal %100 {approx = true} : vector<17x1xf32> -> vector<17x1xf32>
    %102 = vector.broadcast %101 : vector<17x1xf32> to vector<17x17xf32>
    %103 = arith.mulf %98, %102 : vector<17x17xf32>
    %cst_65 = arith.constant dense<0.000000e+00> : vector<17x8xf32>
    %104 = tpu.matmul %103, %75, %cst_65 {dimension_numbers = #tpu.dot_dimension_numbers<[1], [0], [0], [1], [0, 0, 1, 1], [], []>} : vector<17x17xf32>, vector<17x8xf32>, vector<17x8xf32> -> vector<17x8xf32>
    %105 = arith.truncf %104 : vector<17x8xf32> to vector<17x8xbf16>
    %c1_66 = arith.constant 1 : index
    %c0_67 = arith.constant 0 : index
    %c0_68 = arith.constant 0 : index
    %106 = vector.load %arg10[%c1_66, %c0_67, %c0_68] : memref<4x8x32xbf16, #tpu.memory_space<vmem>>, vector<1x8x32xbf16>
    %107 = vector.shape_cast %106 : vector<1x8x32xbf16> to vector<8x32xbf16>
    %cst_69 = arith.constant dense<0.000000e+00> : vector<17x32xf32>
    %108 = tpu.matmul %105, %107, %cst_69 {dimension_numbers = #tpu.dot_dimension_numbers<[1], [0], [0], [1], [0, 0, 1, 1], [], []>} : vector<17x8xbf16>, vector<8x32xbf16>, vector<17x32xf32> -> vector<17x32xf32>
    %109 = arith.addf %68, %108 : vector<17x32xf32>
    %c2 = arith.constant 2 : index
    %c0_70 = arith.constant 0 : index
    %c0_71 = arith.constant 0 : index
    %110 = vector.load %arg6[%c2, %c0_70, %c0_71] : memref<4x32x8xbf16, #tpu.memory_space<vmem>>, vector<1x32x8xbf16>
    %111 = vector.shape_cast %110 : vector<1x32x8xbf16> to vector<32x8xbf16>
    %cst_72 = arith.constant dense<0.000000e+00> : vector<17x8xf32>
    %112 = tpu.matmul %26, %111, %cst_72 {dimension_numbers = #tpu.dot_dimension_numbers<[1], [0], [0], [1], [0, 0, 1, 1], [], []>} : vector<17x32xbf16>, vector<32x8xbf16>, vector<17x8xf32> -> vector<17x8xf32>
    %c2_73 = arith.constant 2 : index
    %c0_74 = arith.constant 0 : index
    %c0_75 = arith.constant 0 : index
    %113 = vector.load %arg9[%c2_73, %c0_74, %c0_75] : memref<4x1x8xf32, #tpu.memory_space<vmem>>, vector<1x1x8xf32>
    %114 = vector.shape_cast %113 : vector<1x1x8xf32> to vector<1x8xf32>
    %115 = vector.broadcast %114 : vector<1x8xf32> to vector<17x8xf32>
    %116 = arith.addf %112, %115 : vector<17x8xf32>
    %c2_76 = arith.constant 2 : index
    %c0_77 = arith.constant 0 : index
    %c0_78 = arith.constant 0 : index
    %117 = vector.load %arg4[%c2_76, %c0_77, %c0_78] : memref<4x32x8xbf16, #tpu.memory_space<vmem>>, vector<1x32x8xbf16>
    %118 = vector.shape_cast %117 : vector<1x32x8xbf16> to vector<32x8xbf16>
    %cst_79 = arith.constant dense<0.000000e+00> : vector<17x8xf32>
    %119 = tpu.matmul %26, %118, %cst_79 {dimension_numbers = #tpu.dot_dimension_numbers<[1], [0], [0], [1], [0, 0, 1, 1], [], []>} : vector<17x32xbf16>, vector<32x8xbf16>, vector<17x8xf32> -> vector<17x8xf32>
    %c2_80 = arith.constant 2 : index
    %c0_81 = arith.constant 0 : index
    %c0_82 = arith.constant 0 : index
    %120 = vector.load %arg7[%c2_80, %c0_81, %c0_82] : memref<4x1x8xf32, #tpu.memory_space<vmem>>, vector<1x1x8xf32>
    %121 = vector.shape_cast %120 : vector<1x1x8xf32> to vector<1x8xf32>
    %122 = vector.broadcast %121 : vector<1x8xf32> to vector<17x8xf32>
    %123 = arith.addf %119, %122 : vector<17x8xf32>
    %cst_83 = arith.constant 0.353553385 : f32
    %124 = vector.broadcast %cst_83 : f32 to vector<17x8xf32>
    %125 = arith.mulf %123, %124 : vector<17x8xf32>
    %c2_84 = arith.constant 2 : index
    %c0_85 = arith.constant 0 : index
    %c0_86 = arith.constant 0 : index
    %126 = vector.load %arg5[%c2_84, %c0_85, %c0_86] : memref<4x32x8xbf16, #tpu.memory_space<vmem>>, vector<1x32x8xbf16>
    %127 = vector.shape_cast %126 : vector<1x32x8xbf16> to vector<32x8xbf16>
    %cst_87 = arith.constant dense<0.000000e+00> : vector<17x8xf32>
    %128 = tpu.matmul %26, %127, %cst_87 {dimension_numbers = #tpu.dot_dimension_numbers<[1], [0], [0], [1], [0, 0, 1, 1], [], []>} : vector<17x32xbf16>, vector<32x8xbf16>, vector<17x8xf32> -> vector<17x8xf32>
    %c2_88 = arith.constant 2 : index
    %c0_89 = arith.constant 0 : index
    %c0_90 = arith.constant 0 : index
    %129 = vector.load %arg8[%c2_88, %c0_89, %c0_90] : memref<4x1x8xf32, #tpu.memory_space<vmem>>, vector<1x1x8xf32>
    %130 = vector.shape_cast %129 : vector<1x1x8xf32> to vector<1x8xf32>
    %131 = vector.broadcast %130 : vector<1x8xf32> to vector<17x8xf32>
    %132 = arith.addf %128, %131 : vector<17x8xf32>
    %133 = tpu.transpose %132, [1, 0] : vector<17x8xf32> -> vector<8x17xf32>
    %cst_91 = arith.constant dense<0.000000e+00> : vector<17x17xf32>
    %134 = tpu.matmul %125, %133, %cst_91 {dimension_numbers = #tpu.dot_dimension_numbers<[1], [0], [0], [1], [0, 0, 1, 1], [], []>} : vector<17x8xf32>, vector<8x17xf32>, vector<17x17xf32> -> vector<17x17xf32>
    %cst_92 = arith.constant dense<0xFF800000> : vector<17xf32>
    %135 = vector.multi_reduction <maximumf>, %134, %cst_92 [1] : vector<17x17xf32> to vector<17xf32>
    %136 = vector.shape_cast %135 : vector<17xf32> to vector<17x1xf32>
    %137 = vector.broadcast %136 : vector<17x1xf32> to vector<17x17xf32>
    %138 = arith.subf %134, %137 : vector<17x17xf32>
    %139 = math.exp %138 : vector<17x17xf32>
    %cst_93 = arith.constant dense<0.000000e+00> : vector<17xf32>
    %140 = vector.multi_reduction <add>, %139, %cst_93 [1] : vector<17x17xf32> to vector<17xf32>
    %141 = vector.shape_cast %140 : vector<17xf32> to vector<17x1xf32>
    %142 = tpu.reciprocal %141 {approx = true} : vector<17x1xf32> -> vector<17x1xf32>
    %143 = vector.broadcast %142 : vector<17x1xf32> to vector<17x17xf32>
    %144 = arith.mulf %139, %143 : vector<17x17xf32>
    %cst_94 = arith.constant dense<0.000000e+00> : vector<17x8xf32>
    %145 = tpu.matmul %144, %116, %cst_94 {dimension_numbers = #tpu.dot_dimension_numbers<[1], [0], [0], [1], [0, 0, 1, 1], [], []>} : vector<17x17xf32>, vector<17x8xf32>, vector<17x8xf32> -> vector<17x8xf32>
    %146 = arith.truncf %145 : vector<17x8xf32> to vector<17x8xbf16>
    %c2_95 = arith.constant 2 : index
    %c0_96 = arith.constant 0 : index
    %c0_97 = arith.constant 0 : index
    %147 = vector.load %arg10[%c2_95, %c0_96, %c0_97] : memref<4x8x32xbf16, #tpu.memory_space<vmem>>, vector<1x8x32xbf16>
    %148 = vector.shape_cast %147 : vector<1x8x32xbf16> to vector<8x32xbf16>
    %cst_98 = arith.constant dense<0.000000e+00> : vector<17x32xf32>
    %149 = tpu.matmul %146, %148, %cst_98 {dimension_numbers = #tpu.dot_dimension_numbers<[1], [0], [0], [1], [0, 0, 1, 1], [], []>} : vector<17x8xbf16>, vector<8x32xbf16>, vector<17x32xf32> -> vector<17x32xf32>
    %150 = arith.addf %109, %149 : vector<17x32xf32>
    %c3 = arith.constant 3 : index
    %c0_99 = arith.constant 0 : index
    %c0_100 = arith.constant 0 : index
    %151 = vector.load %arg6[%c3, %c0_99, %c0_100] : memref<4x32x8xbf16, #tpu.memory_space<vmem>>, vector<1x32x8xbf16>
    %152 = vector.shape_cast %151 : vector<1x32x8xbf16> to vector<32x8xbf16>
    %cst_101 = arith.constant dense<0.000000e+00> : vector<17x8xf32>
    %153 = tpu.matmul %26, %152, %cst_101 {dimension_numbers = #tpu.dot_dimension_numbers<[1], [0], [0], [1], [0, 0, 1, 1], [], []>} : vector<17x32xbf16>, vector<32x8xbf16>, vector<17x8xf32> -> vector<17x8xf32>
    %c3_102 = arith.constant 3 : index
    %c0_103 = arith.constant 0 : index
    %c0_104 = arith.constant 0 : index
    %154 = vector.load %arg9[%c3_102, %c0_103, %c0_104] : memref<4x1x8xf32, #tpu.memory_space<vmem>>, vector<1x1x8xf32>
    %155 = vector.shape_cast %154 : vector<1x1x8xf32> to vector<1x8xf32>
    %156 = vector.broadcast %155 : vector<1x8xf32> to vector<17x8xf32>
    %157 = arith.addf %153, %156 : vector<17x8xf32>
    %c3_105 = arith.constant 3 : index
    %c0_106 = arith.constant 0 : index
    %c0_107 = arith.constant 0 : index
    %158 = vector.load %arg4[%c3_105, %c0_106, %c0_107] : memref<4x32x8xbf16, #tpu.memory_space<vmem>>, vector<1x32x8xbf16>
    %159 = vector.shape_cast %158 : vector<1x32x8xbf16> to vector<32x8xbf16>
    %cst_108 = arith.constant dense<0.000000e+00> : vector<17x8xf32>
    %160 = tpu.matmul %26, %159, %cst_108 {dimension_numbers = #tpu.dot_dimension_numbers<[1], [0], [0], [1], [0, 0, 1, 1], [], []>} : vector<17x32xbf16>, vector<32x8xbf16>, vector<17x8xf32> -> vector<17x8xf32>
    %c3_109 = arith.constant 3 : index
    %c0_110 = arith.constant 0 : index
    %c0_111 = arith.constant 0 : index
    %161 = vector.load %arg7[%c3_109, %c0_110, %c0_111] : memref<4x1x8xf32, #tpu.memory_space<vmem>>, vector<1x1x8xf32>
    %162 = vector.shape_cast %161 : vector<1x1x8xf32> to vector<1x8xf32>
    %163 = vector.broadcast %162 : vector<1x8xf32> to vector<17x8xf32>
    %164 = arith.addf %160, %163 : vector<17x8xf32>
    %cst_112 = arith.constant 0.353553385 : f32
    %165 = vector.broadcast %cst_112 : f32 to vector<17x8xf32>
    %166 = arith.mulf %164, %165 : vector<17x8xf32>
    %c3_113 = arith.constant 3 : index
    %c0_114 = arith.constant 0 : index
    %c0_115 = arith.constant 0 : index
    %167 = vector.load %arg5[%c3_113, %c0_114, %c0_115] : memref<4x32x8xbf16, #tpu.memory_space<vmem>>, vector<1x32x8xbf16>
    %168 = vector.shape_cast %167 : vector<1x32x8xbf16> to vector<32x8xbf16>
    %cst_116 = arith.constant dense<0.000000e+00> : vector<17x8xf32>
    %169 = tpu.matmul %26, %168, %cst_116 {dimension_numbers = #tpu.dot_dimension_numbers<[1], [0], [0], [1], [0, 0, 1, 1], [], []>} : vector<17x32xbf16>, vector<32x8xbf16>, vector<17x8xf32> -> vector<17x8xf32>
    %c3_117 = arith.constant 3 : index
    %c0_118 = arith.constant 0 : index
    %c0_119 = arith.constant 0 : index
    %170 = vector.load %arg8[%c3_117, %c0_118, %c0_119] : memref<4x1x8xf32, #tpu.memory_space<vmem>>, vector<1x1x8xf32>
    %171 = vector.shape_cast %170 : vector<1x1x8xf32> to vector<1x8xf32>
    %172 = vector.broadcast %171 : vector<1x8xf32> to vector<17x8xf32>
    %173 = arith.addf %169, %172 : vector<17x8xf32>
    %174 = tpu.transpose %173, [1, 0] : vector<17x8xf32> -> vector<8x17xf32>
    %cst_120 = arith.constant dense<0.000000e+00> : vector<17x17xf32>
    %175 = tpu.matmul %166, %174, %cst_120 {dimension_numbers = #tpu.dot_dimension_numbers<[1], [0], [0], [1], [0, 0, 1, 1], [], []>} : vector<17x8xf32>, vector<8x17xf32>, vector<17x17xf32> -> vector<17x17xf32>
    %cst_121 = arith.constant dense<0xFF800000> : vector<17xf32>
    %176 = vector.multi_reduction <maximumf>, %175, %cst_121 [1] : vector<17x17xf32> to vector<17xf32>
    %177 = vector.shape_cast %176 : vector<17xf32> to vector<17x1xf32>
    %178 = vector.broadcast %177 : vector<17x1xf32> to vector<17x17xf32>
    %179 = arith.subf %175, %178 : vector<17x17xf32>
    %180 = math.exp %179 : vector<17x17xf32>
    %cst_122 = arith.constant dense<0.000000e+00> : vector<17xf32>
    %181 = vector.multi_reduction <add>, %180, %cst_122 [1] : vector<17x17xf32> to vector<17xf32>
    %182 = vector.shape_cast %181 : vector<17xf32> to vector<17x1xf32>
    %183 = tpu.reciprocal %182 {approx = true} : vector<17x1xf32> -> vector<17x1xf32>
    %184 = vector.broadcast %183 : vector<17x1xf32> to vector<17x17xf32>
    %185 = arith.mulf %180, %184 : vector<17x17xf32>
    %cst_123 = arith.constant dense<0.000000e+00> : vector<17x8xf32>
    %186 = tpu.matmul %185, %157, %cst_123 {dimension_numbers = #tpu.dot_dimension_numbers<[1], [0], [0], [1], [0, 0, 1, 1], [], []>} : vector<17x17xf32>, vector<17x8xf32>, vector<17x8xf32> -> vector<17x8xf32>
    %187 = arith.truncf %186 : vector<17x8xf32> to vector<17x8xbf16>
    %c3_124 = arith.constant 3 : index
    %c0_125 = arith.constant 0 : index
    %c0_126 = arith.constant 0 : index
    %188 = vector.load %arg10[%c3_124, %c0_125, %c0_126] : memref<4x8x32xbf16, #tpu.memory_space<vmem>>, vector<1x8x32xbf16>
    %189 = vector.shape_cast %188 : vector<1x8x32xbf16> to vector<8x32xbf16>
    %cst_127 = arith.constant dense<0.000000e+00> : vector<17x32xf32>
    %190 = tpu.matmul %187, %189, %cst_127 {dimension_numbers = #tpu.dot_dimension_numbers<[1], [0], [0], [1], [0, 0, 1, 1], [], []>} : vector<17x8xbf16>, vector<8x32xbf16>, vector<17x32xf32> -> vector<17x32xf32>
    %191 = arith.addf %150, %190 : vector<17x32xf32>
    %c0_128 = arith.constant 0 : index
    %c0_129 = arith.constant 0 : index
    %192 = vector.load %arg11[%c0_128, %c0_129] : memref<1x32xf32, #tpu.memory_space<vmem>>, vector<1x32xf32>
    %193 = vector.broadcast %192 : vector<1x32xf32> to vector<17x32xf32>
    %194 = arith.addf %191, %193 : vector<17x32xf32>
    %195 = arith.addf %1, %194 : vector<17x32xf32>
    %c0_130 = arith.constant 0 : index
    %c0_131 = arith.constant 0 : index
    %c0_132 = arith.constant 0 : index
    %196 = vector.load %arg12[%c0_130, %c0_131, %c0_132] : memref<1x17x32xf32, #tpu.memory_space<vmem>>, vector<1x17x32xf32>
    %197 = vector.shape_cast %196 : vector<1x17x32xf32> to vector<17x32xf32>
    %198 = vector.shape_cast %195 : vector<17x32xf32> to vector<1x17x32xf32>
    tpu.vector_store %arg12[%c0_130, %c0_131, %c0_132], %198 {strides = array<i32>} : memref<1x17x32xf32, #tpu.memory_space<vmem>>, vector<1x17x32xf32>,
    return
  }
  func.func @transform_0(%arg0: i32) -> (i32, i32, i32) {
    %c0_i32 = arith.constant 0 : i32
    %c0_i32_0 = arith.constant 0 : i32
    %c0_i32_1 = arith.constant 0 : i32
    return %arg0, %c0_i32, %c0_i32_0 : i32, i32, i32
  }
  func.func @transform_1(%arg0: i32) -> (i32, i32) {
    %c0_i32 = arith.constant 0 : i32
    %c0_i32_0 = arith.constant 0 : i32
    %c0_i32_1 = arith.constant 0 : i32
    return %c0_i32, %c0_i32_0 : i32, i32
  }
  func.func @transform_2(%arg0: i32) -> (i32, i32) {
    %c0_i32 = arith.constant 0 : i32
    %c0_i32_0 = arith.constant 0 : i32
    %c0_i32_1 = arith.constant 0 : i32
    return %c0_i32, %c0_i32_0 : i32, i32
  }
  func.func @transform_3(%arg0: i32) -> (i32, i32, i32) {
    %c0_i32 = arith.constant 0 : i32
    %c0_i32_0 = arith.constant 0 : i32
    %c0_i32_1 = arith.constant 0 : i32
    %c0_i32_2 = arith.constant 0 : i32
    return %c0_i32, %c0_i32_0, %c0_i32_1 : i32, i32, i32
  }
  func.func @transform_4(%arg0: i32) -> (i32, i32, i32) {
    %c0_i32 = arith.constant 0 : i32
    %c0_i32_0 = arith.constant 0 : i32
    %c0_i32_1 = arith.constant 0 : i32
    %c0_i32_2 = arith.constant 0 : i32
    return %c0_i32, %c0_i32_0, %c0_i32_1 : i32, i32, i32
  }
  func.func @transform_5(%arg0: i32) -> (i32, i32, i32) {
    %c0_i32 = arith.constant 0 : i32
    %c0_i32_0 = arith.constant 0 : i32
    %c0_i32_1 = arith.constant 0 : i32
    %c0_i32_2 = arith.constant 0 : i32
    return %c0_i32, %c0_i32_0, %c0_i32_1 : i32, i32, i32
  }
  func.func @transform_6(%arg0: i32) -> (i32, i32, i32) {
    %c0_i32 = arith.constant 0 : i32
    %c0_i32_0 = arith.constant 0 : i32
    %c0_i32_1 = arith.constant 0 : i32
    %c0_i32_2 = arith.constant 0 : i32
    return %c0_i32, %c0_i32_0, %c0_i32_1 : i32, i32, i32
  }
  func.func @transform_7(%arg0: i32) -> (i32, i32, i32) {
    %c0_i32 = arith.constant 0 : i32
    %c0_i32_0 = arith.constant 0 : i32
    %c0_i32_1 = arith.constant 0 : i32
    %c0_i32_2 = arith.constant 0 : i32
    return %c0_i32, %c0_i32_0, %c0_i32_1 : i32, i32, i32
  }
  func.func @transform_8(%arg0: i32) -> (i32, i32, i32) {
    %c0_i32 = arith.constant 0 : i32
    %c0_i32_0 = arith.constant 0 : i32
    %c0_i32_1 = arith.constant 0 : i32
    %c0_i32_2 = arith.constant 0 : i32
    return %c0_i32, %c0_i32_0, %c0_i32_1 : i32, i32, i32
  }
  func.func @transform_9(%arg0: i32) -> (i32, i32, i32) {
    %c0_i32 = arith.constant 0 : i32
    %c0_i32_0 = arith.constant 0 : i32
    %c0_i32_1 = arith.constant 0 : i32
    %c0_i32_2 = arith.constant 0 : i32
    return %c0_i32, %c0_i32_0, %c0_i32_1 : i32, i32, i32
  }
  func.func @transform_10(%arg0: i32) -> (i32, i32) {
    %c0_i32 = arith.constant 0 : i32
    %c0_i32_0 = arith.constant 0 : i32
    %c0_i32_1 = arith.constant 0 : i32
    return %c0_i32, %c0_i32_0 : i32, i32
  }
  func.func @transform_11(%arg0: i32) -> (i32, i32, i32) {
    %c0_i32 = arith.constant 0 : i32
    %c0_i32_0 = arith.constant 0 : i32
    %c0_i32_1 = arith.constant 0 : i32
    return %arg0, %c0_i32, %c0_i32_0 : i32, i32, i32
  }
}

module attributes {stable_mosaic.version = 11 : i64} {
  func.func @_mlp_block_kernel(%arg0: i32, %arg1: memref<1x17x32xf32, #tpu.memory_space<vmem>>, %arg2: memref<1x32xf32, #tpu.memory_space<vmem>>, %arg3: memref<1x32xf32, #tpu.memory_space<vmem>>, %arg4: memref<32x128xbf16, #tpu.memory_space<vmem>>, %arg5: memref<1x128xf32, #tpu.memory_space<vmem>>, %arg6: memref<128x32xbf16, #tpu.memory_space<vmem>>, %arg7: memref<1x32xf32, #tpu.memory_space<vmem>>, %arg8: memref<1x17x32xf32, #tpu.memory_space<vmem>>) attributes {dimension_semantics = [#tpu.dimension_semantics<parallel>], iteration_bounds = array<i64: 2>, scalar_prefetch = 0 : i64, scratch_operands = 0 : i64, tpu.core_type = #tpu.core_type<tc>, window_params = [{transform_indices = @transform_0, window_bounds = array<i64: 1, 17, 32>}, {pipeline_mode = #tpu.pipeline_mode<synchronous>, transform_indices = @transform_1, window_bounds = array<i64: 1, 32>}, {pipeline_mode = #tpu.pipeline_mode<synchronous>, transform_indices = @transform_2, window_bounds = array<i64: 1, 32>}, {pipeline_mode = #tpu.pipeline_mode<synchronous>, transform_indices = @transform_3, window_bounds = array<i64: 32, 128>}, {pipeline_mode = #tpu.pipeline_mode<synchronous>, transform_indices = @transform_4, window_bounds = array<i64: 1, 128>}, {pipeline_mode = #tpu.pipeline_mode<synchronous>, transform_indices = @transform_5, window_bounds = array<i64: 128, 32>}, {pipeline_mode = #tpu.pipeline_mode<synchronous>, transform_indices = @transform_6, window_bounds = array<i64: 1, 32>}, {transform_indices = @transform_7, window_bounds = array<i64: 1, 17, 32>}]} {
    %c0 = arith.constant 0 : index
    %c0_0 = arith.constant 0 : index
    %c0_1 = arith.constant 0 : index
    %0 = vector.load %arg1[%c0, %c0_0, %c0_1] : memref<1x17x32xf32, #tpu.memory_space<vmem>>, vector<1x17x32xf32>
    %1 = vector.shape_cast %0 : vector<1x17x32xf32> to vector<17x32xf32>
    %c0_2 = arith.constant 0 : index
    %c0_3 = arith.constant 0 : index
    %2 = vector.load %arg2[%c0_2, %c0_3] : memref<1x32xf32, #tpu.memory_space<vmem>>, vector<1x32xf32>
    %c0_4 = arith.constant 0 : index
    %c0_5 = arith.constant 0 : index
    %3 = vector.load %arg3[%c0_4, %c0_5] : memref<1x32xf32, #tpu.memory_space<vmem>>, vector<1x32xf32>
    %cst = arith.constant dense<0.000000e+00> : vector<17xf32>
    %4 = vector.multi_reduction <add>, %1, %cst [1] : vector<17x32xf32> to vector<17xf32>
    %5 = vector.shape_cast %4 : vector<17xf32> to vector<17x1xf32>
    %cst_6 = arith.constant 3.200000e+01 : f32
    %6 = vector.broadcast %cst_6 : f32 to vector<17x1xf32>
    %7 = arith.divf %5, %6 : vector<17x1xf32>
    %8 = vector.broadcast %7 : vector<17x1xf32> to vector<17x32xf32>
    %9 = arith.subf %1, %8 : vector<17x32xf32>
    %10 = arith.mulf %9, %9 : vector<17x32xf32>
    %cst_7 = arith.constant dense<0.000000e+00> : vector<17xf32>
    %11 = vector.multi_reduction <add>, %10, %cst_7 [1] : vector<17x32xf32> to vector<17xf32>
    %12 = vector.shape_cast %11 : vector<17xf32> to vector<17x1xf32>
    %cst_8 = arith.constant 3.200000e+01 : f32
    %13 = vector.broadcast %cst_8 : f32 to vector<17x1xf32>
    %14 = arith.divf %12, %13 : vector<17x1xf32>
    %15 = vector.broadcast %7 : vector<17x1xf32> to vector<17x32xf32>
    %16 = arith.subf %1, %15 : vector<17x32xf32>
    %cst_9 = arith.constant 9.99999974E-6 : f32
    %17 = vector.broadcast %cst_9 : f32 to vector<17x1xf32>
    %18 = arith.addf %14, %17 : vector<17x1xf32>
    %19 = math.rsqrt %18 : vector<17x1xf32>
    %20 = vector.broadcast %19 : vector<17x1xf32> to vector<17x32xf32>
    %21 = arith.mulf %16, %20 : vector<17x32xf32>
    %22 = vector.broadcast %2 : vector<1x32xf32> to vector<17x32xf32>
    %23 = arith.mulf %21, %22 : vector<17x32xf32>
    %24 = vector.broadcast %3 : vector<1x32xf32> to vector<17x32xf32>
    %25 = arith.addf %23, %24 : vector<17x32xf32>
    %26 = arith.truncf %25 : vector<17x32xf32> to vector<17x32xbf16>
    %c0_10 = arith.constant 0 : index
    %c0_11 = arith.constant 0 : index
    %27 = vector.load %arg4[%c0_10, %c0_11] : memref<32x128xbf16, #tpu.memory_space<vmem>>, vector<32x128xbf16>
    %cst_12 = arith.constant dense<0.000000e+00> : vector<17x128xf32>
    %28 = tpu.matmul %26, %27, %cst_12 {dimension_numbers = #tpu.dot_dimension_numbers<[1], [0], [0], [1], [0, 0, 1, 1], [], []>} : vector<17x32xbf16>, vector<32x128xbf16>, vector<17x128xf32> -> vector<17x128xf32>
    %c0_13 = arith.constant 0 : index
    %c0_14 = arith.constant 0 : index
    %29 = vector.load %arg5[%c0_13, %c0_14] : memref<1x128xf32, #tpu.memory_space<vmem>>, vector<1x128xf32>
    %30 = vector.broadcast %29 : vector<1x128xf32> to vector<17x128xf32>
    %31 = arith.addf %28, %30 : vector<17x128xf32>
    %cst_15 = arith.constant 1.702000e+00 : f32
    %32 = vector.broadcast %cst_15 : f32 to vector<17x128xf32>
    %33 = arith.mulf %32, %31 : vector<17x128xf32>
    %34 = arith.negf %33 : vector<17x128xf32>
    %35 = math.exp %34 : vector<17x128xf32>
    %cst_16 = arith.constant 1.000000e+00 : f32
    %36 = vector.broadcast %cst_16 : f32 to vector<17x128xf32>
    %37 = arith.addf %36, %35 : vector<17x128xf32>
    %38 = arith.divf %36, %37 : vector<17x128xf32>
    %39 = arith.mulf %31, %38 : vector<17x128xf32>
    %40 = arith.truncf %39 : vector<17x128xf32> to vector<17x128xbf16>
    %c0_17 = arith.constant 0 : index
    %c0_18 = arith.constant 0 : index
    %41 = vector.load %arg6[%c0_17, %c0_18] : memref<128x32xbf16, #tpu.memory_space<vmem>>, vector<128x32xbf16>
    %cst_19 = arith.constant dense<0.000000e+00> : vector<17x32xf32>
    %42 = tpu.matmul %40, %41, %cst_19 {dimension_numbers = #tpu.dot_dimension_numbers<[1], [0], [0], [1], [0, 0, 1, 1], [], []>} : vector<17x128xbf16>, vector<128x32xbf16>, vector<17x32xf32> -> vector<17x32xf32>
    %c0_20 = arith.constant 0 : index
    %c0_21 = arith.constant 0 : index
    %43 = vector.load %arg7[%c0_20, %c0_21] : memref<1x32xf32, #tpu.memory_space<vmem>>, vector<1x32xf32>
    %44 = vector.broadcast %43 : vector<1x32xf32> to vector<17x32xf32>
    %45 = arith.addf %42, %44 : vector<17x32xf32>
    %46 = arith.addf %1, %45 : vector<17x32xf32>
    %c0_22 = arith.constant 0 : index
    %c0_23 = arith.constant 0 : index
    %c0_24 = arith.constant 0 : index
    %47 = vector.load %arg8[%c0_22, %c0_23, %c0_24] : memref<1x17x32xf32, #tpu.memory_space<vmem>>, vector<1x17x32xf32>
    %48 = vector.shape_cast %47 : vector<1x17x32xf32> to vector<17x32xf32>
    %49 = vector.shape_cast %46 : vector<17x32xf32> to vector<1x17x32xf32>
    tpu.vector_store %arg8[%c0_22, %c0_23, %c0_24], %49 {strides = array<i32>} : memref<1x17x32xf32, #tpu.memory_space<vmem>>, vector<1x17x32xf32>,
    return
  }
  func.func @transform_0(%arg0: i32) -> (i32, i32, i32) {
    %c0_i32 = arith.constant 0 : i32
    %c0_i32_0 = arith.constant 0 : i32
    %c0_i32_1 = arith.constant 0 : i32
    return %arg0, %c0_i32, %c0_i32_0 : i32, i32, i32
  }
  func.func @transform_1(%arg0: i32) -> (i32, i32) {
    %c0_i32 = arith.constant 0 : i32
    %c0_i32_0 = arith.constant 0 : i32
    %c0_i32_1 = arith.constant 0 : i32
    return %c0_i32, %c0_i32_0 : i32, i32
  }
  func.func @transform_2(%arg0: i32) -> (i32, i32) {
    %c0_i32 = arith.constant 0 : i32
    %c0_i32_0 = arith.constant 0 : i32
    %c0_i32_1 = arith.constant 0 : i32
    return %c0_i32, %c0_i32_0 : i32, i32
  }
  func.func @transform_3(%arg0: i32) -> (i32, i32) {
    %c0_i32 = arith.constant 0 : i32
    %c0_i32_0 = arith.constant 0 : i32
    %c0_i32_1 = arith.constant 0 : i32
    return %c0_i32, %c0_i32_0 : i32, i32
  }
  func.func @transform_4(%arg0: i32) -> (i32, i32) {
    %c0_i32 = arith.constant 0 : i32
    %c0_i32_0 = arith.constant 0 : i32
    %c0_i32_1 = arith.constant 0 : i32
    return %c0_i32, %c0_i32_0 : i32, i32
  }
  func.func @transform_5(%arg0: i32) -> (i32, i32) {
    %c0_i32 = arith.constant 0 : i32
    %c0_i32_0 = arith.constant 0 : i32
    %c0_i32_1 = arith.constant 0 : i32
    return %c0_i32, %c0_i32_0 : i32, i32
  }
  func.func @transform_6(%arg0: i32) -> (i32, i32) {
    %c0_i32 = arith.constant 0 : i32
    %c0_i32_0 = arith.constant 0 : i32
    %c0_i32_1 = arith.constant 0 : i32
    return %c0_i32, %c0_i32_0 : i32, i32
  }
  func.func @transform_7(%arg0: i32) -> (i32, i32, i32) {
    %c0_i32 = arith.constant 0 : i32
    %c0_i32_0 = arith.constant 0 : i32
    %c0_i32_1 = arith.constant 0 : i32
    return %arg0, %c0_i32, %c0_i32_0 : i32, i32, i32
  }
}

module attributes {stable_mosaic.version = 11 : i64} {
  func.func @_attn_block_kernel(%arg0: i32, %arg1: memref<1x17x32xf32, #tpu.memory_space<vmem>>, %arg2: memref<1x32xf32, #tpu.memory_space<vmem>>, %arg3: memref<1x32xf32, #tpu.memory_space<vmem>>, %arg4: memref<4x32x8xbf16, #tpu.memory_space<vmem>>, %arg5: memref<4x32x8xbf16, #tpu.memory_space<vmem>>, %arg6: memref<4x32x8xbf16, #tpu.memory_space<vmem>>, %arg7: memref<4x1x8xf32, #tpu.memory_space<vmem>>, %arg8: memref<4x1x8xf32, #tpu.memory_space<vmem>>, %arg9: memref<4x1x8xf32, #tpu.memory_space<vmem>>, %arg10: memref<4x8x32xbf16, #tpu.memory_space<vmem>>, %arg11: memref<1x32xf32, #tpu.memory_space<vmem>>, %arg12: memref<1x17x32xf32, #tpu.memory_space<vmem>>) attributes {dimension_semantics = [#tpu.dimension_semantics<parallel>], iteration_bounds = array<i64: 2>, scalar_prefetch = 0 : i64, scratch_operands = 0 : i64, tpu.core_type = #tpu.core_type<tc>, window_params = [{transform_indices = @transform_0, window_bounds = array<i64: 1, 17, 32>}, {pipeline_mode = #tpu.pipeline_mode<synchronous>, transform_indices = @transform_1, window_bounds = array<i64: 1, 32>}, {pipeline_mode = #tpu.pipeline_mode<synchronous>, transform_indices = @transform_2, window_bounds = array<i64: 1, 32>}, {pipeline_mode = #tpu.pipeline_mode<synchronous>, transform_indices = @transform_3, window_bounds = array<i64: 4, 32, 8>}, {pipeline_mode = #tpu.pipeline_mode<synchronous>, transform_indices = @transform_4, window_bounds = array<i64: 4, 32, 8>}, {pipeline_mode = #tpu.pipeline_mode<synchronous>, transform_indices = @transform_5, window_bounds = array<i64: 4, 32, 8>}, {pipeline_mode = #tpu.pipeline_mode<synchronous>, transform_indices = @transform_6, window_bounds = array<i64: 4, 1, 8>}, {pipeline_mode = #tpu.pipeline_mode<synchronous>, transform_indices = @transform_7, window_bounds = array<i64: 4, 1, 8>}, {pipeline_mode = #tpu.pipeline_mode<synchronous>, transform_indices = @transform_8, window_bounds = array<i64: 4, 1, 8>}, {pipeline_mode = #tpu.pipeline_mode<synchronous>, transform_indices = @transform_9, window_bounds = array<i64: 4, 8, 32>}, {pipeline_mode = #tpu.pipeline_mode<synchronous>, transform_indices = @transform_10, window_bounds = array<i64: 1, 32>}, {transform_indices = @transform_11, window_bounds = array<i64: 1, 17, 32>}]} {
    %c0 = arith.constant 0 : index
    %c0_0 = arith.constant 0 : index
    %c0_1 = arith.constant 0 : index
    %0 = vector.load %arg1[%c0, %c0_0, %c0_1] : memref<1x17x32xf32, #tpu.memory_space<vmem>>, vector<1x17x32xf32>
    %1 = vector.shape_cast %0 : vector<1x17x32xf32> to vector<17x32xf32>
    %c0_2 = arith.constant 0 : index
    %c0_3 = arith.constant 0 : index
    %2 = vector.load %arg2[%c0_2, %c0_3] : memref<1x32xf32, #tpu.memory_space<vmem>>, vector<1x32xf32>
    %c0_4 = arith.constant 0 : index
    %c0_5 = arith.constant 0 : index
    %3 = vector.load %arg3[%c0_4, %c0_5] : memref<1x32xf32, #tpu.memory_space<vmem>>, vector<1x32xf32>
    %cst = arith.constant dense<0.000000e+00> : vector<17xf32>
    %4 = vector.multi_reduction <add>, %1, %cst [1] : vector<17x32xf32> to vector<17xf32>
    %5 = vector.shape_cast %4 : vector<17xf32> to vector<17x1xf32>
    %cst_6 = arith.constant 3.200000e+01 : f32
    %6 = vector.broadcast %cst_6 : f32 to vector<17x1xf32>
    %7 = arith.divf %5, %6 : vector<17x1xf32>
    %8 = vector.broadcast %7 : vector<17x1xf32> to vector<17x32xf32>
    %9 = arith.subf %1, %8 : vector<17x32xf32>
    %10 = arith.mulf %9, %9 : vector<17x32xf32>
    %cst_7 = arith.constant dense<0.000000e+00> : vector<17xf32>
    %11 = vector.multi_reduction <add>, %10, %cst_7 [1] : vector<17x32xf32> to vector<17xf32>
    %12 = vector.shape_cast %11 : vector<17xf32> to vector<17x1xf32>
    %cst_8 = arith.constant 3.200000e+01 : f32
    %13 = vector.broadcast %cst_8 : f32 to vector<17x1xf32>
    %14 = arith.divf %12, %13 : vector<17x1xf32>
    %15 = vector.broadcast %7 : vector<17x1xf32> to vector<17x32xf32>
    %16 = arith.subf %1, %15 : vector<17x32xf32>
    %cst_9 = arith.constant 9.99999974E-6 : f32
    %17 = vector.broadcast %cst_9 : f32 to vector<17x1xf32>
    %18 = arith.addf %14, %17 : vector<17x1xf32>
    %19 = math.rsqrt %18 : vector<17x1xf32>
    %20 = vector.broadcast %19 : vector<17x1xf32> to vector<17x32xf32>
    %21 = arith.mulf %16, %20 : vector<17x32xf32>
    %22 = vector.broadcast %2 : vector<1x32xf32> to vector<17x32xf32>
    %23 = arith.mulf %21, %22 : vector<17x32xf32>
    %24 = vector.broadcast %3 : vector<1x32xf32> to vector<17x32xf32>
    %25 = arith.addf %23, %24 : vector<17x32xf32>
    %26 = arith.truncf %25 : vector<17x32xf32> to vector<17x32xbf16>
    %cst_10 = arith.constant 0.000000e+00 : f32
    %27 = vector.broadcast %cst_10 : f32 to vector<17x32xf32>
    %c0_11 = arith.constant 0 : index
    %c0_12 = arith.constant 0 : index
    %c0_13 = arith.constant 0 : index
    %28 = vector.load %arg6[%c0_11, %c0_12, %c0_13] : memref<4x32x8xbf16, #tpu.memory_space<vmem>>, vector<1x32x8xbf16>
    %29 = vector.shape_cast %28 : vector<1x32x8xbf16> to vector<32x8xbf16>
    %cst_14 = arith.constant dense<0.000000e+00> : vector<17x8xf32>
    %30 = tpu.matmul %26, %29, %cst_14 {dimension_numbers = #tpu.dot_dimension_numbers<[1], [0], [0], [1], [0, 0, 1, 1], [], []>} : vector<17x32xbf16>, vector<32x8xbf16>, vector<17x8xf32> -> vector<17x8xf32>
    %c0_15 = arith.constant 0 : index
    %c0_16 = arith.constant 0 : index
    %c0_17 = arith.constant 0 : index
    %31 = vector.load %arg9[%c0_15, %c0_16, %c0_17] : memref<4x1x8xf32, #tpu.memory_space<vmem>>, vector<1x1x8xf32>
    %32 = vector.shape_cast %31 : vector<1x1x8xf32> to vector<1x8xf32>
    %33 = vector.broadcast %32 : vector<1x8xf32> to vector<17x8xf32>
    %34 = arith.addf %30, %33 : vector<17x8xf32>
    %35 = arith.truncf %34 : vector<17x8xf32> to vector<17x8xbf16>
    %c0_18 = arith.constant 0 : index
    %c0_19 = arith.constant 0 : index
    %c0_20 = arith.constant 0 : index
    %36 = vector.load %arg10[%c0_18, %c0_19, %c0_20] : memref<4x8x32xbf16, #tpu.memory_space<vmem>>, vector<1x8x32xbf16>
    %37 = vector.shape_cast %36 : vector<1x8x32xbf16> to vector<8x32xbf16>
    %cst_21 = arith.constant dense<0.000000e+00> : vector<17x32xf32>
    %38 = tpu.matmul %35, %37, %cst_21 {dimension_numbers = #tpu.dot_dimension_numbers<[1], [0], [0], [1], [0, 0, 1, 1], [], []>} : vector<17x8xbf16>, vector<8x32xbf16>, vector<17x32xf32> -> vector<17x32xf32>
    %39 = arith.addf %27, %38 : vector<17x32xf32>
    %c1 = arith.constant 1 : index
    %c0_22 = arith.constant 0 : index
    %c0_23 = arith.constant 0 : index
    %40 = vector.load %arg6[%c1, %c0_22, %c0_23] : memref<4x32x8xbf16, #tpu.memory_space<vmem>>, vector<1x32x8xbf16>
    %41 = vector.shape_cast %40 : vector<1x32x8xbf16> to vector<32x8xbf16>
    %cst_24 = arith.constant dense<0.000000e+00> : vector<17x8xf32>
    %42 = tpu.matmul %26, %41, %cst_24 {dimension_numbers = #tpu.dot_dimension_numbers<[1], [0], [0], [1], [0, 0, 1, 1], [], []>} : vector<17x32xbf16>, vector<32x8xbf16>, vector<17x8xf32> -> vector<17x8xf32>
    %c1_25 = arith.constant 1 : index
    %c0_26 = arith.constant 0 : index
    %c0_27 = arith.constant 0 : index
    %43 = vector.load %arg9[%c1_25, %c0_26, %c0_27] : memref<4x1x8xf32, #tpu.memory_space<vmem>>, vector<1x1x8xf32>
    %44 = vector.shape_cast %43 : vector<1x1x8xf32> to vector<1x8xf32>
    %45 = vector.broadcast %44 : vector<1x8xf32> to vector<17x8xf32>
    %46 = arith.addf %42, %45 : vector<17x8xf32>
    %47 = arith.truncf %46 : vector<17x8xf32> to vector<17x8xbf16>
    %c1_28 = arith.constant 1 : index
    %c0_29 = arith.constant 0 : index
    %c0_30 = arith.constant 0 : index
    %48 = vector.load %arg10[%c1_28, %c0_29, %c0_30] : memref<4x8x32xbf16, #tpu.memory_space<vmem>>, vector<1x8x32xbf16>
    %49 = vector.shape_cast %48 : vector<1x8x32xbf16> to vector<8x32xbf16>
    %cst_31 = arith.constant dense<0.000000e+00> : vector<17x32xf32>
    %50 = tpu.matmul %47, %49, %cst_31 {dimension_numbers = #tpu.dot_dimension_numbers<[1], [0], [0], [1], [0, 0, 1, 1], [], []>} : vector<17x8xbf16>, vector<8x32xbf16>, vector<17x32xf32> -> vector<17x32xf32>
    %51 = arith.addf %39, %50 : vector<17x32xf32>
    %c2 = arith.constant 2 : index
    %c0_32 = arith.constant 0 : index
    %c0_33 = arith.constant 0 : index
    %52 = vector.load %arg6[%c2, %c0_32, %c0_33] : memref<4x32x8xbf16, #tpu.memory_space<vmem>>, vector<1x32x8xbf16>
    %53 = vector.shape_cast %52 : vector<1x32x8xbf16> to vector<32x8xbf16>
    %cst_34 = arith.constant dense<0.000000e+00> : vector<17x8xf32>
    %54 = tpu.matmul %26, %53, %cst_34 {dimension_numbers = #tpu.dot_dimension_numbers<[1], [0], [0], [1], [0, 0, 1, 1], [], []>} : vector<17x32xbf16>, vector<32x8xbf16>, vector<17x8xf32> -> vector<17x8xf32>
    %c2_35 = arith.constant 2 : index
    %c0_36 = arith.constant 0 : index
    %c0_37 = arith.constant 0 : index
    %55 = vector.load %arg9[%c2_35, %c0_36, %c0_37] : memref<4x1x8xf32, #tpu.memory_space<vmem>>, vector<1x1x8xf32>
    %56 = vector.shape_cast %55 : vector<1x1x8xf32> to vector<1x8xf32>
    %57 = vector.broadcast %56 : vector<1x8xf32> to vector<17x8xf32>
    %58 = arith.addf %54, %57 : vector<17x8xf32>
    %59 = arith.truncf %58 : vector<17x8xf32> to vector<17x8xbf16>
    %c2_38 = arith.constant 2 : index
    %c0_39 = arith.constant 0 : index
    %c0_40 = arith.constant 0 : index
    %60 = vector.load %arg10[%c2_38, %c0_39, %c0_40] : memref<4x8x32xbf16, #tpu.memory_space<vmem>>, vector<1x8x32xbf16>
    %61 = vector.shape_cast %60 : vector<1x8x32xbf16> to vector<8x32xbf16>
    %cst_41 = arith.constant dense<0.000000e+00> : vector<17x32xf32>
    %62 = tpu.matmul %59, %61, %cst_41 {dimension_numbers = #tpu.dot_dimension_numbers<[1], [0], [0], [1], [0, 0, 1, 1], [], []>} : vector<17x8xbf16>, vector<8x32xbf16>, vector<17x32xf32> -> vector<17x32xf32>
    %63 = arith.addf %51, %62 : vector<17x32xf32>
    %c3 = arith.constant 3 : index
    %c0_42 = arith.constant 0 : index
    %c0_43 = arith.constant 0 : index
    %64 = vector.load %arg6[%c3, %c0_42, %c0_43] : memref<4x32x8xbf16, #tpu.memory_space<vmem>>, vector<1x32x8xbf16>
    %65 = vector.shape_cast %64 : vector<1x32x8xbf16> to vector<32x8xbf16>
    %cst_44 = arith.constant dense<0.000000e+00> : vector<17x8xf32>
    %66 = tpu.matmul %26, %65, %cst_44 {dimension_numbers = #tpu.dot_dimension_numbers<[1], [0], [0], [1], [0, 0, 1, 1], [], []>} : vector<17x32xbf16>, vector<32x8xbf16>, vector<17x8xf32> -> vector<17x8xf32>
    %c3_45 = arith.constant 3 : index
    %c0_46 = arith.constant 0 : index
    %c0_47 = arith.constant 0 : index
    %67 = vector.load %arg9[%c3_45, %c0_46, %c0_47] : memref<4x1x8xf32, #tpu.memory_space<vmem>>, vector<1x1x8xf32>
    %68 = vector.shape_cast %67 : vector<1x1x8xf32> to vector<1x8xf32>
    %69 = vector.broadcast %68 : vector<1x8xf32> to vector<17x8xf32>
    %70 = arith.addf %66, %69 : vector<17x8xf32>
    %71 = arith.truncf %70 : vector<17x8xf32> to vector<17x8xbf16>
    %c3_48 = arith.constant 3 : index
    %c0_49 = arith.constant 0 : index
    %c0_50 = arith.constant 0 : index
    %72 = vector.load %arg10[%c3_48, %c0_49, %c0_50] : memref<4x8x32xbf16, #tpu.memory_space<vmem>>, vector<1x8x32xbf16>
    %73 = vector.shape_cast %72 : vector<1x8x32xbf16> to vector<8x32xbf16>
    %cst_51 = arith.constant dense<0.000000e+00> : vector<17x32xf32>
    %74 = tpu.matmul %71, %73, %cst_51 {dimension_numbers = #tpu.dot_dimension_numbers<[1], [0], [0], [1], [0, 0, 1, 1], [], []>} : vector<17x8xbf16>, vector<8x32xbf16>, vector<17x32xf32> -> vector<17x32xf32>
    %75 = arith.addf %63, %74 : vector<17x32xf32>
    %c0_52 = arith.constant 0 : index
    %c0_53 = arith.constant 0 : index
    %76 = vector.load %arg11[%c0_52, %c0_53] : memref<1x32xf32, #tpu.memory_space<vmem>>, vector<1x32xf32>
    %77 = vector.broadcast %76 : vector<1x32xf32> to vector<17x32xf32>
    %78 = arith.addf %75, %77 : vector<17x32xf32>
    %79 = arith.addf %1, %78 : vector<17x32xf32>
    %c0_54 = arith.constant 0 : index
    %c0_55 = arith.constant 0 : index
    %c0_56 = arith.constant 0 : index
    %80 = vector.load %arg12[%c0_54, %c0_55, %c0_56] : memref<1x17x32xf32, #tpu.memory_space<vmem>>, vector<1x17x32xf32>
    %81 = vector.shape_cast %80 : vector<1x17x32xf32> to vector<17x32xf32>
    %82 = vector.shape_cast %79 : vector<17x32xf32> to vector<1x17x32xf32>
    tpu.vector_store %arg12[%c0_54, %c0_55, %c0_56], %82 {strides = array<i32>} : memref<1x17x32xf32, #tpu.memory_space<vmem>>, vector<1x17x32xf32>,
    return
  }
  func.func @transform_0(%arg0: i32) -> (i32, i32, i32) {
    %c0_i32 = arith.constant 0 : i32
    %c0_i32_0 = arith.constant 0 : i32
    %c0_i32_1 = arith.constant 0 : i32
    return %arg0, %c0_i32, %c0_i32_0 : i32, i32, i32
  }
  func.func @transform_1(%arg0: i32) -> (i32, i32) {
    %c0_i32 = arith.constant 0 : i32
    %c0_i32_0 = arith.constant 0 : i32
    %c0_i32_1 = arith.constant 0 : i32
    return %c0_i32, %c0_i32_0 : i32, i32
  }
  func.func @transform_2(%arg0: i32) -> (i32, i32) {
    %c0_i32 = arith.constant 0 : i32
    %c0_i32_0 = arith.constant 0 : i32
    %c0_i32_1 = arith.constant 0 : i32
    return %c0_i32, %c0_i32_0 : i32, i32
  }
  func.func @transform_3(%arg0: i32) -> (i32, i32, i32) {
    %c0_i32 = arith.constant 0 : i32
    %c0_i32_0 = arith.constant 0 : i32
    %c0_i32_1 = arith.constant 0 : i32
    %c0_i32_2 = arith.constant 0 : i32
    return %c0_i32, %c0_i32_0, %c0_i32_1 : i32, i32, i32
  }
  func.func @transform_4(%arg0: i32) -> (i32, i32, i32) {
    %c0_i32 = arith.constant 0 : i32
    %c0_i32_0 = arith.constant 0 : i32
    %c0_i32_1 = arith.constant 0 : i32
    %c0_i32_2 = arith.constant 0 : i32
    return %c0_i32, %c0_i32_0, %c0_i32_1 : i32, i32, i32
  }
  func.func @transform_5(%arg0: i32) -> (i32, i32, i32) {
    %c0_i32 = arith.constant 0 : i32
    %c0_i32_0 = arith.constant 0 : i32
    %c0_i32_1 = arith.constant 0 : i32
    %c0_i32_2 = arith.constant 0 : i32
    return %c0_i32, %c0_i32_0, %c0_i32_1 : i32, i32, i32
  }
  func.func @transform_6(%arg0: i32) -> (i32, i32, i32) {
    %c0_i32 = arith.constant 0 : i32
    %c0_i32_0 = arith.constant 0 : i32
    %c0_i32_1 = arith.constant 0 : i32
    %c0_i32_2 = arith.constant 0 : i32
    return %c0_i32, %c0_i32_0, %c0_i32_1 : i32, i32, i32
  }
  func.func @transform_7(%arg0: i32) -> (i32, i32, i32) {
    %c0_i32 = arith.constant 0 : i32
    %c0_i32_0 = arith.constant 0 : i32
    %c0_i32_1 = arith.constant 0 : i32
    %c0_i32_2 = arith.constant 0 : i32
    return %c0_i32, %c0_i32_0, %c0_i32_1 : i32, i32, i32
  }
  func.func @transform_8(%arg0: i32) -> (i32, i32, i32) {
    %c0_i32 = arith.constant 0 : i32
    %c0_i32_0 = arith.constant 0 : i32
    %c0_i32_1 = arith.constant 0 : i32
    %c0_i32_2 = arith.constant 0 : i32
    return %c0_i32, %c0_i32_0, %c0_i32_1 : i32, i32, i32
  }
  func.func @transform_9(%arg0: i32) -> (i32, i32, i32) {
    %c0_i32 = arith.constant 0 : i32
    %c0_i32_0 = arith.constant 0 : i32
    %c0_i32_1 = arith.constant 0 : i32
    %c0_i32_2 = arith.constant 0 : i32
    return %c0_i32, %c0_i32_0, %c0_i32_1 : i32, i32, i32
  }
  func.func @transform_10(%arg0: i32) -> (i32, i32) {
    %c0_i32 = arith.constant 0 : i32
    %c0_i32_0 = arith.constant 0 : i32
    %c0_i32_1 = arith.constant 0 : i32
    return %c0_i32, %c0_i32_0 : i32, i32
  }
  func.func @transform_11(%arg0: i32) -> (i32, i32, i32) {
    %c0_i32 = arith.constant 0 : i32
    %c0_i32_0 = arith.constant 0 : i32
    %c0_i32_1 = arith.constant 0 : i32
    return %arg0, %c0_i32, %c0_i32_0 : i32, i32, i32
  }
}

module attributes {stable_mosaic.version = 11 : i64} {
  func.func @_ln_mm_kernel(%arg0: i32, %arg1: memref<34x32xf32, #tpu.memory_space<vmem>>, %arg2: memref<1x32xf32, #tpu.memory_space<vmem>>, %arg3: memref<1x32xf32, #tpu.memory_space<vmem>>, %arg4: memref<32x16xbf16, #tpu.memory_space<vmem>>, %arg5: memref<1x16xf32, #tpu.memory_space<vmem>>, %arg6: memref<34x16xf32, #tpu.memory_space<vmem>>) attributes {dimension_semantics = [#tpu.dimension_semantics<parallel>], iteration_bounds = array<i64: 1>, scalar_prefetch = 0 : i64, scratch_operands = 0 : i64, tpu.core_type = #tpu.core_type<tc>, window_params = [{transform_indices = @transform_0, window_bounds = array<i64: 34, 32>}, {pipeline_mode = #tpu.pipeline_mode<synchronous>, transform_indices = @transform_1, window_bounds = array<i64: 1, 32>}, {pipeline_mode = #tpu.pipeline_mode<synchronous>, transform_indices = @transform_2, window_bounds = array<i64: 1, 32>}, {pipeline_mode = #tpu.pipeline_mode<synchronous>, transform_indices = @transform_3, window_bounds = array<i64: 32, 16>}, {pipeline_mode = #tpu.pipeline_mode<synchronous>, transform_indices = @transform_4, window_bounds = array<i64: 1, 16>}, {transform_indices = @transform_5, window_bounds = array<i64: 34, 16>}]} {
    %c0 = arith.constant 0 : index
    %c0_0 = arith.constant 0 : index
    %0 = vector.load %arg1[%c0, %c0_0] : memref<34x32xf32, #tpu.memory_space<vmem>>, vector<34x32xf32>
    %c0_1 = arith.constant 0 : index
    %c0_2 = arith.constant 0 : index
    %1 = vector.load %arg2[%c0_1, %c0_2] : memref<1x32xf32, #tpu.memory_space<vmem>>, vector<1x32xf32>
    %c0_3 = arith.constant 0 : index
    %c0_4 = arith.constant 0 : index
    %2 = vector.load %arg3[%c0_3, %c0_4] : memref<1x32xf32, #tpu.memory_space<vmem>>, vector<1x32xf32>
    %cst = arith.constant dense<0.000000e+00> : vector<34xf32>
    %3 = vector.multi_reduction <add>, %0, %cst [1] : vector<34x32xf32> to vector<34xf32>
    %4 = vector.shape_cast %3 : vector<34xf32> to vector<34x1xf32>
    %cst_5 = arith.constant 3.200000e+01 : f32
    %5 = vector.broadcast %cst_5 : f32 to vector<34x1xf32>
    %6 = arith.divf %4, %5 : vector<34x1xf32>
    %7 = vector.broadcast %6 : vector<34x1xf32> to vector<34x32xf32>
    %8 = arith.subf %0, %7 : vector<34x32xf32>
    %9 = arith.mulf %8, %8 : vector<34x32xf32>
    %cst_6 = arith.constant dense<0.000000e+00> : vector<34xf32>
    %10 = vector.multi_reduction <add>, %9, %cst_6 [1] : vector<34x32xf32> to vector<34xf32>
    %11 = vector.shape_cast %10 : vector<34xf32> to vector<34x1xf32>
    %cst_7 = arith.constant 3.200000e+01 : f32
    %12 = vector.broadcast %cst_7 : f32 to vector<34x1xf32>
    %13 = arith.divf %11, %12 : vector<34x1xf32>
    %14 = vector.broadcast %6 : vector<34x1xf32> to vector<34x32xf32>
    %15 = arith.subf %0, %14 : vector<34x32xf32>
    %cst_8 = arith.constant 9.99999974E-6 : f32
    %16 = vector.broadcast %cst_8 : f32 to vector<34x1xf32>
    %17 = arith.addf %13, %16 : vector<34x1xf32>
    %18 = math.rsqrt %17 : vector<34x1xf32>
    %19 = vector.broadcast %18 : vector<34x1xf32> to vector<34x32xf32>
    %20 = arith.mulf %15, %19 : vector<34x32xf32>
    %21 = vector.broadcast %1 : vector<1x32xf32> to vector<34x32xf32>
    %22 = arith.mulf %20, %21 : vector<34x32xf32>
    %23 = vector.broadcast %2 : vector<1x32xf32> to vector<34x32xf32>
    %24 = arith.addf %22, %23 : vector<34x32xf32>
    %25 = arith.truncf %24 : vector<34x32xf32> to vector<34x32xbf16>
    %c0_9 = arith.constant 0 : index
    %c0_10 = arith.constant 0 : index
    %26 = vector.load %arg4[%c0_9, %c0_10] : memref<32x16xbf16, #tpu.memory_space<vmem>>, vector<32x16xbf16>
    %cst_11 = arith.constant dense<0.000000e+00> : vector<34x16xf32>
    %27 = tpu.matmul %25, %26, %cst_11 {dimension_numbers = #tpu.dot_dimension_numbers<[1], [0], [0], [1], [0, 0, 1, 1], [], []>} : vector<34x32xbf16>, vector<32x16xbf16>, vector<34x16xf32> -> vector<34x16xf32>
    %c0_12 = arith.constant 0 : index
    %c0_13 = arith.constant 0 : index
    %28 = vector.load %arg5[%c0_12, %c0_13] : memref<1x16xf32, #tpu.memory_space<vmem>>, vector<1x16xf32>
    %29 = vector.broadcast %28 : vector<1x16xf32> to vector<34x16xf32>
    %30 = arith.addf %27, %29 : vector<34x16xf32>
    %c0_14 = arith.constant 0 : index
    %c0_15 = arith.constant 0 : index
    %31 = vector.load %arg6[%c0_14, %c0_15] : memref<34x16xf32, #tpu.memory_space<vmem>>, vector<34x16xf32>
    tpu.vector_store %arg6[%c0_14, %c0_15], %30 {strides = array<i32>} : memref<34x16xf32, #tpu.memory_space<vmem>>, vector<34x16xf32>,
    return
  }
  func.func @transform_0(%arg0: i32) -> (i32, i32) {
    %c0_i32 = arith.constant 0 : i32
    %c0_i32_0 = arith.constant 0 : i32
    return %arg0, %c0_i32 : i32, i32
  }
  func.func @transform_1(%arg0: i32) -> (i32, i32) {
    %c0_i32 = arith.constant 0 : i32
    %c0_i32_0 = arith.constant 0 : i32
    %c0_i32_1 = arith.constant 0 : i32
    return %c0_i32, %c0_i32_0 : i32, i32
  }
  func.func @transform_2(%arg0: i32) -> (i32, i32) {
    %c0_i32 = arith.constant 0 : i32
    %c0_i32_0 = arith.constant 0 : i32
    %c0_i32_1 = arith.constant 0 : i32
    return %c0_i32, %c0_i32_0 : i32, i32
  }
  func.func @transform_3(%arg0: i32) -> (i32, i32) {
    %c0_i32 = arith.constant 0 : i32
    %c0_i32_0 = arith.constant 0 : i32
    %c0_i32_1 = arith.constant 0 : i32
    return %c0_i32, %c0_i32_0 : i32, i32
  }
  func.func @transform_4(%arg0: i32) -> (i32, i32) {
    %c0_i32 = arith.constant 0 : i32
    %c0_i32_0 = arith.constant 0 : i32
    %c0_i32_1 = arith.constant 0 : i32
    return %c0_i32, %c0_i32_0 : i32, i32
  }
  func.func @transform_5(%arg0: i32) -> (i32, i32) {
    %c0_i32 = arith.constant 0 : i32
    %c0_i32_0 = arith.constant 0 : i32
    return %arg0, %c0_i32 : i32, i32
  }
}

</mosaic_0001>

<llo_original>
// kernel: mul.5
$region0: #{mul.5}
  %s0 = inlined_call_operand.vmem [shape: f32[3,64], index: 0, kind: input, shape index: {}]
  %s1 = inlined_call_operand.vmem [shape: f32[192], index: 1, kind: output, shape index: {}]
  $region1: #{mul.5} parent=0
    #allocation0 [shape = 'u8[4096]{0}', space=vmem, size = 0x1000, scoped, tag = 'scoped mem for output reshape']
    #allocation1 [shape = 'u8[4096]{0}', space=vmem, size = 0x1000, scoped, tag = 'scoped mem for input reshape']
    %s3 = sshll.u32 1, 4
    %s4 = ssub.s32 %s3, 1
    %v5 = vld [vmem:[%s0] sm:%s4]
    %6 = vst [vmem:[#allocation1] sm:%s4] %v5
    %s7 = smov 3
    %v8 = vld [vmem:[#allocation1] ss:$2 sm:%s7]
    %vm9 = vcmask 523264
    %10 = vst.msk [vmem:[#allocation0] sm:$0x3] %vm9, %v8
    %s11 = scalar_lea.vmem [#allocation1], 1
    %v12 = vld [vmem:[%s11] sm:$0x1]
    %13 = vrot.lane.b32.xlu0 %v12, 64
    %v14 = vpop.permute.xlu0 %13
    %vm15 = vcmask 1048064
    %16 = vst.msk [vmem:[#allocation0] sm:$0x1] %vm15, %v14
    %s18 = sshll.u32 1, 2
    %s19 = ssub.s32 %s18, 1
    %v21 = vld [vmem:[#allocation0] sm:%s19]
    %s22 = sshll.u32 1, 2
    %s23 = ssub.s32 %s22, 1
    %24 = vst [vmem:[%s1] sm:%s23] %v21

// kernel: maskclip_featurizer.8
$region0: #{maskclip_featurizer.8}
  #allocation0 [shape = 'u32[]', space=smem, size = 0x4, offset = 0x4, fixed_abs, tag = 'smem constant byte address 0x4 - core index']
  #allocation1 [shape = 'u32[144,128]{1,0:T(1,128)}', space=vmem, size = 0x12000, scoped, tag = 'internal scratch']
  %s0 = inlined_call_operand.vmem [shape: f32[34,32], index: 0, kind: input, shape index: {}]
  %s1 = inlined_call_operand.vmem [shape: f32[1,32], index: 1, kind: input, shape index: {}]
  %s2 = inlined_call_operand.vmem [shape: f32[1,32], index: 2, kind: input, shape index: {}]
  %s3 = inlined_call_operand.vmem [shape: f32[34,32], index: 3, kind: output, shape index: {}]
  %s4 = sld [smem:[#allocation0]]
  $region22: #{maskclip_featurizer.8} parent=0
    _
  %s6 = ssub.s32 1, %s4
  %s7 = scalar_select 0, %s6, %s4
  // Predicated region
  $region2: #{maskclip_featurizer.8} parent=0 // pred_check
    _
  $region3: #{maskclip_featurizer.8} parent=0 // pred_check_branch
    %9 = sbr.rel (0) target = $region5
  $region4: #{maskclip_featurizer.8} parent=0 // pred_region
    _
  $region5: #{maskclip_featurizer.8} parent=0 // pred_fallthru
    _
  // Predicated region
  $region6: #{maskclip_featurizer.8} parent=0 // pred_check
    _
  $region7: #{maskclip_featurizer.8} parent=0 // pred_check_branch
    %11 = sbr.rel (0) target = $region9
  $region8: #{maskclip_featurizer.8} parent=0 // pred_region
    _
  $region9: #{maskclip_featurizer.8} parent=0 // pred_fallthru
    _
  // Predicated region
  $region10: #{maskclip_featurizer.8} parent=0 // pred_check
    _
  $region11: #{maskclip_featurizer.8} parent=0 // pred_check_branch
    %13 = sbr.rel (0) target = $region13
  $region12: #{maskclip_featurizer.8} parent=0 // pred_region
    _
  $region13: #{maskclip_featurizer.8} parent=0 // pred_fallthru
    _
  %v14 = vld [vmem:[%s0] sm:$0xff]
  %v15 = vld [vmem:[%s0 + $0x8] sm:$0xff]
  %v16 = vld [vmem:[%s0 + $0x10] sm:$0xff]
  %v17 = vld [vmem:[%s0 + $0x18] sm:$0xff]
  %v18 = vld [vmem:[%s0 + $0x20] sm:$0x3]
  %v19 = vld [vmem:[%s1] sm:$0x1]
  %v20 = vld [vmem:[%s2] sm:$0x1]
  %vm21 = vcmask 261120
  %v22 = vsel %vm21, %v14, 0.0
  %23 = vadd.xlane.f32.xlu0 %v22
  %v24 = vpop.xlane.xlu0 %23
  %v25 = vsel %vm21, %v15, 0.0
  %26 = vadd.xlane.f32.xlu0 %v25
  %v27 = vpop.xlane.xlu0 %26
  %v28 = vsel %vm21, %v16, 0.0
  %29 = vadd.xlane.f32.xlu0 %v28
  %v30 = vpop.xlane.xlu0 %29
  %v31 = vsel %vm21, %v17, 0.0
  %32 = vadd.xlane.f32.xlu0 %v31
  %v33 = vpop.xlane.xlu0 %32
  %vm34 = vcmask 254976
  %v35 = vsel %vm34, %v18, 0.0
  %36 = vadd.xlane.f32.xlu0 %v35
  %v37 = vpop.xlane.xlu0 %36
  %v38 = vrcp.pop 32.0
  %v39 = vmul.f32 %v24, %v38
  %v40 = vmul.f32 %v27, %v38
  %v41 = vmul.f32 %v30, %v38
  %v42 = vmul.f32 %v33, %v38
  %v43 = vmul.f32 %v37, %v38
  %v44 = vsub.f32 %v14, %v39
  %v45 = vsub.f32 %v15, %v40
  %v46 = vsub.f32 %v16, %v41
  %v47 = vsub.f32 %v17, %v42
  %v48 = vsub.f32 %v18, %v43
  %v49 = vmul.f32 %v44, %v44
  %v50 = vmul.f32 %v45, %v45
  %v51 = vmul.f32 %v46, %v46
  %v52 = vmul.f32 %v47, %v47
  %v53 = vmul.f32 %v48, %v48
  %v54 = vsel %vm21, %v49, 0.0
  %55 = vadd.xlane.f32.xlu0 %v54
  %v56 = vpop.xlane.xlu0 %55
  %v57 = vsel %vm21, %v50, 0.0
  %58 = vadd.xlane.f32.xlu0 %v57
  %v59 = vpop.xlane.xlu0 %58
  %v60 = vsel %vm21, %v51, 0.0
  %61 = vadd.xlane.f32.xlu0 %v60
  %v62 = vpop.xlane.xlu0 %61
  %v63 = vsel %vm21, %v52, 0.0
  %64 = vadd.xlane.f32.xlu0 %v63
  %v65 = vpop.xlane.xlu0 %64
  %v66 = vsel %vm34, %v53, 0.0
  %67 = vadd.xlane.f32.xlu0 %v66
  %v68 = vpop.xlane.xlu0 %67
  %v69 = vmul.f32 %v56, %v38
  %v70 = vmul.f32 %v59, %v38
  %v71 = vmul.f32 %v62, %v38
  %v72 = vmul.f32 %v65, %v38
  %v73 = vmul.f32 %v68, %v38
  %v74 = vadd.f32 %v69, 1e-05
  %v75 = vadd.f32 %v70, 1e-05
  %v76 = vadd.f32 %v71, 1e-05
  %v77 = vadd.f32 %v72, 1e-05
  %v78 = vadd.f32 %v73, 1e-05
  %v79 = vrsqrt.pop %v74
  %v80 = vrsqrt.pop %v75
  %v81 = vrsqrt.pop %v76
  %v82 = vrsqrt.pop %v77
  %v83 = vrsqrt.pop %v78
  %v84 = vmul.f32 %v44, %v79
  %v85 = vmul.f32 %v45, %v80
  %v86 = vmul.f32 %v46, %v81
  %v87 = vmul.f32 %v47, %v82
  %v88 = vmul.f32 %v48, %v83
  %v90 = vlaneseq
  %v91 = vshrl.u32 %v90, 7
  %v92 = vsub.s32 0, %v91
  %v93 = vrot.slane %v19, %v92
  %v95 = vmul.f32 %v84, %v93
  %v96 = vmul.f32 %v85, %v93
  %v97 = vmul.f32 %v86, %v93
  %v98 = vmul.f32 %v87, %v93
  %v99 = vmul.f32 %v88, %v93
  %v101 = vlaneseq
  %v102 = vshrl.u32 %v101, 7
  %v103 = vsub.s32 0, %v102
  %v104 = vrot.slane %v20, %v103
  %v106 = vadd.f32 %v95, %v104
  %v107 = vadd.f32 %v96, %v104
  %v108 = vadd.f32 %v97, %v104
  %v109 = vadd.f32 %v98, %v104
  %v110 = vadd.f32 %v99, %v104
  %111 = vst.msk [vmem:[%s3] sm:$0xff] %vm21, %v106
  %112 = vst.msk [vmem:[%s3 + $0x8] sm:$0xff] %vm21, %v107
  %113 = vst.msk [vmem:[%s3 + $0x10] sm:$0xff] %vm21, %v108
  %114 = vst.msk [vmem:[%s3 + $0x18] sm:$0xff] %vm21, %v109
  %115 = vst.msk [vmem:[%s3 + $0x20] sm:$0x3] %vm34, %v110
  // Predicated region
  $region14: #{maskclip_featurizer.8} parent=0 // pred_check
    _
  $region15: #{maskclip_featurizer.8} parent=0 // pred_check_branch
    %117 = sbr.rel (0) target = $region17
  $region16: #{maskclip_featurizer.8} parent=0 // pred_region
    _
  $region17: #{maskclip_featurizer.8} parent=0 // pred_fallthru
    _
  // Predicated region
  $region18: #{maskclip_featurizer.8} parent=0 // pred_check
    _
  $region19: #{maskclip_featurizer.8} parent=0 // pred_check_branch
    %119 = sbr.rel (0) target = $region21
  $region20: #{maskclip_featurizer.8} parent=0 // pred_region
    _
  $region21: #{maskclip_featurizer.8} parent=0 // pred_fallthru
    _

// kernel: maskclip_featurizer.7
$region0: #{maskclip_featurizer.7}
  #allocation0 [shape = 'u32[]', space=smem, size = 0x4, offset = 0x4, fixed_abs, tag = 'smem constant byte address 0x4 - core index']
  #allocation1 [shape = 'u32[144,128]{1,0:T(1,128)}', space=vmem, size = 0x12000, scoped, tag = 'internal scratch']
  %s0 = inlined_call_operand.vmem [shape: f32[32,192], index: 0, kind: input, shape index: {}]
  %s1 = inlined_call_operand.vmem [shape: bf16[192,32], index: 1, kind: input, shape index: {}]
  %s2 = inlined_call_operand.vmem [shape: f32[1,32], index: 2, kind: input, shape index: {}]
  %s3 = inlined_call_operand.vmem [shape: f32[32,32], index: 3, kind: output, shape index: {}]
  %s4 = sld [smem:[#allocation0]]
  $region22: #{maskclip_featurizer.7} parent=0
    _
  %s6 = ssub.s32 1, %s4
  %s7 = scalar_select 0, %s6, %s4
  // Predicated region
  $region2: #{maskclip_featurizer.7} parent=0 // pred_check
    _
  $region3: #{maskclip_featurizer.7} parent=0 // pred_check_branch
    %9 = sbr.rel (0) target = $region5
  $region4: #{maskclip_featurizer.7} parent=0 // pred_region
    _
  $region5: #{maskclip_featurizer.7} parent=0 // pred_fallthru
    _
  // Predicated region
  $region6: #{maskclip_featurizer.7} parent=0 // pred_check
    _
  $region7: #{maskclip_featurizer.7} parent=0 // pred_check_branch
    %11 = sbr.rel (0) target = $region9
  $region8: #{maskclip_featurizer.7} parent=0 // pred_region
    _
  $region9: #{maskclip_featurizer.7} parent=0 // pred_fallthru
    _
  // Predicated region
  $region10: #{maskclip_featurizer.7} parent=0 // pred_check
    _
  $region11: #{maskclip_featurizer.7} parent=0 // pred_check_branch
    %13 = sbr.rel (0) target = $region13
  $region12: #{maskclip_featurizer.7} parent=0 // pred_region
    _
  $region13: #{maskclip_featurizer.7} parent=0 // pred_fallthru
    _
  %v15 = vld [vmem:[%s0] sm:$0xff]
  %v16 = vld [vmem:[%s0 + $0x8] sm:$0xff]
  %v17 = vld [vmem:[%s0 + $0x10] sm:$0xff]
  %v18 = vld [vmem:[%s0 + $0x18] sm:$0xff]
  %v19 = vld [vmem:[%s0 + $0x20] sm:$0xff]
  %v20 = vld [vmem:[%s0 + $0x28] sm:$0xff]
  %v21 = vld [vmem:[%s0 + $0x30] sm:$0xff]
  %v22 = vld [vmem:[%s0 + $0x38] sm:$0xff]
  %v23 = vpack.c.bf16 %v17, %v15
  %v24 = vpack.c.bf16 %v18, %v16
  %v25 = vpack.c.bf16 %v21, %v19
  %v26 = vpack.c.bf16 %v22, %v20
  %v27 = vld [vmem:[%s1] sm:$0xf]
  %v28 = vld [vmem:[%s1 + $0x4] sm:$0xf]
  %v29 = vld [vmem:[%s1 + $0x8] sm:$0xf]
  %v30 = vld [vmem:[%s1 + $0xc] sm:$0xf]
  %v31 = vld [vmem:[%s1 + $0x10] sm:$0xf]
  %v32 = vld [vmem:[%s1 + $0x14] sm:$0xf]
  %v33 = vld [vmem:[%s1 + $0x18] sm:$0xf]
  %v34 = vld [vmem:[%s1 + $0x1c] sm:$0xf]
  %v35 = vld [vmem:[%s1 + $0x20] sm:$0xf]
  %v36 = vld [vmem:[%s1 + $0x24] sm:$0xf]
  %v37 = vld [vmem:[%s1 + $0x28] sm:$0xf]
  %v38 = vld [vmem:[%s1 + $0x2c] sm:$0xf]
  %v39 = vld [vmem:[%s1 + $0x30] sm:$0xf]
  %v40 = vld [vmem:[%s1 + $0x34] sm:$0xf]
  %v41 = vld [vmem:[%s1 + $0x38] sm:$0xf]
  %v42 = vld [vmem:[%s1 + $0x3c] sm:$0xf]
  %v43 = vld [vmem:[%s1 + $0x40] sm:$0xf]
  %v44 = vld [vmem:[%s1 + $0x44] sm:$0xf]
  %v45 = vld [vmem:[%s1 + $0x48] sm:$0xf]
  %v46 = vld [vmem:[%s1 + $0x4c] sm:$0xf]
  %v47 = vld [vmem:[%s1 + $0x50] sm:$0xf]
  %v48 = vld [vmem:[%s1 + $0x54] sm:$0xf]
  %v49 = vld [vmem:[%s1 + $0x58] sm:$0xf]
  %v50 = vld [vmem:[%s1 + $0x5c] sm:$0xf]
  %v51 = vld [vmem:[%s2] sm:$0x1]
  %v53 = vlaneseq
  %v54 = vshrl.u32 %v53, 7
  %v55 = vsub.s32 0, %v54
  %v56 = vrot.slane %v51, %v55
  %v82 = vunpack.c.l.b16 %v27
  %v83 = vunpack.c.l.b16 %v28
  %v84 = vunpack.c.l.b16 %v29
  %v85 = vunpack.c.l.b16 %v30
  %v86 = vunpack.c.l.b16 %v31
  %v87 = vunpack.c.l.b16 %v32
  %v88 = vunpack.c.l.b16 %v33
  %v89 = vunpack.c.l.b16 %v34
  %v90 = vunpack.c.l.b16 %v35
  %v91 = vunpack.c.l.b16 %v36
  %v92 = vunpack.c.l.b16 %v37
  %v93 = vunpack.c.l.b16 %v38
  %v94 = vunpack.c.l.b16 %v39
  %v95 = vunpack.c.l.b16 %v40
  %v96 = vunpack.c.l.b16 %v41
  %v97 = vunpack.c.l.b16 %v42
  %v98 = vunpack.c.l.b16 %v43
  %v99 = vunpack.c.l.b16 %v44
  %v100 = vunpack.c.l.b16 %v45
  %v101 = vunpack.c.l.b16 %v46
  %v102 = vunpack.c.l.b16 %v47
  %v103 = vunpack.c.l.b16 %v48
  %v104 = vunpack.c.l.b16 %v49
  %v105 = vunpack.c.l.b16 %v50
  %v106 = vpack.c.b16 %v83, %v82
  %v107 = vpack.c.b16 %v85, %v84
  %v108 = vpack.c.b16 %v87, %v86
  %v109 = vpack.c.b16 %v89, %v88
  %v110 = vpack.c.b16 %v91, %v90
  %v111 = vpack.c.b16 %v93, %v92
  %v112 = vpack.c.b16 %v95, %v94
  %v113 = vpack.c.b16 %v97, %v96
  %v114 = vpack.c.b16 %v99, %v98
  %v115 = vpack.c.b16 %v101, %v100
  %v116 = vpack.c.b16 %v103, %v102
  %v117 = vpack.c.b16 %v105, %v104
  %vm130 = vcmask 523264
  %v132 = vsel %vm130, %v24, 0
  %v135 = vsel %vm130, %v26, 0
  %137 = vmatprep.subr.bf16.mxu0 0
  %138 = vmatpush1.bf16.msra.mxu0 %v113
  %139 = vmatprep.subr.bf16.mxu0 0
  %140 = vmatpush1.bf16.msra.mxu0 %v112
  %141 = vmatprep.subr.bf16.mxu0 0
  %142 = vmatpush1.bf16.msra.mxu0 %v111
  %143 = vmatprep.subr.bf16.mxu0 0
  %144 = vmatpush1.bf16.msra.mxu0 %v110
  %145 = vmatprep.subr.bf16.mxu0 0
  %146 = vmatpush1.bf16.msra.mxu0 %v109
  %147 = vmatprep.subr.bf16.mxu0 0
  %148 = vmatpush1.bf16.msra.mxu0 %v108
  %149 = vmatprep.subr.bf16.mxu0 0
  %150 = vmatpush1.bf16.msra.mxu0 %v107
  %151 = vmatprep.subr.bf16.mxu0 0
  %152 = vmatpush1.bf16.msra.mxu0 %v106
  %153 = vmatprep.subr.bf16.mxu0 0
  %154 = vmatpush2.bf16.msra.mxu0 0
  %155 = vmatprep.subr.bf16.mxu0 0
  %156 = vmatpush2.bf16.msra.mxu0 0
  %157 = vmatprep.subr.bf16.mxu0 0
  %158 = vmatpush2.bf16.msra.mxu0 0
  %159 = vmatprep.subr.bf16.mxu0 0
  %160 = vmatpush2.bf16.msra.mxu0 0
  %161 = vmatprep.subr.bf16.mxu0 0
  %162 = vmatpush2.bf16.msra.mxu0 %v117
  %163 = vmatprep.subr.bf16.mxu0 0
  %164 = vmatpush2.bf16.msra.mxu0 %v116
  %165 = vmatprep.subr.bf16.mxu0 0
  %166 = vmatpush2.bf16.msra.mxu0 %v115
  %167 = vmatprep.subr.bf16.mxu0 0
  %168 = vmatpush2.bf16.msra.mxu0 %v114
  %169 = vmatprep.mubr.bf16.mxu0 %v132
  %170 = vmatmul.mubr.bf16.gmra.mxu0 %v23
  %v171 = vpop.f32.mrf.mxu0
  %v172 = vadd.f32 %v56, %v171
  %v173 = vpop.f32.mrf.mxu0
  %v174 = vpop.f32.mrf.mxu0
  %v175 = vadd.f32 %v56, %v174
  %v176 = vpop.f32.mrf.mxu0
  %177 = vmatprep.mubr.bf16.mxu0 %v135
  %178 = vmatmul.mubr.bf16.gmra.mxu0 %v25
  %v179 = vpop.f32.mrf.mxu0
  %v180 = vadd.f32 %v56, %v179
  %v181 = vpop.f32.mrf.mxu0
  %v182 = vpop.f32.mrf.mxu0
  %v183 = vadd.f32 %v56, %v182
  %v184 = vpop.f32.mrf.mxu0
  %185 = vdwg.mxu0
  %vm186 = vcmask 261120
  %187 = vst.msk [vmem:[%s3] sm:$0xff] %vm186, %v172
  %188 = vst.msk [vmem:[%s3 + $0x8] sm:$0xff] %vm186, %v175
  %189 = vst.msk [vmem:[%s3 + $0x10] sm:$0xff] %vm186, %v180
  %190 = vst.msk [vmem:[%s3 + $0x18] sm:$0xff] %vm186, %v183
  // Predicated region
  $region14: #{maskclip_featurizer.7} parent=0 // pred_check
    _
  $region15: #{maskclip_featurizer.7} parent=0 // pred_check_branch
    %192 = sbr.rel (0) target = $region17
  $region16: #{maskclip_featurizer.7} parent=0 // pred_region
    _
  $region17: #{maskclip_featurizer.7} parent=0 // pred_fallthru
    _
  // Predicated region
  $region18: #{maskclip_featurizer.7} parent=0 // pred_check
    _
  $region19: #{maskclip_featurizer.7} parent=0 // pred_check_branch
    %194 = sbr.rel (0) target = $region21
  $region20: #{maskclip_featurizer.7} parent=0 // pred_region
    _
  $region21: #{maskclip_featurizer.7} parent=0 // pred_fallthru
    _

// kernel: maskclip_featurizer.10
$region0: #{maskclip_featurizer.10}
  #allocation0 [shape = 'u32[]', space=smem, size = 0x4, offset = 0x4, fixed_abs, tag = 'smem constant byte address 0x4 - core index']
  #allocation1 [shape = 'u32[144,128]{1,0:T(1,128)}', space=vmem, size = 0x12000, scoped, tag = 'internal scratch']
  %s0 = inlined_call_operand.vmem [shape: f32[2,17,32], index: 0, kind: input, shape index: {}]
  %s1 = inlined_call_operand.vmem [shape: f32[1,32], index: 1, kind: input, shape index: {}]
  %s2 = inlined_call_operand.vmem [shape: f32[1,32], index: 2, kind: input, shape index: {}]
  %s3 = inlined_call_operand.vmem [shape: bf16[32,128], index: 3, kind: input, shape index: {}]
  %s4 = inlined_call_operand.vmem [shape: f32[1,128], index: 4, kind: input, shape index: {}]
  %s5 = inlined_call_operand.vmem [shape: bf16[128,32], index: 5, kind: input, shape index: {}]
  %s6 = inlined_call_operand.vmem [shape: f32[1,32], index: 6, kind: input, shape index: {}]
  %s7 = inlined_call_operand.vmem [shape: f32[2,17,32], index: 7, kind: output, shape index: {}]
  %s8 = sld [smem:[#allocation0]]
  $region61: #{maskclip_featurizer.10} parent=0
    _
  %s10 = ssub.s32 1, %s8
  %s11 = scalar_select 0, %s10, %s8
  loop: start=0, step=1, limit=4
  $region2: #{maskclip_featurizer.10} parent=0 // loop_pre_header
    _
  $region3: #{maskclip_featurizer.10} parent=0 // loop_header
    %s13 = sphi 0, %s17
    %p14 = scmp.ge.s32.totalorder %s13, 4
    %s23 = sphi 0, %s25
    %s26 = sphi 0, %s23
    %s27 = sphi 0, %s26
    %s43 = sphi 0, %s27
    %s47 = sphi 0, %s47
    %s49 = sphi 0, %s47
    %s50 = sphi 0, %s49
    %s64 = sphi 0, %s50
    %s68 = sphi 0, %s68
    %s70 = sphi 0, %s68
    %s71 = sphi 0, %s70
    %s85 = sphi 0, %s71
    %s89 = sphi 0, %s89
    %s91 = sphi 0, %s89
    %s92 = sphi 0, %s91
    %s106 = sphi 0, %s92
    %s110 = sphi 0, %s110
    %s112 = sphi 0, %s110
    %s113 = sphi 0, %s112
    %s127 = sphi 0, %s113
    %s131 = sphi 0, %s131
    %s133 = sphi 0, %s131
    %s134 = sphi 0, %s133
    %s148 = sphi 0, %s134
    %s152 = sphi 0, %s152
    %s154 = sphi 0, %s152
    %s155 = sphi 0, %s154
    %s169 = sphi 0, %s155
    %s175 = sphi 0, %s177
    %s178 = sphi 0, %s175
    %s179 = sphi 0, %s178
    %s195 = sphi 0, %s179
  $region4: #{maskclip_featurizer.10} parent=0 // loop_header_branch
    %16 = sbr.rel (%p14) target = $region8
  $region5: #{maskclip_featurizer.10} parent=0 // loop_body
    %s18 = ssub.s32 %s13, 1
    %s19 = ssub.s32 %s13, 2
    %s20 = sadd.s32 %s13, 1
    %s21 = ssub.s32 %s13, %s20
    %p22 = scmp.eq.s32.totalorder %s21, 0
    %s24 = sadd.s32 %s23, 1
    %s25 = scalar_select %p22, %s23, %s24
    %p28 = pneg %p22
    %p29 = scmp.eq.s32.totalorder %s13, 1
    %p30 = por %p28, %p29
    %p31 = scmp.ne.s32.totalorder %s23, %s26
    %p32 = scmp.eq.s32.totalorder %s13, 0
    %p33 = por %p31, %p32
    %p34 = scmp.ne.s32.totalorder %s23, %s26
    %p35 = scmp.eq.s32.totalorder %s18, 1
    %p36 = por %p34, %p35
    %p37 = scmp.ne.s32.totalorder %s26, %s27
    %p38 = scmp.eq.s32.totalorder %s18, 0
    %p39 = por %p37, %p38
    %p40 = scmp.ne.s32.totalorder %s26, %s27
    %p41 = scmp.eq.s32.totalorder %s19, 1
    %p42 = por %p40, %p41
    %p44 = scmp.ne.s32.totalorder %s27, %s43
    %p45 = scmp.eq.s32.totalorder %s19, 0
    %p46 = por %p44, %p45
    %s48 = sadd.s32 %s47, 1
    %p51 = scmp.eq.s32.totalorder %s13, 1
    %p52 = scmp.ne.s32.totalorder %s47, %s49
    %p53 = scmp.eq.s32.totalorder %s13, 0
    %p54 = por %p52, %p53
    %p55 = scmp.ne.s32.totalorder %s47, %s49
    %p56 = scmp.eq.s32.totalorder %s18, 1
    %p57 = por %p55, %p56
    %p58 = scmp.ne.s32.totalorder %s49, %s50
    %p59 = scmp.eq.s32.totalorder %s18, 0
    %p60 = por %p58, %p59
    %p61 = scmp.ne.s32.totalorder %s49, %s50
    %p62 = scmp.eq.s32.totalorder %s19, 1
    %p63 = por %p61, %p62
    %p65 = scmp.ne.s32.totalorder %s50, %s64
    %p66 = scmp.eq.s32.totalorder %s19, 0
    %p67 = por %p65, %p66
    %s69 = sadd.s32 %s68, 1
    %p72 = scmp.eq.s32.totalorder %s13, 1
    %p73 = scmp.ne.s32.totalorder %s68, %s70
    %p74 = scmp.eq.s32.totalorder %s13, 0
    %p75 = por %p73, %p74
    %p76 = scmp.ne.s32.totalorder %s68, %s70
    %p77 = scmp.eq.s32.totalorder %s18, 1
    %p78 = por %p76, %p77
    %p79 = scmp.ne.s32.totalorder %s70, %s71
    %p80 = scmp.eq.s32.totalorder %s18, 0
    %p81 = por %p79, %p80
    %p82 = scmp.ne.s32.totalorder %s70, %s71
    %p83 = scmp.eq.s32.totalorder %s19, 1
    %p84 = por %p82, %p83
    %p86 = scmp.ne.s32.totalorder %s71, %s85
    %p87 = scmp.eq.s32.totalorder %s19, 0
    %p88 = por %p86, %p87
    %s90 = sadd.s32 %s89, 1
    %p93 = scmp.eq.s32.totalorder %s13, 1
    %p94 = scmp.ne.s32.totalorder %s89, %s91
    %p95 = scmp.eq.s32.totalorder %s13, 0
    %p96 = por %p94, %p95
    %p97 = scmp.ne.s32.totalorder %s89, %s91
    %p98 = scmp.eq.s32.totalorder %s18, 1
    %p99 = por %p97, %p98
    %p100 = scmp.ne.s32.totalorder %s91, %s92
    %p101 = scmp.eq.s32.totalorder %s18, 0
    %p102 = por %p100, %p101
    %p103 = scmp.ne.s32.totalorder %s91, %s92
    %p104 = scmp.eq.s32.totalorder %s19, 1
    %p105 = por %p103, %p104
    %p107 = scmp.ne.s32.totalorder %s92, %s106
    %p108 = scmp.eq.s32.totalorder %s19, 0
    %p109 = por %p107, %p108
    %s111 = sadd.s32 %s110, 1
    %p114 = scmp.eq.s32.totalorder %s13, 1
    %p115 = scmp.ne.s32.totalorder %s110, %s112
    %p116 = scmp.eq.s32.totalorder %s13, 0
    %p117 = por %p115, %p116
    %p118 = scmp.ne.s32.totalorder %s110, %s112
    %p119 = scmp.eq.s32.totalorder %s18, 1
    %p120 = por %p118, %p119
    %p121 = scmp.ne.s32.totalorder %s112, %s113
    %p122 = scmp.eq.s32.totalorder %s18, 0
    %p123 = por %p121, %p122
    %p124 = scmp.ne.s32.totalorder %s112, %s113
    %p125 = scmp.eq.s32.totalorder %s19, 1
    %p126 = por %p124, %p125
    %p128 = scmp.ne.s32.totalorder %s113, %s127
    %p129 = scmp.eq.s32.totalorder %s19, 0
    %p130 = por %p128, %p129
    %s132 = sadd.s32 %s131, 1
    %p135 = scmp.eq.s32.totalorder %s13, 1
    %p136 = scmp.ne.s32.totalorder %s131, %s133
    %p137 = scmp.eq.s32.totalorder %s13, 0
    %p138 = por %p136, %p137
    %p139 = scmp.ne.s32.totalorder %s131, %s133
    %p140 = scmp.eq.s32.totalorder %s18, 1
    %p141 = por %p139, %p140
    %p142 = scmp.ne.s32.totalorder %s133, %s134
    %p143 = scmp.eq.s32.totalorder %s18, 0
    %p144 = por %p142, %p143
    %p145 = scmp.ne.s32.totalorder %s133, %s134
    %p146 = scmp.eq.s32.totalorder %s19, 1
    %p147 = por %p145, %p146
    %p149 = scmp.ne.s32.totalorder %s134, %s148
    %p150 = scmp.eq.s32.totalorder %s19, 0
    %p151 = por %p149, %p150
    %s153 = sadd.s32 %s152, 1
    %p156 = scmp.eq.s32.totalorder %s13, 1
    %p157 = scmp.ne.s32.totalorder %s152, %s154
    %p158 = scmp.eq.s32.totalorder %s13, 0
    %p159 = por %p157, %p158
    %p160 = scmp.ne.s32.totalorder %s152, %s154
    %p161 = scmp.eq.s32.totalorder %s18, 1
    %p162 = por %p160, %p161
    %p163 = scmp.ne.s32.totalorder %s154, %s155
    %p164 = scmp.eq.s32.totalorder %s18, 0
    %p165 = por %p163, %p164
    %p166 = scmp.ne.s32.totalorder %s154, %s155
    %p167 = scmp.eq.s32.totalorder %s19, 1
    %p168 = por %p166, %p167
    %p170 = scmp.ne.s32.totalorder %s155, %s169
    %p171 = scmp.eq.s32.totalorder %s19, 0
    %p172 = por %p170, %p171
    %s173 = ssub.s32 %s13, %s20
    %p174 = scmp.eq.s32.totalorder %s173, 0
    %s176 = sadd.s32 %s175, 1
    %s177 = scalar_select %p174, %s175, %s176
    %p180 = pneg %p174
    %p181 = scmp.eq.s32.totalorder %s13, 1
    %p182 = por %p180, %p181
    %p183 = scmp.ne.s32.totalorder %s175, %s178
    %p184 = scmp.eq.s32.totalorder %s13, 0
    %p185 = por %p183, %p184
    %p186 = scmp.ne.s32.totalorder %s175, %s178
    %p187 = scmp.eq.s32.totalorder %s18, 1
    %p188 = por %p186, %p187
    %p189 = scmp.ne.s32.totalorder %s178, %s179
    %p190 = scmp.eq.s32.totalorder %s18, 0
    %p191 = por %p189, %p190
    %p192 = scmp.ne.s32.totalorder %s178, %s179
    %p193 = scmp.eq.s32.totalorder %s19, 1
    %p194 = por %p192, %p193
    %p196 = scmp.ne.s32.totalorder %s179, %s195
    %p197 = scmp.eq.s32.totalorder %s19, 0
    %p198 = por %p196, %p197
    %p199 = scmp.le.s32.totalorder 1, %s13
    %p200 = scmp.lt.s32.totalorder %s13, 3
    %p201 = pnand %p199, %p200
    %p202 = pneg %p201
    // Predicated region
    $region9: #{maskclip_featurizer.10} parent=5 // pred_check
      _
    $region10: #{maskclip_featurizer.10} parent=5 // pred_check_branch
      %204 = sbr.rel (%p201) target = $region12
    $region11: #{maskclip_featurizer.10} parent=5 // pred_region
      %s205 = ssub.s32 %s13, 1
      // Predicated region
      $region13: #{maskclip_featurizer.10} parent=11 // pred_check
        %p206 = pneg %p60
      $region14: #{maskclip_featurizer.10} parent=11 // pred_check_branch
        %208 = sbr.rel (%p206) target = $region16
      $region15: #{maskclip_featurizer.10} parent=11 // pred_region
        _
      $region16: #{maskclip_featurizer.10} parent=11 // pred_fallthru
        _
      // Predicated region
      $region17: #{maskclip_featurizer.10} parent=11 // pred_check
        %p209 = pneg %p81
      $region18: #{maskclip_featurizer.10} parent=11 // pred_check_branch
        %211 = sbr.rel (%p209) target = $region20
      $region19: #{maskclip_featurizer.10} parent=11 // pred_region
        _
      $region20: #{maskclip_featurizer.10} parent=11 // pred_fallthru
        _
      // Predicated region
      $region21: #{maskclip_featurizer.10} parent=11 // pred_check
        %p212 = pneg %p102
      $region22: #{maskclip_featurizer.10} parent=11 // pred_check_branch
        %214 = sbr.rel (%p212) target = $region24
      $region23: #{maskclip_featurizer.10} parent=11 // pred_region
        _
      $region24: #{maskclip_featurizer.10} parent=11 // pred_fallthru
        _
      // Predicated region
      $region25: #{maskclip_featurizer.10} parent=11 // pred_check
        %p215 = pneg %p123
      $region26: #{maskclip_featurizer.10} parent=11 // pred_check_branch
        %217 = sbr.rel (%p215) target = $region28
      $region27: #{maskclip_featurizer.10} parent=11 // pred_region
        _
      $region28: #{maskclip_featurizer.10} parent=11 // pred_fallthru
        _
      // Predicated region
      $region29: #{maskclip_featurizer.10} parent=11 // pred_check
        %p218 = pneg %p144
      $region30: #{maskclip_featurizer.10} parent=11 // pred_check_branch
        %220 = sbr.rel (%p218) target = $region32
      $region31: #{maskclip_featurizer.10} parent=11 // pred_region
        _
      $region32: #{maskclip_featurizer.10} parent=11 // pred_fallthru
        _
      // Predicated region
      $region33: #{maskclip_featurizer.10} parent=11 // pred_check
        %p221 = pneg %p165
      $region34: #{maskclip_featurizer.10} parent=11 // pred_check_branch
        %223 = sbr.rel (%p221) target = $region36
      $region35: #{maskclip_featurizer.10} parent=11 // pred_region
        _
      $region36: #{maskclip_featurizer.10} parent=11 // pred_fallthru
        _
    $region12: #{maskclip_featurizer.10} parent=5 // pred_fallthru
      _
    %p224 = scmp.lt.s32.totalorder %s13, 2
    // Predicated region
    $region37: #{maskclip_featurizer.10} parent=5 // pred_check
      %p225 = pneg %p224
    $region38: #{maskclip_featurizer.10} parent=5 // pred_check_branch
      %227 = sbr.rel (%p225) target = $region40
    $region39: #{maskclip_featurizer.10} parent=5 // pred_region
      // Predicated region
      $region41: #{maskclip_featurizer.10} parent=39 // pred_check
        %p228 = pneg %p33
      $region42: #{maskclip_featurizer.10} parent=39 // pred_check_branch
        %230 = sbr.rel (%p228) target = $region44
      $region43: #{maskclip_featurizer.10} parent=39 // pred_region
        %p231 = scmp.lt.s32.totalorder %s13, 1
        %s232 = scalar_select %p231, %s13, 1
        %s233 = smul.addr %s232, 3
        %s234 = smul.addr %s233, 8
        %s235 = scalar_lea.vmem %s0, %s234
      $region44: #{maskclip_featurizer.10} parent=39 // pred_fallthru
        _
    $region40: #{maskclip_featurizer.10} parent=5 // pred_fallthru
      _
    %p236 = scmp.le.s32.totalorder 1, %s13
    %p237 = scmp.lt.s32.totalorder %s13, 3
    %p238 = pnand %p236, %p237
    %p239 = pneg %p238
    // Predicated region
    $region45: #{maskclip_featurizer.10} parent=5 // pred_check
      _
    $region46: #{maskclip_featurizer.10} parent=5 // pred_check_branch
      %241 = sbr.rel (%p238) target = $region48
    $region47: #{maskclip_featurizer.10} parent=5 // pred_region
      %s242 = ssub.s32 %s13, 1
      %p243 = scmp.lt.s32.totalorder %s18, 1
      %s244 = scalar_select %p243, %s18, 1
      %s245 = smul.addr %s244, 3
      %s246 = smul.addr %s245, 8
      %s247 = scalar_lea.vmem %s0, %s246
      %p248 = pneg %p39
      %p249 = pneg %p36
      %p250 = pneg %p60
      %p251 = pneg %p57
      %p252 = pneg %p81
      %p253 = pneg %p78
      %p254 = pneg %p102
      %p255 = pneg %p99
      %p256 = pneg %p123
      %p257 = pneg %p120
      %p258 = pneg %p144
      %p259 = pneg %p141
      %p260 = pneg %p165
      %p261 = pneg %p162
      %p262 = pneg %p191
      %p263 = pneg %p188
      %p264 = scmp.lt.s32.totalorder %s18, 1
      %s265 = scalar_select %p264, %s18, 1
      %s266 = smul.addr %s265, 3
      %s267 = smul.addr %s266, 8
      %s268 = scalar_lea.vmem %s7, %s267
      %p269 = scmp.lt.s32.totalorder %s18, 1
      %s270 = scalar_select %p269, %s18, 1
      %s271 = smul.addr %s270, 3
      %s272 = smul.addr %s271, 8
      %s273 = scalar_lea.vmem %s0, %s272
      %p274 = scmp.lt.s32.totalorder %s18, 1
      %s275 = scalar_select %p274, %s18, 1
      %s276 = smul.addr %s275, 3
      %s277 = smul.addr %s276, 8
      %s278 = scalar_lea.vmem %s7, %s277
      %v280 = vld [vmem:[%s273] sm:$0xff]
      %v281 = vld [vmem:[%s273 + $0x8] sm:$0xff]
      %v282 = vld [vmem:[%s273 + $0x10] sm:$0x1]
      %v283 = vld [vmem:[%s1] sm:$0x1]
      %v284 = vld [vmem:[%s2] sm:$0x1]
      %vm285 = vcmask 261120
      %v286 = vsel %vm285, %v280, 0.0
      %287 = vadd.xlane.f32.xlu0 %v286
      %v288 = vpop.xlane.xlu0 %287
      %v289 = vsel %vm285, %v281, 0.0
      %290 = vadd.xlane.f32.xlu0 %v289
      %v291 = vpop.xlane.xlu0 %290
      %vm292 = vcmask 253952
      %v293 = vsel %vm292, %v282, 0.0
      %294 = vadd.xlane.f32.xlu0 %v293
      %v295 = vpop.xlane.xlu0 %294
      %v296 = vrcp.pop 32.0
      %v297 = vmul.f32 %v288, %v296
      %v298 = vmul.f32 %v291, %v296
      %v299 = vmul.f32 %v295, %v296
      %v300 = vsub.f32 %v280, %v297
      %v301 = vsub.f32 %v281, %v298
      %v302 = vsub.f32 %v282, %v299
      %v303 = vmul.f32 %v300, %v300
      %v304 = vmul.f32 %v301, %v301
      %v305 = vmul.f32 %v302, %v302
      %v306 = vsel %vm285, %v303, 0.0
      %307 = vadd.xlane.f32.xlu0 %v306
      %v308 = vpop.xlane.xlu0 %307
      %v309 = vsel %vm285, %v304, 0.0
      %310 = vadd.xlane.f32.xlu0 %v309
      %v311 = vpop.xlane.xlu0 %310
      %v312 = vsel %vm292, %v305, 0.0
      %313 = vadd.xlane.f32.xlu0 %v312
      %v314 = vpop.xlane.xlu0 %313
      %v315 = vmul.f32 %v308, %v296
      %v316 = vmul.f32 %v311, %v296
      %v317 = vmul.f32 %v314, %v296
      %v318 = vadd.f32 %v315, 1e-05
      %v319 = vadd.f32 %v316, 1e-05
      %v320 = vadd.f32 %v317, 1e-05
      %v321 = vrsqrt.pop %v318
      %v322 = vrsqrt.pop %v319
      %v323 = vrsqrt.pop %v320
      %v324 = vmul.f32 %v300, %v321
      %v325 = vmul.f32 %v301, %v322
      %v326 = vmul.f32 %v302, %v323
      %v328 = vlaneseq
      %v329 = vshrl.u32 %v328, 7
      %v330 = vsub.s32 0, %v329
      %v331 = vrot.slane %v283, %v330
      %v333 = vmul.f32 %v324, %v331
      %v334 = vmul.f32 %v325, %v331
      %v335 = vmul.f32 %v326, %v331
      %v337 = vlaneseq
      %v338 = vshrl.u32 %v337, 7
      %v339 = vsub.s32 0, %v338
      %v340 = vrot.slane %v284, %v339
      %v342 = vadd.f32 %v333, %v340
      %v343 = vadd.f32 %v334, %v340
      %v344 = vadd.f32 %v335, %v340
      %v345 = vpack.c.bf16 %v343, %v342
      %v346 = vpack.c.bf16 %v344, %v344
      %v347 = vld [vmem:[%s3] sm:$0xf]
      %v348 = vld [vmem:[%s3 + $0x4] sm:$0xf]
      %v349 = vld [vmem:[%s3 + $0x8] sm:$0xf]
      %v350 = vld [vmem:[%s3 + $0xc] sm:$0xf]
      %v351 = vld [vmem:[%s4] sm:$0x1]
      %v353 = vlaneseq
      %v354 = vshrl.u32 %v353, 7
      %v355 = vsub.s32 0, %v354
      %v356 = vrot.slane %v351, %v355
      %v362 = vunpack.c.l.b16 %v347
      %v363 = vunpack.c.l.b16 %v348
      %v364 = vunpack.c.l.b16 %v349
      %v365 = vunpack.c.l.b16 %v350
      %v366 = vpack.c.b16 %v363, %v362
      %v367 = vpack.c.b16 %v365, %v364
      %v371 = vsel %vm285, %v345, 0
      %v374 = vsel %vm285, %v346, 0
      %376 = vmatprep.subr.bf16.mxu0 0
      %377 = vmatpush1.bf16.msra.mxu0 0
      %378 = vmatprep.subr.bf16.mxu0 0
      %379 = vmatpush1.bf16.msra.mxu0 0
      %380 = vmatprep.subr.bf16.mxu0 0
      %381 = vmatpush1.bf16.msra.mxu0 0
      %382 = vmatprep.subr.bf16.mxu0 0
      %383 = vmatpush1.bf16.msra.mxu0 0
      %384 = vmatprep.subr.bf16.mxu0 0
      %385 = vmatpush1.bf16.msra.mxu0 0
      %386 = vmatprep.subr.bf16.mxu0 0
      %387 = vmatpush1.bf16.msra.mxu0 0
      %388 = vmatprep.subr.bf16.mxu0 0
      %389 = vmatpush1.bf16.msra.mxu0 %v367
      %390 = vmatprep.subr.bf16.mxu0 0
      %391 = vmatpush1.bf16.msra.mxu0 %v366
      %392 = vmatprep.subr.bf16.mxu0 0
      %393 = vmatpush2.bf16.msra.mxu0 0
      %394 = vmatprep.subr.bf16.mxu0 0
      %395 = vmatpush2.bf16.msra.mxu0 0
      %396 = vmatprep.subr.bf16.mxu0 0
      %397 = vmatpush2.bf16.msra.mxu0 0
      %398 = vmatprep.subr.bf16.mxu0 0
      %399 = vmatpush2.bf16.msra.mxu0 0
      %400 = vmatprep.subr.bf16.mxu0 0
      %401 = vmatpush2.bf16.msra.mxu0 0
      %402 = vmatprep.subr.bf16.mxu0 0
      %403 = vmatpush2.bf16.msra.mxu0 0
      %404 = vmatprep.subr.bf16.mxu0 0
      %405 = vmatpush2.bf16.msra.mxu0 0
      %406 = vmatprep.subr.bf16.mxu0 0
      %407 = vmatpush2.bf16.msra.mxu0 0
      %408 = vmatprep.mubr.bf16.mxu0 0
      %409 = vmatmul.mubr.bf16.gmra.mxu0 %v371
      %v410 = vpop.f32.mrf.mxu0
      %v411 = vadd.f32 %v356, %v410
      %v412 = vpop.f32.mrf.mxu0
      %v413 = vpop.f32.mrf.mxu0
      %v414 = vadd.f32 %v356, %v413
      %v415 = vpop.f32.mrf.mxu0
      %416 = vmatprep.mubr.bf16.mxu0 0
      %417 = vmatmul.mubr.bf16.gmra.mxu0 %v374
      %v418 = vpop.f32.mrf.mxu0
      %v419 = vadd.f32 %v356, %v418
      %v420 = vpop.f32.mrf.mxu0
      %v421 = vpop.f32.mrf.mxu0
      %v422 = vpop.f32.mrf.mxu0
      %423 = vdwg.mxu0
      %v424 = vmul.f32 %v411, 1.702
      %v425 = vmul.f32 %v414, 1.702
      %v426 = vmul.f32 %v419, 1.702
      %v427 = vxor.u32 %v424, 2147483648
      %v428 = vxor.u32 %v425, 2147483648
      %v429 = vxor.u32 %v426, 2147483648
      %v430 = vmul.f32 %v427, 1.442695
      %v431 = vpow.pop %v430
      %v432 = vmul.f32 %v428, 1.442695
      %v433 = vpow.pop %v432
      %v434 = vmul.f32 %v429, 1.442695
      %v435 = vpow.pop %v434
      %v436 = vadd.f32 %v431, 1.0
      %v437 = vadd.f32 %v433, 1.0
      %v438 = vadd.f32 %v435, 1.0
      %v439 = vrcp.pop %v436
      %v440 = vmul.f32 1.0, %v439
      %v441 = vrcp.pop %v437
      %v442 = vmul.f32 1.0, %v441
      %v443 = vrcp.pop %v438
      %v444 = vmul.f32 1.0, %v443
      %v445 = vmul.f32 %v411, %v440
      %v446 = vmul.f32 %v414, %v442
      %v447 = vmul.f32 %v419, %v444
      %v448 = vpack.c.bf16 %v446, %v445
      %v449 = vpack.c.bf16 %v447, %v447
      %v450 = vld [vmem:[%s5] sm:$0xf]
      %v451 = vld [vmem:[%s5 + $0x4] sm:$0xf]
      %v452 = vld [vmem:[%s5 + $0x8] sm:$0xf]
      %v453 = vld [vmem:[%s5 + $0xc] sm:$0xf]
      %v454 = vld [vmem:[%s5 + $0x10] sm:$0xf]
      %v455 = vld [vmem:[%s5 + $0x14] sm:$0xf]
      %v456 = vld [vmem:[%s5 + $0x18] sm:$0xf]
      %v457 = vld [vmem:[%s5 + $0x1c] sm:$0xf]
      %v458 = vld [vmem:[%s5 + $0x20] sm:$0xf]
      %v459 = vld [vmem:[%s5 + $0x24] sm:$0xf]
      %v460 = vld [vmem:[%s5 + $0x28] sm:$0xf]
      %v461 = vld [vmem:[%s5 + $0x2c] sm:$0xf]
      %v462 = vld [vmem:[%s5 + $0x30] sm:$0xf]
      %v463 = vld [vmem:[%s5 + $0x34] sm:$0xf]
      %v464 = vld [vmem:[%s5 + $0x38] sm:$0xf]
      %v465 = vld [vmem:[%s5 + $0x3c] sm:$0xf]
      %v466 = vld [vmem:[%s6] sm:$0x1]
      %v468 = vlaneseq
      %v469 = vshrl.u32 %v468, 7
      %v470 = vsub.s32 0, %v469
      %v471 = vrot.slane %v466, %v470
      %v489 = vunpack.c.l.b16 %v450
      %v490 = vunpack.c.l.b16 %v451
      %v491 = vunpack.c.l.b16 %v452
      %v492 = vunpack.c.l.b16 %v453
      %v493 = vunpack.c.l.b16 %v454
      %v494 = vunpack.c.l.b16 %v455
      %v495 = vunpack.c.l.b16 %v456
      %v496 = vunpack.c.l.b16 %v457
      %v497 = vunpack.c.l.b16 %v458
      %v498 = vunpack.c.l.b16 %v459
      %v499 = vunpack.c.l.b16 %v460
      %v500 = vunpack.c.l.b16 %v461
      %v501 = vunpack.c.l.b16 %v462
      %v502 = vunpack.c.l.b16 %v463
      %v503 = vunpack.c.l.b16 %v464
      %v504 = vunpack.c.l.b16 %v465
      %v505 = vpack.c.b16 %v490, %v489
      %v506 = vpack.c.b16 %v492, %v491
      %v507 = vpack.c.b16 %v494, %v493
      %v508 = vpack.c.b16 %v496, %v495
      %v509 = vpack.c.b16 %v498, %v497
      %v510 = vpack.c.b16 %v500, %v499
      %v511 = vpack.c.b16 %v502, %v501
      %v512 = vpack.c.b16 %v504, %v503
      %521 = vmatprep.subr.bf16.mxu0 0
      %522 = vmatpush1.bf16.msra.mxu0 %v512
      %523 = vmatprep.subr.bf16.mxu0 0
      %524 = vmatpush1.bf16.msra.mxu0 %v511
      %525 = vmatprep.subr.bf16.mxu0 0
      %526 = vmatpush1.bf16.msra.mxu0 %v510
      %527 = vmatprep.subr.bf16.mxu0 0
      %528 = vmatpush1.bf16.msra.mxu0 %v509
      %529 = vmatprep.subr.bf16.mxu0 0
      %530 = vmatpush1.bf16.msra.mxu0 %v508
      %531 = vmatprep.subr.bf16.mxu0 0
      %532 = vmatpush1.bf16.msra.mxu0 %v507
      %533 = vmatprep.subr.bf16.mxu0 0
      %534 = vmatpush1.bf16.msra.mxu0 %v506
      %535 = vmatprep.subr.bf16.mxu0 0
      %536 = vmatpush1.bf16.msra.mxu0 %v505
      %537 = vmatprep.subr.bf16.mxu0 0
      %538 = vmatpush2.bf16.msra.mxu0 0
      %539 = vmatprep.subr.bf16.mxu0 0
      %540 = vmatpush2.bf16.msra.mxu0 0
      %541 = vmatprep.subr.bf16.mxu0 0
      %542 = vmatpush2.bf16.msra.mxu0 0
      %543 = vmatprep.subr.bf16.mxu0 0
      %544 = vmatpush2.bf16.msra.mxu0 0
      %545 = vmatprep.subr.bf16.mxu0 0
      %546 = vmatpush2.bf16.msra.mxu0 0
      %547 = vmatprep.subr.bf16.mxu0 0
      %548 = vmatpush2.bf16.msra.mxu0 0
      %549 = vmatprep.subr.bf16.mxu0 0
      %550 = vmatpush2.bf16.msra.mxu0 0
      %551 = vmatprep.subr.bf16.mxu0 0
      %552 = vmatpush2.bf16.msra.mxu0 0
      %553 = vmatprep.mubr.bf16.mxu0 0
      %554 = vmatmul.mubr.bf16.gmra.mxu0 %v448
      %v555 = vpop.f32.mrf.mxu0
      %v556 = vadd.f32 %v471, %v555
      %v557 = vpop.f32.mrf.mxu0
      %v558 = vpop.f32.mrf.mxu0
      %v559 = vadd.f32 %v471, %v558
      %v560 = vpop.f32.mrf.mxu0
      %561 = vmatprep.mubr.bf16.mxu0 0
      %562 = vmatmul.mubr.bf16.gmra.mxu0 %v449
      %v563 = vpop.f32.mrf.mxu0
      %v564 = vadd.f32 %v471, %v563
      %v565 = vpop.f32.mrf.mxu0
      %v566 = vpop.f32.mrf.mxu0
      %v567 = vpop.f32.mrf.mxu0
      %568 = vdwg.mxu0
      %v569 = vadd.f32 %v280, %v556
      %v570 = vadd.f32 %v281, %v559
      %v571 = vadd.f32 %v282, %v564
      %572 = vst.msk [vmem:[%s278] sm:$0xff] %vm285, %v569
      %573 = vst.msk [vmem:[%s278 + $0x8] sm:$0xff] %vm285, %v570
      %574 = vst.msk [vmem:[%s278 + $0x10] sm:$0x1] %vm292, %v571
      %p575 = scmp.lt.s32.totalorder %s18, 1
      %s576 = scalar_select %p575, %s18, 1
      %s577 = smul.addr %s576, 3
      %s578 = smul.addr %s577, 8
      %s579 = scalar_lea.vmem %s7, %s578
      // Predicated region
      $region49: #{maskclip_featurizer.10} parent=47 // pred_check
        %p580 = pneg %p188
      $region50: #{maskclip_featurizer.10} parent=47 // pred_check_branch
        %582 = sbr.rel (%p580) target = $region52
      $region51: #{maskclip_featurizer.10} parent=47 // pred_region
        _
      $region52: #{maskclip_featurizer.10} parent=47 // pred_fallthru
        _
    $region48: #{maskclip_featurizer.10} parent=5 // pred_fallthru
      _
    %p583 = scmp.le.s32.totalorder 2, %s13
    // Predicated region
    $region53: #{maskclip_featurizer.10} parent=5 // pred_check
      %p584 = pneg %p583
    $region54: #{maskclip_featurizer.10} parent=5 // pred_check_branch
      %586 = sbr.rel (%p584) target = $region56
    $region55: #{maskclip_featurizer.10} parent=5 // pred_region
      %s587 = ssub.s32 %s13, 2
      // Predicated region
      $region57: #{maskclip_featurizer.10} parent=55 // pred_check
        %p588 = pneg %p194
      $region58: #{maskclip_featurizer.10} parent=55 // pred_check_branch
        %590 = sbr.rel (%p588) target = $region60
      $region59: #{maskclip_featurizer.10} parent=55 // pred_region
        %p591 = scmp.lt.s32.totalorder %s19, 1
        %s592 = scalar_select %p591, %s19, 1
        %s593 = smul.addr %s592, 3
        %s594 = smul.addr %s593, 8
        %s595 = scalar_lea.vmem %s7, %s594
      $region60: #{maskclip_featurizer.10} parent=55 // pred_fallthru
        _
    $region56: #{maskclip_featurizer.10} parent=5 // pred_fallthru
      _
  $region6: #{maskclip_featurizer.10} parent=0 // loop_footer
    %s17 = sadd.s32 1, %s13
  $region7: #{maskclip_featurizer.10} parent=0 // loop_footer_branch
    %12 = sbr.rel target = $region3
  $region8: #{maskclip_featurizer.10} parent=0 // loop_exit
    _

// kernel: maskclip_featurizer.11
$region0: #{maskclip_featurizer.11}
  #allocation0 [shape = 'u32[]', space=smem, size = 0x4, offset = 0x4, fixed_abs, tag = 'smem constant byte address 0x4 - core index']
  #allocation1 [shape = 'u32[144,128]{1,0:T(1,128)}', space=vmem, size = 0x12000, scoped, tag = 'internal scratch']
  %s0 = inlined_call_operand.vmem [shape: f32[2,17,32], index: 0, kind: input, shape index: {}]
  %s1 = inlined_call_operand.vmem [shape: f32[1,32], index: 1, kind: input, shape index: {}]
  %s2 = inlined_call_operand.vmem [shape: f32[1,32], index: 2, kind: input, shape index: {}]
  %s3 = inlined_call_operand.vmem [shape: bf16[4,32,8], index: 3, kind: input, shape index: {}]
  %s4 = inlined_call_operand.vmem [shape: bf16[4,32,8], index: 4, kind: input, shape index: {}]
  %s5 = inlined_call_operand.vmem [shape: bf16[4,32,8], index: 5, kind: input, shape index: {}]
  %s6 = inlined_call_operand.vmem [shape: f32[4,1,8], index: 6, kind: input, shape index: {}]
  %s7 = inlined_call_operand.vmem [shape: f32[4,1,8], index: 7, kind: input, shape index: {}]
  %s8 = inlined_call_operand.vmem [shape: f32[4,1,8], index: 8, kind: input, shape index: {}]
  %s9 = inlined_call_operand.vmem [shape: bf16[4,8,32], index: 9, kind: input, shape index: {}]
  %s10 = inlined_call_operand.vmem [shape: f32[1,32], index: 10, kind: input, shape index: {}]
  %s11 = inlined_call_operand.vmem [shape: f32[2,17,32], index: 11, kind: output, shape index: {}]
  %s12 = sld [smem:[#allocation0]]
  $region77: #{maskclip_featurizer.11} parent=0
    _
  %s14 = ssub.s32 1, %s12
  %s15 = scalar_select 0, %s14, %s12
  loop: start=0, step=1, limit=4
  $region2: #{maskclip_featurizer.11} parent=0 // loop_pre_header
    _
  $region3: #{maskclip_featurizer.11} parent=0 // loop_header
    %s17 = sphi 0, %s21
    %p18 = scmp.ge.s32.totalorder %s17, 4
    %s27 = sphi 0, %s29
    %s30 = sphi 0, %s27
    %s31 = sphi 0, %s30
    %s47 = sphi 0, %s31
    %s51 = sphi 0, %s51
    %s53 = sphi 0, %s51
    %s54 = sphi 0, %s53
    %s68 = sphi 0, %s54
    %s72 = sphi 0, %s72
    %s74 = sphi 0, %s72
    %s75 = sphi 0, %s74
    %s89 = sphi 0, %s75
    %s93 = sphi 0, %s93
    %s95 = sphi 0, %s93
    %s96 = sphi 0, %s95
    %s110 = sphi 0, %s96
    %s114 = sphi 0, %s114
    %s116 = sphi 0, %s114
    %s117 = sphi 0, %s116
    %s131 = sphi 0, %s117
    %s135 = sphi 0, %s135
    %s137 = sphi 0, %s135
    %s138 = sphi 0, %s137
    %s152 = sphi 0, %s138
    %s156 = sphi 0, %s156
    %s158 = sphi 0, %s156
    %s159 = sphi 0, %s158
    %s173 = sphi 0, %s159
    %s177 = sphi 0, %s177
    %s179 = sphi 0, %s177
    %s180 = sphi 0, %s179
    %s194 = sphi 0, %s180
    %s198 = sphi 0, %s198
    %s200 = sphi 0, %s198
    %s201 = sphi 0, %s200
    %s215 = sphi 0, %s201
    %s219 = sphi 0, %s219
    %s221 = sphi 0, %s219
    %s222 = sphi 0, %s221
    %s236 = sphi 0, %s222
    %s240 = sphi 0, %s240
    %s242 = sphi 0, %s240
    %s243 = sphi 0, %s242
    %s257 = sphi 0, %s243
    %s263 = sphi 0, %s265
    %s266 = sphi 0, %s263
    %s267 = sphi 0, %s266
    %s283 = sphi 0, %s267
  $region4: #{maskclip_featurizer.11} parent=0 // loop_header_branch
    %20 = sbr.rel (%p18) target = $region8
  $region5: #{maskclip_featurizer.11} parent=0 // loop_body
    %s22 = ssub.s32 %s17, 1
    %s23 = ssub.s32 %s17, 2
    %s24 = sadd.s32 %s17, 1
    %s25 = ssub.s32 %s17, %s24
    %p26 = scmp.eq.s32.totalorder %s25, 0
    %s28 = sadd.s32 %s27, 1
    %s29 = scalar_select %p26, %s27, %s28
    %p32 = pneg %p26
    %p33 = scmp.eq.s32.totalorder %s17, 1
    %p34 = por %p32, %p33
    %p35 = scmp.ne.s32.totalorder %s27, %s30
    %p36 = scmp.eq.s32.totalorder %s17, 0
    %p37 = por %p35, %p36
    %p38 = scmp.ne.s32.totalorder %s27, %s30
    %p39 = scmp.eq.s32.totalorder %s22, 1
    %p40 = por %p38, %p39
    %p41 = scmp.ne.s32.totalorder %s30, %s31
    %p42 = scmp.eq.s32.totalorder %s22, 0
    %p43 = por %p41, %p42
    %p44 = scmp.ne.s32.totalorder %s30, %s31
    %p45 = scmp.eq.s32.totalorder %s23, 1
    %p46 = por %p44, %p45
    %p48 = scmp.ne.s32.totalorder %s31, %s47
    %p49 = scmp.eq.s32.totalorder %s23, 0
    %p50 = por %p48, %p49
    %s52 = sadd.s32 %s51, 1
    %p55 = scmp.eq.s32.totalorder %s17, 1
    %p56 = scmp.ne.s32.totalorder %s51, %s53
    %p57 = scmp.eq.s32.totalorder %s17, 0
    %p58 = por %p56, %p57
    %p59 = scmp.ne.s32.totalorder %s51, %s53
    %p60 = scmp.eq.s32.totalorder %s22, 1
    %p61 = por %p59, %p60
    %p62 = scmp.ne.s32.totalorder %s53, %s54
    %p63 = scmp.eq.s32.totalorder %s22, 0
    %p64 = por %p62, %p63
    %p65 = scmp.ne.s32.totalorder %s53, %s54
    %p66 = scmp.eq.s32.totalorder %s23, 1
    %p67 = por %p65, %p66
    %p69 = scmp.ne.s32.totalorder %s54, %s68
    %p70 = scmp.eq.s32.totalorder %s23, 0
    %p71 = por %p69, %p70
    %s73 = sadd.s32 %s72, 1
    %p76 = scmp.eq.s32.totalorder %s17, 1
    %p77 = scmp.ne.s32.totalorder %s72, %s74
    %p78 = scmp.eq.s32.totalorder %s17, 0
    %p79 = por %p77, %p78
    %p80 = scmp.ne.s32.totalorder %s72, %s74
    %p81 = scmp.eq.s32.totalorder %s22, 1
    %p82 = por %p80, %p81
    %p83 = scmp.ne.s32.totalorder %s74, %s75
    %p84 = scmp.eq.s32.totalorder %s22, 0
    %p85 = por %p83, %p84
    %p86 = scmp.ne.s32.totalorder %s74, %s75
    %p87 = scmp.eq.s32.totalorder %s23, 1
    %p88 = por %p86, %p87
    %p90 = scmp.ne.s32.totalorder %s75, %s89
    %p91 = scmp.eq.s32.totalorder %s23, 0
    %p92 = por %p90, %p91
    %s94 = sadd.s32 %s93, 1
    %p97 = scmp.eq.s32.totalorder %s17, 1
    %p98 = scmp.ne.s32.totalorder %s93, %s95
    %p99 = scmp.eq.s32.totalorder %s17, 0
    %p100 = por %p98, %p99
    %p101 = scmp.ne.s32.totalorder %s93, %s95
    %p102 = scmp.eq.s32.totalorder %s22, 1
    %p103 = por %p101, %p102
    %p104 = scmp.ne.s32.totalorder %s95, %s96
    %p105 = scmp.eq.s32.totalorder %s22, 0
    %p106 = por %p104, %p105
    %p107 = scmp.ne.s32.totalorder %s95, %s96
    %p108 = scmp.eq.s32.totalorder %s23, 1
    %p109 = por %p107, %p108
    %p111 = scmp.ne.s32.totalorder %s96, %s110
    %p112 = scmp.eq.s32.totalorder %s23, 0
    %p113 = por %p111, %p112
    %s115 = sadd.s32 %s114, 1
    %p118 = scmp.eq.s32.totalorder %s17, 1
    %p119 = scmp.ne.s32.totalorder %s114, %s116
    %p120 = scmp.eq.s32.totalorder %s17, 0
    %p121 = por %p119, %p120
    %p122 = scmp.ne.s32.totalorder %s114, %s116
    %p123 = scmp.eq.s32.totalorder %s22, 1
    %p124 = por %p122, %p123
    %p125 = scmp.ne.s32.totalorder %s116, %s117
    %p126 = scmp.eq.s32.totalorder %s22, 0
    %p127 = por %p125, %p126
    %p128 = scmp.ne.s32.totalorder %s116, %s117
    %p129 = scmp.eq.s32.totalorder %s23, 1
    %p130 = por %p128, %p129
    %p132 = scmp.ne.s32.totalorder %s117, %s131
    %p133 = scmp.eq.s32.totalorder %s23, 0
    %p134 = por %p132, %p133
    %s136 = sadd.s32 %s135, 1
    %p139 = scmp.eq.s32.totalorder %s17, 1
    %p140 = scmp.ne.s32.totalorder %s135, %s137
    %p141 = scmp.eq.s32.totalorder %s17, 0
    %p142 = por %p140, %p141
    %p143 = scmp.ne.s32.totalorder %s135, %s137
    %p144 = scmp.eq.s32.totalorder %s22, 1
    %p145 = por %p143, %p144
    %p146 = scmp.ne.s32.totalorder %s137, %s138
    %p147 = scmp.eq.s32.totalorder %s22, 0
    %p148 = por %p146, %p147
    %p149 = scmp.ne.s32.totalorder %s137, %s138
    %p150 = scmp.eq.s32.totalorder %s23, 1
    %p151 = por %p149, %p150
    %p153 = scmp.ne.s32.totalorder %s138, %s152
    %p154 = scmp.eq.s32.totalorder %s23, 0
    %p155 = por %p153, %p154
    %s157 = sadd.s32 %s156, 1
    %p160 = scmp.eq.s32.totalorder %s17, 1
    %p161 = scmp.ne.s32.totalorder %s156, %s158
    %p162 = scmp.eq.s32.totalorder %s17, 0
    %p163 = por %p161, %p162
    %p164 = scmp.ne.s32.totalorder %s156, %s158
    %p165 = scmp.eq.s32.totalorder %s22, 1
    %p166 = por %p164, %p165
    %p167 = scmp.ne.s32.totalorder %s158, %s159
    %p168 = scmp.eq.s32.totalorder %s22, 0
    %p169 = por %p167, %p168
    %p170 = scmp.ne.s32.totalorder %s158, %s159
    %p171 = scmp.eq.s32.totalorder %s23, 1
    %p172 = por %p170, %p171
    %p174 = scmp.ne.s32.totalorder %s159, %s173
    %p175 = scmp.eq.s32.totalorder %s23, 0
    %p176 = por %p174, %p175
    %s178 = sadd.s32 %s177, 1
    %p181 = scmp.eq.s32.totalorder %s17, 1
    %p182 = scmp.ne.s32.totalorder %s177, %s179
    %p183 = scmp.eq.s32.totalorder %s17, 0
    %p184 = por %p182, %p183
    %p185 = scmp.ne.s32.totalorder %s177, %s179
    %p186 = scmp.eq.s32.totalorder %s22, 1
    %p187 = por %p185, %p186
    %p188 = scmp.ne.s32.totalorder %s179, %s180
    %p189 = scmp.eq.s32.totalorder %s22, 0
    %p190 = por %p188, %p189
    %p191 = scmp.ne.s32.totalorder %s179, %s180
    %p192 = scmp.eq.s32.totalorder %s23, 1
    %p193 = por %p191, %p192
    %p195 = scmp.ne.s32.totalorder %s180, %s194
    %p196 = scmp.eq.s32.totalorder %s23, 0
    %p197 = por %p195, %p196
    %s199 = sadd.s32 %s198, 1
    %p202 = scmp.eq.s32.totalorder %s17, 1
    %p203 = scmp.ne.s32.totalorder %s198, %s200
    %p204 = scmp.eq.s32.totalorder %s17, 0
    %p205 = por %p203, %p204
    %p206 = scmp.ne.s32.totalorder %s198, %s200
    %p207 = scmp.eq.s32.totalorder %s22, 1
    %p208 = por %p206, %p207
    %p209 = scmp.ne.s32.totalorder %s200, %s201
    %p210 = scmp.eq.s32.totalorder %s22, 0
    %p211 = por %p209, %p210
    %p212 = scmp.ne.s32.totalorder %s200, %s201
    %p213 = scmp.eq.s32.totalorder %s23, 1
    %p214 = por %p212, %p213
    %p216 = scmp.ne.s32.totalorder %s201, %s215
    %p217 = scmp.eq.s32.totalorder %s23, 0
    %p218 = por %p216, %p217
    %s220 = sadd.s32 %s219, 1
    %p223 = scmp.eq.s32.totalorder %s17, 1
    %p224 = scmp.ne.s32.totalorder %s219, %s221
    %p225 = scmp.eq.s32.totalorder %s17, 0
    %p226 = por %p224, %p225
    %p227 = scmp.ne.s32.totalorder %s219, %s221
    %p228 = scmp.eq.s32.totalorder %s22, 1
    %p229 = por %p227, %p228
    %p230 = scmp.ne.s32.totalorder %s221, %s222
    %p231 = scmp.eq.s32.totalorder %s22, 0
    %p232 = por %p230, %p231
    %p233 = scmp.ne.s32.totalorder %s221, %s222
    %p234 = scmp.eq.s32.totalorder %s23, 1
    %p235 = por %p233, %p234
    %p237 = scmp.ne.s32.totalorder %s222, %s236
    %p238 = scmp.eq.s32.totalorder %s23, 0
    %p239 = por %p237, %p238
    %s241 = sadd.s32 %s240, 1
    %p244 = scmp.eq.s32.totalorder %s17, 1
    %p245 = scmp.ne.s32.totalorder %s240, %s242
    %p246 = scmp.eq.s32.totalorder %s17, 0
    %p247 = por %p245, %p246
    %p248 = scmp.ne.s32.totalorder %s240, %s242
    %p249 = scmp.eq.s32.totalorder %s22, 1
    %p250 = por %p248, %p249
    %p251 = scmp.ne.s32.totalorder %s242, %s243
    %p252 = scmp.eq.s32.totalorder %s22, 0
    %p253 = por %p251, %p252
    %p254 = scmp.ne.s32.totalorder %s242, %s243
    %p255 = scmp.eq.s32.totalorder %s23, 1
    %p256 = por %p254, %p255
    %p258 = scmp.ne.s32.totalorder %s243, %s257
    %p259 = scmp.eq.s32.totalorder %s23, 0
    %p260 = por %p258, %p259
    %s261 = ssub.s32 %s17, %s24
    %p262 = scmp.eq.s32.totalorder %s261, 0
    %s264 = sadd.s32 %s263, 1
    %s265 = scalar_select %p262, %s263, %s264
    %p268 = pneg %p262
    %p269 = scmp.eq.s32.totalorder %s17, 1
    %p270 = por %p268, %p269
    %p271 = scmp.ne.s32.totalorder %s263, %s266
    %p272 = scmp.eq.s32.totalorder %s17, 0
    %p273 = por %p271, %p272
    %p274 = scmp.ne.s32.totalorder %s263, %s266
    %p275 = scmp.eq.s32.totalorder %s22, 1
    %p276 = por %p274, %p275
    %p277 = scmp.ne.s32.totalorder %s266, %s267
    %p278 = scmp.eq.s32.totalorder %s22, 0
    %p279 = por %p277, %p278
    %p280 = scmp.ne.s32.totalorder %s266, %s267
    %p281 = scmp.eq.s32.totalorder %s23, 1
    %p282 = por %p280, %p281
    %p284 = scmp.ne.s32.totalorder %s267, %s283
    %p285 = scmp.eq.s32.totalorder %s23, 0
    %p286 = por %p284, %p285
    %p287 = scmp.le.s32.totalorder 1, %s17
    %p288 = scmp.lt.s32.totalorder %s17, 3
    %p289 = pnand %p287, %p288
    %p290 = pneg %p289
    // Predicated region
    $region9: #{maskclip_featurizer.11} parent=5 // pred_check
      _
    $region10: #{maskclip_featurizer.11} parent=5 // pred_check_branch
      %292 = sbr.rel (%p289) target = $region12
    $region11: #{maskclip_featurizer.11} parent=5 // pred_region
      %s293 = ssub.s32 %s17, 1
      // Predicated region
      $region13: #{maskclip_featurizer.11} parent=11 // pred_check
        %p294 = pneg %p64
      $region14: #{maskclip_featurizer.11} parent=11 // pred_check_branch
        %296 = sbr.rel (%p294) target = $region16
      $region15: #{maskclip_featurizer.11} parent=11 // pred_region
        _
      $region16: #{maskclip_featurizer.11} parent=11 // pred_fallthru
        _
      // Predicated region
      $region17: #{maskclip_featurizer.11} parent=11 // pred_check
        %p297 = pneg %p85
      $region18: #{maskclip_featurizer.11} parent=11 // pred_check_branch
        %299 = sbr.rel (%p297) target = $region20
      $region19: #{maskclip_featurizer.11} parent=11 // pred_region
        _
      $region20: #{maskclip_featurizer.11} parent=11 // pred_fallthru
        _
      // Predicated region
      $region21: #{maskclip_featurizer.11} parent=11 // pred_check
        %p300 = pneg %p106
      $region22: #{maskclip_featurizer.11} parent=11 // pred_check_branch
        %302 = sbr.rel (%p300) target = $region24
      $region23: #{maskclip_featurizer.11} parent=11 // pred_region
        _
      $region24: #{maskclip_featurizer.11} parent=11 // pred_fallthru
        _
      // Predicated region
      $region25: #{maskclip_featurizer.11} parent=11 // pred_check
        %p303 = pneg %p127
      $region26: #{maskclip_featurizer.11} parent=11 // pred_check_branch
        %305 = sbr.rel (%p303) target = $region28
      $region27: #{maskclip_featurizer.11} parent=11 // pred_region
        _
      $region28: #{maskclip_featurizer.11} parent=11 // pred_fallthru
        _
      // Predicated region
      $region29: #{maskclip_featurizer.11} parent=11 // pred_check
        %p306 = pneg %p148
      $region30: #{maskclip_featurizer.11} parent=11 // pred_check_branch
        %308 = sbr.rel (%p306) target = $region32
      $region31: #{maskclip_featurizer.11} parent=11 // pred_region
        _
      $region32: #{maskclip_featurizer.11} parent=11 // pred_fallthru
        _
      // Predicated region
      $region33: #{maskclip_featurizer.11} parent=11 // pred_check
        %p309 = pneg %p169
      $region34: #{maskclip_featurizer.11} parent=11 // pred_check_branch
        %311 = sbr.rel (%p309) target = $region36
      $region35: #{maskclip_featurizer.11} parent=11 // pred_region
        _
      $region36: #{maskclip_featurizer.11} parent=11 // pred_fallthru
        _
      // Predicated region
      $region37: #{maskclip_featurizer.11} parent=11 // pred_check
        %p312 = pneg %p190
      $region38: #{maskclip_featurizer.11} parent=11 // pred_check_branch
        %314 = sbr.rel (%p312) target = $region40
      $region39: #{maskclip_featurizer.11} parent=11 // pred_region
        _
      $region40: #{maskclip_featurizer.11} parent=11 // pred_fallthru
        _
      // Predicated region
      $region41: #{maskclip_featurizer.11} parent=11 // pred_check
        %p315 = pneg %p211
      $region42: #{maskclip_featurizer.11} parent=11 // pred_check_branch
        %317 = sbr.rel (%p315) target = $region44
      $region43: #{maskclip_featurizer.11} parent=11 // pred_region
        _
      $region44: #{maskclip_featurizer.11} parent=11 // pred_fallthru
        _
      // Predicated region
      $region45: #{maskclip_featurizer.11} parent=11 // pred_check
        %p318 = pneg %p232
      $region46: #{maskclip_featurizer.11} parent=11 // pred_check_branch
        %320 = sbr.rel (%p318) target = $region48
      $region47: #{maskclip_featurizer.11} parent=11 // pred_region
        _
      $region48: #{maskclip_featurizer.11} parent=11 // pred_fallthru
        _
      // Predicated region
      $region49: #{maskclip_featurizer.11} parent=11 // pred_check
        %p321 = pneg %p253
      $region50: #{maskclip_featurizer.11} parent=11 // pred_check_branch
        %323 = sbr.rel (%p321) target = $region52
      $region51: #{maskclip_featurizer.11} parent=11 // pred_region
        _
      $region52: #{maskclip_featurizer.11} parent=11 // pred_fallthru
        _
    $region12: #{maskclip_featurizer.11} parent=5 // pred_fallthru
      _
    %p324 = scmp.lt.s32.totalorder %s17, 2
    // Predicated region
    $region53: #{maskclip_featurizer.11} parent=5 // pred_check
      %p325 = pneg %p324
    $region54: #{maskclip_featurizer.11} parent=5 // pred_check_branch
      %327 = sbr.rel (%p325) target = $region56
    $region55: #{maskclip_featurizer.11} parent=5 // pred_region
      // Predicated region
      $region57: #{maskclip_featurizer.11} parent=55 // pred_check
        %p328 = pneg %p37
      $region58: #{maskclip_featurizer.11} parent=55 // pred_check_branch
        %330 = sbr.rel (%p328) target = $region60
      $region59: #{maskclip_featurizer.11} parent=55 // pred_region
        %p331 = scmp.lt.s32.totalorder %s17, 1
        %s332 = scalar_select %p331, %s17, 1
        %s333 = smul.addr %s332, 3
        %s334 = smul.addr %s333, 8
        %s335 = scalar_lea.vmem %s0, %s334
      $region60: #{maskclip_featurizer.11} parent=55 // pred_fallthru
        _
    $region56: #{maskclip_featurizer.11} parent=5 // pred_fallthru
      _
    %p336 = scmp.le.s32.totalorder 1, %s17
    %p337 = scmp.lt.s32.totalorder %s17, 3
    %p338 = pnand %p336, %p337
    %p339 = pneg %p338
    // Predicated region
    $region61: #{maskclip_featurizer.11} parent=5 // pred_check
      _
    $region62: #{maskclip_featurizer.11} parent=5 // pred_check_branch
      %341 = sbr.rel (%p338) target = $region64
    $region63: #{maskclip_featurizer.11} parent=5 // pred_region
      %s342 = ssub.s32 %s17, 1
      %p343 = scmp.lt.s32.totalorder %s22, 1
      %s344 = scalar_select %p343, %s22, 1
      %s345 = smul.addr %s344, 3
      %s346 = smul.addr %s345, 8
      %s347 = scalar_lea.vmem %s0, %s346
      %p348 = pneg %p43
      %p349 = pneg %p40
      %p350 = pneg %p64
      %p351 = pneg %p61
      %p352 = pneg %p85
      %p353 = pneg %p82
      %p354 = pneg %p106
      %p355 = pneg %p103
      %p356 = pneg %p127
      %p357 = pneg %p124
      %p358 = pneg %p148
      %p359 = pneg %p145
      %p360 = pneg %p169
      %p361 = pneg %p166
      %p362 = pneg %p190
      %p363 = pneg %p187
      %p364 = pneg %p211
      %p365 = pneg %p208
      %p366 = pneg %p232
      %p367 = pneg %p229
      %p368 = pneg %p253
      %p369 = pneg %p250
      %p370 = pneg %p279
      %p371 = pneg %p276
      %p372 = scmp.lt.s32.totalorder %s22, 1
      %s373 = scalar_select %p372, %s22, 1
      %s374 = smul.addr %s373, 3
      %s375 = smul.addr %s374, 8
      %s376 = scalar_lea.vmem %s11, %s375
      %p377 = scmp.lt.s32.totalorder %s22, 1
      %s378 = scalar_select %p377, %s22, 1
      %s379 = smul.addr %s378, 3
      %s380 = smul.addr %s379, 8
      %s381 = scalar_lea.vmem %s0, %s380
      %p382 = scmp.lt.s32.totalorder %s22, 1
      %s383 = scalar_select %p382, %s22, 1
      %s384 = smul.addr %s383, 3
      %s385 = smul.addr %s384, 8
      %s386 = scalar_lea.vmem %s11, %s385
      %v388 = vld [vmem:[%s381] sm:$0xff]
      %v389 = vld [vmem:[%s381 + $0x8] sm:$0xff]
      %v390 = vld [vmem:[%s381 + $0x10] sm:$0x1]
      %v391 = vld [vmem:[%s1] sm:$0x1]
      %v392 = vld [vmem:[%s2] sm:$0x1]
      %vm393 = vcmask 261120
      %v394 = vsel %vm393, %v388, 0.0
      %395 = vadd.xlane.f32.xlu0 %v394
      %v396 = vpop.xlane.xlu0 %395
      %v397 = vsel %vm393, %v389, 0.0
      %398 = vadd.xlane.f32.xlu0 %v397
      %v399 = vpop.xlane.xlu0 %398
      %vm400 = vcmask 253952
      %v401 = vsel %vm400, %v390, 0.0
      %402 = vadd.xlane.f32.xlu0 %v401
      %v403 = vpop.xlane.xlu0 %402
      %v404 = vrcp.pop 32.0
      %v405 = vmul.f32 %v396, %v404
      %v406 = vmul.f32 %v399, %v404
      %v407 = vmul.f32 %v403, %v404
      %v408 = vsub.f32 %v388, %v405
      %v409 = vsub.f32 %v389, %v406
      %v410 = vsub.f32 %v390, %v407
      %v411 = vmul.f32 %v408, %v408
      %v412 = vmul.f32 %v409, %v409
      %v413 = vmul.f32 %v410, %v410
      %v414 = vsel %vm393, %v411, 0.0
      %415 = vadd.xlane.f32.xlu0 %v414
      %v416 = vpop.xlane.xlu0 %415
      %v417 = vsel %vm393, %v412, 0.0
      %418 = vadd.xlane.f32.xlu0 %v417
      %v419 = vpop.xlane.xlu0 %418
      %v420 = vsel %vm400, %v413, 0.0
      %421 = vadd.xlane.f32.xlu0 %v420
      %v422 = vpop.xlane.xlu0 %421
      %v423 = vmul.f32 %v416, %v404
      %v424 = vmul.f32 %v419, %v404
      %v425 = vmul.f32 %v422, %v404
      %v426 = vadd.f32 %v423, 1e-05
      %v427 = vadd.f32 %v424, 1e-05
      %v428 = vadd.f32 %v425, 1e-05
      %v429 = vrsqrt.pop %v426
      %v430 = vrsqrt.pop %v427
      %v431 = vrsqrt.pop %v428
      %v432 = vmul.f32 %v408, %v429
      %v433 = vmul.f32 %v409, %v430
      %v434 = vmul.f32 %v410, %v431
      %v436 = vlaneseq
      %v437 = vshrl.u32 %v436, 7
      %v438 = vsub.s32 0, %v437
      %v439 = vrot.slane %v391, %v438
      %v441 = vmul.f32 %v432, %v439
      %v442 = vmul.f32 %v433, %v439
      %v443 = vmul.f32 %v434, %v439
      %v445 = vlaneseq
      %v446 = vshrl.u32 %v445, 7
      %v447 = vsub.s32 0, %v446
      %v448 = vrot.slane %v392, %v447
      %v450 = vadd.f32 %v441, %v448
      %v451 = vadd.f32 %v442, %v448
      %v452 = vadd.f32 %v443, %v448
      %v453 = vpack.c.bf16 %v451, %v450
      %v454 = vpack.c.bf16 %v452, %v452
      %v455 = vld [vmem:[%s5] sm:$0xf]
      %v456 = vld [vmem:[%s5 + $0x4] sm:$0xf]
      %v457 = vld [vmem:[%s5 + $0x8] sm:$0xf]
      %v458 = vld [vmem:[%s5 + $0xc] sm:$0xf]
      %v459 = vld [vmem:[%s8] sm:$0x1]
      %v461 = vlaneseq
      %v462 = vshrl.u32 %v461, 7
      %v463 = vsub.s32 0, %v462
      %v464 = vrot.slane %v459, %v463
      %v470 = vunpack.c.l.b16 %v455
      %v471 = vunpack.c.l.b16 %v456
      %v472 = vunpack.c.l.b16 %v457
      %v473 = vunpack.c.l.b16 %v458
      %v474 = vpack.c.b16 %v471, %v470
      %v475 = vpack.c.b16 %v473, %v472
      %v479 = vsel %vm393, %v453, 0
      %v482 = vsel %vm393, %v454, 0
      %484 = vmatprep.subr.bf16.mxu0 0
      %485 = vmatpush1.bf16.msra.mxu0 0
      %486 = vmatprep.subr.bf16.mxu0 0
      %487 = vmatpush1.bf16.msra.mxu0 0
      %488 = vmatprep.subr.bf16.mxu0 0
      %489 = vmatpush1.bf16.msra.mxu0 0
      %490 = vmatprep.subr.bf16.mxu0 0
      %491 = vmatpush1.bf16.msra.mxu0 0
      %492 = vmatprep.subr.bf16.mxu0 0
      %493 = vmatpush1.bf16.msra.mxu0 0
      %494 = vmatprep.subr.bf16.mxu0 0
      %495 = vmatpush1.bf16.msra.mxu0 0
      %496 = vmatprep.subr.bf16.mxu0 0
      %497 = vmatpush1.bf16.msra.mxu0 %v475
      %498 = vmatprep.subr.bf16.mxu0 0
      %499 = vmatpush1.bf16.msra.mxu0 %v474
      %500 = vmatprep.subr.bf16.mxu0 0
      %501 = vmatpush2.bf16.msra.mxu0 0
      %502 = vmatprep.subr.bf16.mxu0 0
      %503 = vmatpush2.bf16.msra.mxu0 0
      %504 = vmatprep.subr.bf16.mxu0 0
      %505 = vmatpush2.bf16.msra.mxu0 0
      %506 = vmatprep.subr.bf16.mxu0 0
      %507 = vmatpush2.bf16.msra.mxu0 0
      %508 = vmatprep.subr.bf16.mxu0 0
      %509 = vmatpush2.bf16.msra.mxu0 0
      %510 = vmatprep.subr.bf16.mxu0 0
      %511 = vmatpush2.bf16.msra.mxu0 0
      %512 = vmatprep.subr.bf16.mxu0 0
      %513 = vmatpush2.bf16.msra.mxu0 0
      %514 = vmatprep.subr.bf16.mxu0 0
      %515 = vmatpush2.bf16.msra.mxu0 0
      %516 = vmatprep.mubr.bf16.mxu0 0
      %517 = vmatmul.mubr.bf16.gmra.mxu0 %v479
      %v518 = vpop.f32.mrf.mxu0
      %v519 = vadd.f32 %v464, %v518
      %v520 = vpop.f32.mrf.mxu0
      %v521 = vpop.f32.mrf.mxu0
      %v522 = vadd.f32 %v464, %v521
      %v523 = vpop.f32.mrf.mxu0
      %524 = vmatprep.mubr.bf16.mxu0 0
      %525 = vmatmul.mubr.bf16.gmra.mxu0 %v482
      %v526 = vpop.f32.mrf.mxu0
      %v527 = vadd.f32 %v464, %v526
      %v528 = vpop.f32.mrf.mxu0
      %v529 = vpop.f32.mrf.mxu0
      %v530 = vpop.f32.mrf.mxu0
      %531 = vdwg.mxu0
      %v532 = vpack.c.bf16 %v522, %v519
      %v533 = vpack.c.bf16 %v527, %v527
      %v534 = vld [vmem:[%s9] sm:$0xf]
      %s535 = scalar_lea.vmem %s5, 16
      %v536 = vld [vmem:[%s535] sm:$0xf]
      %v537 = vld [vmem:[%s535 + $0x4] sm:$0xf]
      %v538 = vld [vmem:[%s535 + $0x8] sm:$0xf]
      %v539 = vld [vmem:[%s535 + $0xc] sm:$0xf]
      %s540 = scalar_lea.vmem %s8, 1
      %v541 = vld [vmem:[%s540] sm:$0x1]
      %v543 = vlaneseq
      %v544 = vshrl.u32 %v543, 7
      %v545 = vsub.s32 0, %v544
      %v546 = vrot.slane %v541, %v545
      %v552 = vunpack.c.l.b16 %v536
      %v553 = vunpack.c.l.b16 %v537
      %v554 = vunpack.c.l.b16 %v538
      %v555 = vunpack.c.l.b16 %v539
      %v556 = vpack.c.b16 %v553, %v552
      %v557 = vpack.c.b16 %v555, %v554
      %560 = vmatprep.subr.bf16.mxu0 0
      %561 = vmatpush1.bf16.msra.mxu0 0
      %562 = vmatprep.subr.bf16.mxu0 0
      %563 = vmatpush1.bf16.msra.mxu0 0
      %564 = vmatprep.subr.bf16.mxu0 0
      %565 = vmatpush1.bf16.msra.mxu0 0
      %566 = vmatprep.subr.bf16.mxu0 0
      %567 = vmatpush1.bf16.msra.mxu0 0
      %568 = vmatprep.subr.bf16.mxu0 0
      %569 = vmatpush1.bf16.msra.mxu0 0
      %570 = vmatprep.subr.bf16.mxu0 0
      %571 = vmatpush1.bf16.msra.mxu0 0
      %572 = vmatprep.subr.bf16.mxu0 0
      %573 = vmatpush1.bf16.msra.mxu0 %v557
      %574 = vmatprep.subr.bf16.mxu0 0
      %575 = vmatpush1.bf16.msra.mxu0 %v556
      %576 = vmatprep.subr.bf16.mxu0 0
      %577 = vmatpush2.bf16.msra.mxu0 0
      %578 = vmatprep.subr.bf16.mxu0 0
      %579 = vmatpush2.bf16.msra.mxu0 0
      %580 = vmatprep.subr.bf16.mxu0 0
      %581 = vmatpush2.bf16.msra.mxu0 0
      %582 = vmatprep.subr.bf16.mxu0 0
      %583 = vmatpush2.bf16.msra.mxu0 0
      %584 = vmatprep.subr.bf16.mxu0 0
      %585 = vmatpush2.bf16.msra.mxu0 0
      %586 = vmatprep.subr.bf16.mxu0 0
      %587 = vmatpush2.bf16.msra.mxu0 0
      %588 = vmatprep.subr.bf16.mxu0 0
      %589 = vmatpush2.bf16.msra.mxu0 0
      %590 = vmatprep.subr.bf16.mxu0 0
      %591 = vmatpush2.bf16.msra.mxu0 0
      %592 = vmatprep.mubr.bf16.mxu0 0
      %593 = vmatmul.mubr.bf16.gmra.mxu0 %v479
      %v594 = vpop.f32.mrf.mxu0
      %v595 = vadd.f32 %v546, %v594
      %v596 = vpop.f32.mrf.mxu0
      %v597 = vpop.f32.mrf.mxu0
      %v598 = vadd.f32 %v546, %v597
      %v599 = vpop.f32.mrf.mxu0
      %600 = vmatprep.mubr.bf16.mxu0 0
      %601 = vmatmul.mubr.bf16.gmra.mxu0 %v482
      %v602 = vpop.f32.mrf.mxu0
      %v603 = vadd.f32 %v546, %v602
      %v604 = vpop.f32.mrf.mxu0
      %v605 = vpop.f32.mrf.mxu0
      %v606 = vpop.f32.mrf.mxu0
      %607 = vdwg.mxu0
      %v608 = vpack.c.bf16 %v598, %v595
      %v609 = vpack.c.bf16 %v603, %v603
      %s610 = scalar_lea.vmem %s9, 4
      %v611 = vld [vmem:[%s610] sm:$0xf]
      %vm612 = vcmask 64512
      %v614 = vsel %vm612, %v608, 0
      %v617 = vsel %vm612, %v609, 0
      %vm619 = vcmask 1043456
      %v621 = vsel %vm619, %v611, 0
      %623 = vmatprep.subr.bf16.mxu0 0
      %624 = vmatpush1.bf16.msra.mxu0 0
      %625 = vmatprep.subr.bf16.mxu0 0
      %626 = vmatpush1.bf16.msra.mxu0 0
      %627 = vmatprep.subr.bf16.mxu0 0
      %628 = vmatpush1.bf16.msra.mxu0 0
      %629 = vmatprep.subr.bf16.mxu0 0
      %630 = vmatpush1.bf16.msra.mxu0 0
      %631 = vmatprep.subr.bf16.mxu0 0
      %632 = vmatpush1.bf16.msra.mxu0 0
      %633 = vmatprep.subr.bf16.mxu0 0
      %634 = vmatpush1.bf16.msra.mxu0 0
      %635 = vmatprep.subr.bf16.mxu0 0
      %636 = vmatpush1.bf16.msra.mxu0 0
      %637 = vmatprep.subr.bf16.mxu0 0
      %638 = vmatpush1.bf16.msra.mxu0 %v621
      %639 = vmatprep.subr.bf16.mxu0 0
      %640 = vmatpush2.bf16.msra.mxu0 0
      %641 = vmatprep.subr.bf16.mxu0 0
      %642 = vmatpush2.bf16.msra.mxu0 0
      %643 = vmatprep.subr.bf16.mxu0 0
      %644 = vmatpush2.bf16.msra.mxu0 0
      %645 = vmatprep.subr.bf16.mxu0 0
      %646 = vmatpush2.bf16.msra.mxu0 0
      %647 = vmatprep.subr.bf16.mxu0 0
      %648 = vmatpush2.bf16.msra.mxu0 0
      %649 = vmatprep.subr.bf16.mxu0 0
      %650 = vmatpush2.bf16.msra.mxu0 0
      %651 = vmatprep.subr.bf16.mxu0 0
      %652 = vmatpush2.bf16.msra.mxu0 0
      %653 = vmatprep.subr.bf16.mxu0 0
      %654 = vmatpush2.bf16.msra.mxu0 0
      %655 = vmatprep.mubr.bf16.mxu0 0
      %656 = vmatmul.mubr.bf16.gmra.mxu0 %v614
      %v657 = vpop.f32.mrf.mxu0
      %v658 = vadd.f32 0.0, %v657
      %v659 = vpop.f32.mrf.mxu0
      %v660 = vpop.f32.mrf.mxu0
      %v661 = vadd.f32 0.0, %v660
      %v662 = vpop.f32.mrf.mxu0
      %663 = vmatprep.mubr.bf16.mxu0 0
      %664 = vmatmul.mubr.bf16.gmra.mxu0 %v617
      %v665 = vpop.f32.mrf.mxu0
      %v666 = vadd.f32 0.0, %v665
      %v667 = vpop.f32.mrf.mxu0
      %v668 = vpop.f32.mrf.mxu0
      %v669 = vpop.f32.mrf.mxu0
      %670 = vdwg.mxu0
      %v672 = vsel %vm612, %v532, 0
      %v675 = vsel %vm612, %v533, 0
      %v678 = vsel %vm619, %v534, 0
      %680 = vmatprep.subr.bf16.mxu0 0
      %681 = vmatpush1.bf16.msra.mxu0 0
      %682 = vmatprep.subr.bf16.mxu0 0
      %683 = vmatpush1.bf16.msra.mxu0 0
      %684 = vmatprep.subr.bf16.mxu0 0
      %685 = vmatpush1.bf16.msra.mxu0 0
      %686 = vmatprep.subr.bf16.mxu0 0
      %687 = vmatpush1.bf16.msra.mxu0 0
      %688 = vmatprep.subr.bf16.mxu0 0
      %689 = vmatpush1.bf16.msra.mxu0 0
      %690 = vmatprep.subr.bf16.mxu0 0
      %691 = vmatpush1.bf16.msra.mxu0 0
      %692 = vmatprep.subr.bf16.mxu0 0
      %693 = vmatpush1.bf16.msra.mxu0 0
      %694 = vmatprep.subr.bf16.mxu0 0
      %695 = vmatpush1.bf16.msra.mxu0 %v678
      %696 = vmatprep.subr.bf16.mxu0 0
      %697 = vmatpush2.bf16.msra.mxu0 0
      %698 = vmatprep.subr.bf16.mxu0 0
      %699 = vmatpush2.bf16.msra.mxu0 0
      %700 = vmatprep.subr.bf16.mxu0 0
      %701 = vmatpush2.bf16.msra.mxu0 0
      %702 = vmatprep.subr.bf16.mxu0 0
      %703 = vmatpush2.bf16.msra.mxu0 0
      %704 = vmatprep.subr.bf16.mxu0 0
      %705 = vmatpush2.bf16.msra.mxu0 0
      %706 = vmatprep.subr.bf16.mxu0 0
      %707 = vmatpush2.bf16.msra.mxu0 0
      %708 = vmatprep.subr.bf16.mxu0 0
      %709 = vmatpush2.bf16.msra.mxu0 0
      %710 = vmatprep.subr.bf16.mxu0 0
      %711 = vmatpush2.bf16.msra.mxu0 0
      %712 = vmatprep.mubr.bf16.mxu0 0
      %713 = vmatmul.mubr.bf16.gmra.mxu0 %v672
      %v714 = vpop.f32.mrf.mxu0
      %v715 = vadd.f32 %v658, %v714
      %v716 = vpop.f32.mrf.mxu0
      %v717 = vpop.f32.mrf.mxu0
      %v718 = vadd.f32 %v661, %v717
      %v719 = vpop.f32.mrf.mxu0
      %720 = vmatprep.mubr.bf16.mxu0 0
      %721 = vmatmul.mubr.bf16.gmra.mxu0 %v675
      %v722 = vpop.f32.mrf.mxu0
      %v723 = vadd.f32 %v666, %v722
      %v724 = vpop.f32.mrf.mxu0
      %v725 = vpop.f32.mrf.mxu0
      %v726 = vpop.f32.mrf.mxu0
      %727 = vdwg.mxu0
      %s728 = scalar_lea.vmem %s5, 32
      %v729 = vld [vmem:[%s728] sm:$0xf]
      %v730 = vld [vmem:[%s728 + $0x4] sm:$0xf]
      %v731 = vld [vmem:[%s728 + $0x8] sm:$0xf]
      %v732 = vld [vmem:[%s728 + $0xc] sm:$0xf]
      %s733 = scalar_lea.vmem %s8, 2
      %v734 = vld [vmem:[%s733] sm:$0x1]
      %v736 = vlaneseq
      %v737 = vshrl.u32 %v736, 7
      %v738 = vsub.s32 0, %v737
      %v739 = vrot.slane %v734, %v738
      %v745 = vunpack.c.l.b16 %v729
      %v746 = vunpack.c.l.b16 %v730
      %v747 = vunpack.c.l.b16 %v731
      %v748 = vunpack.c.l.b16 %v732
      %v749 = vpack.c.b16 %v746, %v745
      %v750 = vpack.c.b16 %v748, %v747
      %753 = vmatprep.subr.bf16.mxu0 0
      %754 = vmatpush1.bf16.msra.mxu0 0
      %755 = vmatprep.subr.bf16.mxu0 0
      %756 = vmatpush1.bf16.msra.mxu0 0
      %757 = vmatprep.subr.bf16.mxu0 0
      %758 = vmatpush1.bf16.msra.mxu0 0
      %759 = vmatprep.subr.bf16.mxu0 0
      %760 = vmatpush1.bf16.msra.mxu0 0
      %761 = vmatprep.subr.bf16.mxu0 0
      %762 = vmatpush1.bf16.msra.mxu0 0
      %763 = vmatprep.subr.bf16.mxu0 0
      %764 = vmatpush1.bf16.msra.mxu0 0
      %765 = vmatprep.subr.bf16.mxu0 0
      %766 = vmatpush1.bf16.msra.mxu0 %v750
      %767 = vmatprep.subr.bf16.mxu0 0
      %768 = vmatpush1.bf16.msra.mxu0 %v749
      %769 = vmatprep.subr.bf16.mxu0 0
      %770 = vmatpush2.bf16.msra.mxu0 0
      %771 = vmatprep.subr.bf16.mxu0 0
      %772 = vmatpush2.bf16.msra.mxu0 0
      %773 = vmatprep.subr.bf16.mxu0 0
      %774 = vmatpush2.bf16.msra.mxu0 0
      %775 = vmatprep.subr.bf16.mxu0 0
      %776 = vmatpush2.bf16.msra.mxu0 0
      %777 = vmatprep.subr.bf16.mxu0 0
      %778 = vmatpush2.bf16.msra.mxu0 0
      %779 = vmatprep.subr.bf16.mxu0 0
      %780 = vmatpush2.bf16.msra.mxu0 0
      %781 = vmatprep.subr.bf16.mxu0 0
      %782 = vmatpush2.bf16.msra.mxu0 0
      %783 = vmatprep.subr.bf16.mxu0 0
      %784 = vmatpush2.bf16.msra.mxu0 0
      %785 = vmatprep.mubr.bf16.mxu0 0
      %786 = vmatmul.mubr.bf16.gmra.mxu0 %v479
      %v787 = vpop.f32.mrf.mxu0
      %v788 = vadd.f32 %v739, %v787
      %v789 = vpop.f32.mrf.mxu0
      %v790 = vpop.f32.mrf.mxu0
      %v791 = vadd.f32 %v739, %v790
      %v792 = vpop.f32.mrf.mxu0
      %793 = vmatprep.mubr.bf16.mxu0 0
      %794 = vmatmul.mubr.bf16.gmra.mxu0 %v482
      %v795 = vpop.f32.mrf.mxu0
      %v796 = vadd.f32 %v739, %v795
      %v797 = vpop.f32.mrf.mxu0
      %v798 = vpop.f32.mrf.mxu0
      %v799 = vpop.f32.mrf.mxu0
      %800 = vdwg.mxu0
      %v801 = vpack.c.bf16 %v791, %v788
      %v802 = vpack.c.bf16 %v796, %v796
      %s803 = scalar_lea.vmem %s9, 8
      %v804 = vld [vmem:[%s803] sm:$0xf]
      %v806 = vsel %vm612, %v801, 0
      %v809 = vsel %vm612, %v802, 0
      %v812 = vsel %vm619, %v804, 0
      %814 = vmatprep.subr.bf16.mxu0 0
      %815 = vmatpush1.bf16.msra.mxu0 0
      %816 = vmatprep.subr.bf16.mxu0 0
      %817 = vmatpush1.bf16.msra.mxu0 0
      %818 = vmatprep.subr.bf16.mxu0 0
      %819 = vmatpush1.bf16.msra.mxu0 0
      %820 = vmatprep.subr.bf16.mxu0 0
      %821 = vmatpush1.bf16.msra.mxu0 0
      %822 = vmatprep.subr.bf16.mxu0 0
      %823 = vmatpush1.bf16.msra.mxu0 0
      %824 = vmatprep.subr.bf16.mxu0 0
      %825 = vmatpush1.bf16.msra.mxu0 0
      %826 = vmatprep.subr.bf16.mxu0 0
      %827 = vmatpush1.bf16.msra.mxu0 0
      %828 = vmatprep.subr.bf16.mxu0 0
      %829 = vmatpush1.bf16.msra.mxu0 %v812
      %830 = vmatprep.subr.bf16.mxu0 0
      %831 = vmatpush2.bf16.msra.mxu0 0
      %832 = vmatprep.subr.bf16.mxu0 0
      %833 = vmatpush2.bf16.msra.mxu0 0
      %834 = vmatprep.subr.bf16.mxu0 0
      %835 = vmatpush2.bf16.msra.mxu0 0
      %836 = vmatprep.subr.bf16.mxu0 0
      %837 = vmatpush2.bf16.msra.mxu0 0
      %838 = vmatprep.subr.bf16.mxu0 0
      %839 = vmatpush2.bf16.msra.mxu0 0
      %840 = vmatprep.subr.bf16.mxu0 0
      %841 = vmatpush2.bf16.msra.mxu0 0
      %842 = vmatprep.subr.bf16.mxu0 0
      %843 = vmatpush2.bf16.msra.mxu0 0
      %844 = vmatprep.subr.bf16.mxu0 0
      %845 = vmatpush2.bf16.msra.mxu0 0
      %846 = vmatprep.mubr.bf16.mxu0 0
      %847 = vmatmul.mubr.bf16.gmra.mxu0 %v806
      %v848 = vpop.f32.mrf.mxu0
      %v849 = vadd.f32 0.0, %v848
      %v850 = vpop.f32.mrf.mxu0
      %v851 = vpop.f32.mrf.mxu0
      %v852 = vadd.f32 0.0, %v851
      %v853 = vpop.f32.mrf.mxu0
      %854 = vmatprep.mubr.bf16.mxu0 0
      %855 = vmatmul.mubr.bf16.gmra.mxu0 %v809
      %v856 = vpop.f32.mrf.mxu0
      %v857 = vadd.f32 0.0, %v856
      %v858 = vpop.f32.mrf.mxu0
      %v859 = vpop.f32.mrf.mxu0
      %v860 = vpop.f32.mrf.mxu0
      %861 = vdwg.mxu0
      %v862 = vadd.f32 %v715, %v849
      %v863 = vadd.f32 %v718, %v852
      %v864 = vadd.f32 %v723, %v857
      %s865 = scalar_lea.vmem %s5, 48
      %v866 = vld [vmem:[%s865] sm:$0xf]
      %v867 = vld [vmem:[%s865 + $0x4] sm:$0xf]
      %v868 = vld [vmem:[%s865 + $0x8] sm:$0xf]
      %v869 = vld [vmem:[%s865 + $0xc] sm:$0xf]
      %s870 = scalar_lea.vmem %s8, 3
      %v871 = vld [vmem:[%s870] sm:$0x1]
      %v873 = vlaneseq
      %v874 = vshrl.u32 %v873, 7
      %v875 = vsub.s32 0, %v874
      %v876 = vrot.slane %v871, %v875
      %v882 = vunpack.c.l.b16 %v866
      %v883 = vunpack.c.l.b16 %v867
      %v884 = vunpack.c.l.b16 %v868
      %v885 = vunpack.c.l.b16 %v869
      %v886 = vpack.c.b16 %v883, %v882
      %v887 = vpack.c.b16 %v885, %v884
      %890 = vmatprep.subr.bf16.mxu0 0
      %891 = vmatpush1.bf16.msra.mxu0 0
      %892 = vmatprep.subr.bf16.mxu0 0
      %893 = vmatpush1.bf16.msra.mxu0 0
      %894 = vmatprep.subr.bf16.mxu0 0
      %895 = vmatpush1.bf16.msra.mxu0 0
      %896 = vmatprep.subr.bf16.mxu0 0
      %897 = vmatpush1.bf16.msra.mxu0 0
      %898 = vmatprep.subr.bf16.mxu0 0
      %899 = vmatpush1.bf16.msra.mxu0 0
      %900 = vmatprep.subr.bf16.mxu0 0
      %901 = vmatpush1.bf16.msra.mxu0 0
      %902 = vmatprep.subr.bf16.mxu0 0
      %903 = vmatpush1.bf16.msra.mxu0 %v887
      %904 = vmatprep.subr.bf16.mxu0 0
      %905 = vmatpush1.bf16.msra.mxu0 %v886
      %906 = vmatprep.subr.bf16.mxu0 0
      %907 = vmatpush2.bf16.msra.mxu0 0
      %908 = vmatprep.subr.bf16.mxu0 0
      %909 = vmatpush2.bf16.msra.mxu0 0
      %910 = vmatprep.subr.bf16.mxu0 0
      %911 = vmatpush2.bf16.msra.mxu0 0
      %912 = vmatprep.subr.bf16.mxu0 0
      %913 = vmatpush2.bf16.msra.mxu0 0
      %914 = vmatprep.subr.bf16.mxu0 0
      %915 = vmatpush2.bf16.msra.mxu0 0
      %916 = vmatprep.subr.bf16.mxu0 0
      %917 = vmatpush2.bf16.msra.mxu0 0
      %918 = vmatprep.subr.bf16.mxu0 0
      %919 = vmatpush2.bf16.msra.mxu0 0
      %920 = vmatprep.subr.bf16.mxu0 0
      %921 = vmatpush2.bf16.msra.mxu0 0
      %922 = vmatprep.mubr.bf16.mxu0 0
      %923 = vmatmul.mubr.bf16.gmra.mxu0 %v479
      %v924 = vpop.f32.mrf.mxu0
      %v925 = vadd.f32 %v876, %v924
      %v926 = vpop.f32.mrf.mxu0
      %v927 = vpop.f32.mrf.mxu0
      %v928 = vadd.f32 %v876, %v927
      %v929 = vpop.f32.mrf.mxu0
      %930 = vmatprep.mubr.bf16.mxu0 0
      %931 = vmatmul.mubr.bf16.gmra.mxu0 %v482
      %v932 = vpop.f32.mrf.mxu0
      %v933 = vadd.f32 %v876, %v932
      %v934 = vpop.f32.mrf.mxu0
      %v935 = vpop.f32.mrf.mxu0
      %v936 = vpop.f32.mrf.mxu0
      %937 = vdwg.mxu0
      %v938 = vpack.c.bf16 %v928, %v925
      %v939 = vpack.c.bf16 %v933, %v933
      %s940 = scalar_lea.vmem %s9, 12
      %v941 = vld [vmem:[%s940] sm:$0xf]
      %v943 = vsel %vm612, %v938, 0
      %v946 = vsel %vm612, %v939, 0
      %v949 = vsel %vm619, %v941, 0
      %951 = vmatprep.subr.bf16.mxu0 0
      %952 = vmatpush1.bf16.msra.mxu0 0
      %953 = vmatprep.subr.bf16.mxu0 0
      %954 = vmatpush1.bf16.msra.mxu0 0
      %955 = vmatprep.subr.bf16.mxu0 0
      %956 = vmatpush1.bf16.msra.mxu0 0
      %957 = vmatprep.subr.bf16.mxu0 0
      %958 = vmatpush1.bf16.msra.mxu0 0
      %959 = vmatprep.subr.bf16.mxu0 0
      %960 = vmatpush1.bf16.msra.mxu0 0
      %961 = vmatprep.subr.bf16.mxu0 0
      %962 = vmatpush1.bf16.msra.mxu0 0
      %963 = vmatprep.subr.bf16.mxu0 0
      %964 = vmatpush1.bf16.msra.mxu0 0
      %965 = vmatprep.subr.bf16.mxu0 0
      %966 = vmatpush1.bf16.msra.mxu0 %v949
      %967 = vmatprep.subr.bf16.mxu0 0
      %968 = vmatpush2.bf16.msra.mxu0 0
      %969 = vmatprep.subr.bf16.mxu0 0
      %970 = vmatpush2.bf16.msra.mxu0 0
      %971 = vmatprep.subr.bf16.mxu0 0
      %972 = vmatpush2.bf16.msra.mxu0 0
      %973 = vmatprep.subr.bf16.mxu0 0
      %974 = vmatpush2.bf16.msra.mxu0 0
      %975 = vmatprep.subr.bf16.mxu0 0
      %976 = vmatpush2.bf16.msra.mxu0 0
      %977 = vmatprep.subr.bf16.mxu0 0
      %978 = vmatpush2.bf16.msra.mxu0 0
      %979 = vmatprep.subr.bf16.mxu0 0
      %980 = vmatpush2.bf16.msra.mxu0 0
      %981 = vmatprep.subr.bf16.mxu0 0
      %982 = vmatpush2.bf16.msra.mxu0 0
      %983 = vmatprep.mubr.bf16.mxu0 0
      %984 = vmatmul.mubr.bf16.gmra.mxu0 %v943
      %v985 = vpop.f32.mrf.mxu0
      %v986 = vadd.f32 0.0, %v985
      %v987 = vpop.f32.mrf.mxu0
      %v988 = vpop.f32.mrf.mxu0
      %v989 = vadd.f32 0.0, %v988
      %v990 = vpop.f32.mrf.mxu0
      %991 = vmatprep.mubr.bf16.mxu0 0
      %992 = vmatmul.mubr.bf16.gmra.mxu0 %v946
      %v993 = vpop.f32.mrf.mxu0
      %v994 = vadd.f32 0.0, %v993
      %v995 = vpop.f32.mrf.mxu0
      %v996 = vpop.f32.mrf.mxu0
      %v997 = vpop.f32.mrf.mxu0
      %998 = vdwg.mxu0
      %v999 = vadd.f32 %v862, %v986
      %v1000 = vadd.f32 %v863, %v989
      %v1001 = vadd.f32 %v864, %v994
      %v1002 = vld [vmem:[%s10] sm:$0x1]
      %v1004 = vlaneseq
      %v1005 = vshrl.u32 %v1004, 7
      %v1006 = vsub.s32 0, %v1005
      %v1007 = vrot.slane %v1002, %v1006
      %v1009 = vadd.f32 %v999, %v1007
      %v1010 = vadd.f32 %v1000, %v1007
      %v1011 = vadd.f32 %v1001, %v1007
      %v1012 = vadd.f32 %v388, %v1009
      %v1013 = vadd.f32 %v389, %v1010
      %v1014 = vadd.f32 %v390, %v1011
      %1015 = vst.msk [vmem:[%s386] sm:$0xff] %vm393, %v1012
      %1016 = vst.msk [vmem:[%s386 + $0x8] sm:$0xff] %vm393, %v1013
      %1017 = vst.msk [vmem:[%s386 + $0x10] sm:$0x1] %vm400, %v1014
      %p1018 = scmp.lt.s32.totalorder %s22, 1
      %s1019 = scalar_select %p1018, %s22, 1
      %s1020 = smul.addr %s1019, 3
      %s1021 = smul.addr %s1020, 8
      %s1022 = scalar_lea.vmem %s11, %s1021
      // Predicated region
      $region65: #{maskclip_featurizer.11} parent=63 // pred_check
        %p1023 = pneg %p276
      $region66: #{maskclip_featurizer.11} parent=63 // pred_check_branch
        %1025 = sbr.rel (%p1023) target = $region68
      $region67: #{maskclip_featurizer.11} parent=63 // pred_region
        _
      $region68: #{maskclip_featurizer.11} parent=63 // pred_fallthru
        _
    $region64: #{maskclip_featurizer.11} parent=5 // pred_fallthru
      _
    %p1026 = scmp.le.s32.totalorder 2, %s17
    // Predicated region
    $region69: #{maskclip_featurizer.11} parent=5 // pred_check
      %p1027 = pneg %p1026
    $region70: #{maskclip_featurizer.11} parent=5 // pred_check_branch
      %1029 = sbr.rel (%p1027) target = $region72
    $region71: #{maskclip_featurizer.11} parent=5 // pred_region
      %s1030 = ssub.s32 %s17, 2
      // Predicated region
      $region73: #{maskclip_featurizer.11} parent=71 // pred_check
        %p1031 = pneg %p282
      $region74: #{maskclip_featurizer.11} parent=71 // pred_check_branch
        %1033 = sbr.rel (%p1031) target = $region76
      $region75: #{maskclip_featurizer.11} parent=71 // pred_region
        %p1034 = scmp.lt.s32.totalorder %s23, 1
        %s1035 = scalar_select %p1034, %s23, 1
        %s1036 = smul.addr %s1035, 3
        %s1037 = smul.addr %s1036, 8
        %s1038 = scalar_lea.vmem %s11, %s1037
      $region76: #{maskclip_featurizer.11} parent=71 // pred_fallthru
        _
    $region72: #{maskclip_featurizer.11} parent=5 // pred_fallthru
      _
  $region6: #{maskclip_featurizer.11} parent=0 // loop_footer
    %s21 = sadd.s32 1, %s17
  $region7: #{maskclip_featurizer.11} parent=0 // loop_footer_branch
    %16 = sbr.rel target = $region3
  $region8: #{maskclip_featurizer.11} parent=0 // loop_exit
    _

// kernel: maskclip_featurizer.9
$region0: #{maskclip_featurizer.9}
  #allocation0 [shape = 'u32[]', space=smem, size = 0x4, offset = 0x4, fixed_abs, tag = 'smem constant byte address 0x4 - core index']
  #allocation1 [shape = 'u32[144,128]{1,0:T(1,128)}', space=vmem, size = 0x12000, scoped, tag = 'internal scratch']
  %s0 = inlined_call_operand.vmem [shape: f32[2,17,32], index: 0, kind: input, shape index: {}]
  %s1 = inlined_call_operand.vmem [shape: f32[1,32], index: 1, kind: input, shape index: {}]
  %s2 = inlined_call_operand.vmem [shape: f32[1,32], index: 2, kind: input, shape index: {}]
  %s3 = inlined_call_operand.vmem [shape: bf16[4,32,8], index: 3, kind: input, shape index: {}]
  %s4 = inlined_call_operand.vmem [shape: bf16[4,32,8], index: 4, kind: input, shape index: {}]
  %s5 = inlined_call_operand.vmem [shape: bf16[4,32,8], index: 5, kind: input, shape index: {}]
  %s6 = inlined_call_operand.vmem [shape: f32[4,1,8], index: 6, kind: input, shape index: {}]
  %s7 = inlined_call_operand.vmem [shape: f32[4,1,8], index: 7, kind: input, shape index: {}]
  %s8 = inlined_call_operand.vmem [shape: f32[4,1,8], index: 8, kind: input, shape index: {}]
  %s9 = inlined_call_operand.vmem [shape: bf16[4,8,32], index: 9, kind: input, shape index: {}]
  %s10 = inlined_call_operand.vmem [shape: f32[1,32], index: 10, kind: input, shape index: {}]
  %s11 = inlined_call_operand.vmem [shape: f32[2,17,32], index: 11, kind: output, shape index: {}]
  %s12 = sld [smem:[#allocation0]]
  $region77: #{maskclip_featurizer.9} parent=0
    _
  %s14 = ssub.s32 1, %s12
  %s15 = scalar_select 0, %s14, %s12
  loop: start=0, step=1, limit=4
  $region2: #{maskclip_featurizer.9} parent=0 // loop_pre_header
    _
  $region3: #{maskclip_featurizer.9} parent=0 // loop_header
    %s17 = sphi 0, %s21
    %p18 = scmp.ge.s32.totalorder %s17, 4
    %s27 = sphi 0, %s29
    %s30 = sphi 0, %s27
    %s31 = sphi 0, %s30
    %s47 = sphi 0, %s31
    %s51 = sphi 0, %s51
    %s53 = sphi 0, %s51
    %s54 = sphi 0, %s53
    %s68 = sphi 0, %s54
    %s72 = sphi 0, %s72
    %s74 = sphi 0, %s72
    %s75 = sphi 0, %s74
    %s89 = sphi 0, %s75
    %s93 = sphi 0, %s93
    %s95 = sphi 0, %s93
    %s96 = sphi 0, %s95
    %s110 = sphi 0, %s96
    %s114 = sphi 0, %s114
    %s116 = sphi 0, %s114
    %s117 = sphi 0, %s116
    %s131 = sphi 0, %s117
    %s135 = sphi 0, %s135
    %s137 = sphi 0, %s135
    %s138 = sphi 0, %s137
    %s152 = sphi 0, %s138
    %s156 = sphi 0, %s156
    %s158 = sphi 0, %s156
    %s159 = sphi 0, %s158
    %s173 = sphi 0, %s159
    %s177 = sphi 0, %s177
    %s179 = sphi 0, %s177
    %s180 = sphi 0, %s179
    %s194 = sphi 0, %s180
    %s198 = sphi 0, %s198
    %s200 = sphi 0, %s198
    %s201 = sphi 0, %s200
    %s215 = sphi 0, %s201
    %s219 = sphi 0, %s219
    %s221 = sphi 0, %s219
    %s222 = sphi 0, %s221
    %s236 = sphi 0, %s222
    %s240 = sphi 0, %s240
    %s242 = sphi 0, %s240
    %s243 = sphi 0, %s242
    %s257 = sphi 0, %s243
    %s263 = sphi 0, %s265
    %s266 = sphi 0, %s263
    %s267 = sphi 0, %s266
    %s283 = sphi 0, %s267
  $region4: #{maskclip_featurizer.9} parent=0 // loop_header_branch
    %20 = sbr.rel (%p18) target = $region8
  $region5: #{maskclip_featurizer.9} parent=0 // loop_body
    %s22 = ssub.s32 %s17, 1
    %s23 = ssub.s32 %s17, 2
    %s24 = sadd.s32 %s17, 1
    %s25 = ssub.s32 %s17, %s24
    %p26 = scmp.eq.s32.totalorder %s25, 0
    %s28 = sadd.s32 %s27, 1
    %s29 = scalar_select %p26, %s27, %s28
    %p32 = pneg %p26
    %p33 = scmp.eq.s32.totalorder %s17, 1
    %p34 = por %p32, %p33
    %p35 = scmp.ne.s32.totalorder %s27, %s30
    %p36 = scmp.eq.s32.totalorder %s17, 0
    %p37 = por %p35, %p36
    %p38 = scmp.ne.s32.totalorder %s27, %s30
    %p39 = scmp.eq.s32.totalorder %s22, 1
    %p40 = por %p38, %p39
    %p41 = scmp.ne.s32.totalorder %s30, %s31
    %p42 = scmp.eq.s32.totalorder %s22, 0
    %p43 = por %p41, %p42
    %p44 = scmp.ne.s32.totalorder %s30, %s31
    %p45 = scmp.eq.s32.totalorder %s23, 1
    %p46 = por %p44, %p45
    %p48 = scmp.ne.s32.totalorder %s31, %s47
    %p49 = scmp.eq.s32.totalorder %s23, 0
    %p50 = por %p48, %p49
    %s52 = sadd.s32 %s51, 1
    %p55 = scmp.eq.s32.totalorder %s17, 1
    %p56 = scmp.ne.s32.totalorder %s51, %s53
    %p57 = scmp.eq.s32.totalorder %s17, 0
    %p58 = por %p56, %p57
    %p59 = scmp.ne.s32.totalorder %s51, %s53
    %p60 = scmp.eq.s32.totalorder %s22, 1
    %p61 = por %p59, %p60
    %p62 = scmp.ne.s32.totalorder %s53, %s54
    %p63 = scmp.eq.s32.totalorder %s22, 0
    %p64 = por %p62, %p63
    %p65 = scmp.ne.s32.totalorder %s53, %s54
    %p66 = scmp.eq.s32.totalorder %s23, 1
    %p67 = por %p65, %p66
    %p69 = scmp.ne.s32.totalorder %s54, %s68
    %p70 = scmp.eq.s32.totalorder %s23, 0
    %p71 = por %p69, %p70
    %s73 = sadd.s32 %s72, 1
    %p76 = scmp.eq.s32.totalorder %s17, 1
    %p77 = scmp.ne.s32.totalorder %s72, %s74
    %p78 = scmp.eq.s32.totalorder %s17, 0
    %p79 = por %p77, %p78
    %p80 = scmp.ne.s32.totalorder %s72, %s74
    %p81 = scmp.eq.s32.totalorder %s22, 1
    %p82 = por %p80, %p81
    %p83 = scmp.ne.s32.totalorder %s74, %s75
    %p84 = scmp.eq.s32.totalorder %s22, 0
    %p85 = por %p83, %p84
    %p86 = scmp.ne.s32.totalorder %s74, %s75
    %p87 = scmp.eq.s32.totalorder %s23, 1
    %p88 = por %p86, %p87
    %p90 = scmp.ne.s32.totalorder %s75, %s89
    %p91 = scmp.eq.s32.totalorder %s23, 0
    %p92 = por %p90, %p91
    %s94 = sadd.s32 %s93, 1
    %p97 = scmp.eq.s32.totalorder %s17, 1
    %p98 = scmp.ne.s32.totalorder %s93, %s95
    %p99 = scmp.eq.s32.totalorder %s17, 0
    %p100 = por %p98, %p99
    %p101 = scmp.ne.s32.totalorder %s93, %s95
    %p102 = scmp.eq.s32.totalorder %s22, 1
    %p103 = por %p101, %p102
    %p104 = scmp.ne.s32.totalorder %s95, %s96
    %p105 = scmp.eq.s32.totalorder %s22, 0
    %p106 = por %p104, %p105
    %p107 = scmp.ne.s32.totalorder %s95, %s96
    %p108 = scmp.eq.s32.totalorder %s23, 1
    %p109 = por %p107, %p108
    %p111 = scmp.ne.s32.totalorder %s96, %s110
    %p112 = scmp.eq.s32.totalorder %s23, 0
    %p113 = por %p111, %p112
    %s115 = sadd.s32 %s114, 1
    %p118 = scmp.eq.s32.totalorder %s17, 1
    %p119 = scmp.ne.s32.totalorder %s114, %s116
    %p120 = scmp.eq.s32.totalorder %s17, 0
    %p121 = por %p119, %p120
    %p122 = scmp.ne.s32.totalorder %s114, %s116
    %p123 = scmp.eq.s32.totalorder %s22, 1
    %p124 = por %p122, %p123
    %p125 = scmp.ne.s32.totalorder %s116, %s117
    %p126 = scmp.eq.s32.totalorder %s22, 0
    %p127 = por %p125, %p126
    %p128 = scmp.ne.s32.totalorder %s116, %s117
    %p129 = scmp.eq.s32.totalorder %s23, 1
    %p130 = por %p128, %p129
    %p132 = scmp.ne.s32.totalorder %s117, %s131
    %p133 = scmp.eq.s32.totalorder %s23, 0
    %p134 = por %p132, %p133
    %s136 = sadd.s32 %s135, 1
    %p139 = scmp.eq.s32.totalorder %s17, 1
    %p140 = scmp.ne.s32.totalorder %s135, %s137
    %p141 = scmp.eq.s32.totalorder %s17, 0
    %p142 = por %p140, %p141
    %p143 = scmp.ne.s32.totalorder %s135, %s137
    %p144 = scmp.eq.s32.totalorder %s22, 1
    %p145 = por %p143, %p144
    %p146 = scmp.ne.s32.totalorder %s137, %s138
    %p147 = scmp.eq.s32.totalorder %s22, 0
    %p148 = por %p146, %p147
    %p149 = scmp.ne.s32.totalorder %s137, %s138
    %p150 = scmp.eq.s32.totalorder %s23, 1
    %p151 = por %p149, %p150
    %p153 = scmp.ne.s32.totalorder %s138, %s152
    %p154 = scmp.eq.s32.totalorder %s23, 0
    %p155 = por %p153, %p154
    %s157 = sadd.s32 %s156, 1
    %p160 = scmp.eq.s32.totalorder %s17, 1
    %p161 = scmp.ne.s32.totalorder %s156, %s158
    %p162 = scmp.eq.s32.totalorder %s17, 0
    %p163 = por %p161, %p162
    %p164 = scmp.ne.s32.totalorder %s156, %s158
    %p165 = scmp.eq.s32.totalorder %s22, 1
    %p166 = por %p164, %p165
    %p167 = scmp.ne.s32.totalorder %s158, %s159
    %p168 = scmp.eq.s32.totalorder %s22, 0
    %p169 = por %p167, %p168
    %p170 = scmp.ne.s32.totalorder %s158, %s159
    %p171 = scmp.eq.s32.totalorder %s23, 1
    %p172 = por %p170, %p171
    %p174 = scmp.ne.s32.totalorder %s159, %s173
    %p175 = scmp.eq.s32.totalorder %s23, 0
    %p176 = por %p174, %p175
    %s178 = sadd.s32 %s177, 1
    %p181 = scmp.eq.s32.totalorder %s17, 1
    %p182 = scmp.ne.s32.totalorder %s177, %s179
    %p183 = scmp.eq.s32.totalorder %s17, 0
    %p184 = por %p182, %p183
    %p185 = scmp.ne.s32.totalorder %s177, %s179
    %p186 = scmp.eq.s32.totalorder %s22, 1
    %p187 = por %p185, %p186
    %p188 = scmp.ne.s32.totalorder %s179, %s180
    %p189 = scmp.eq.s32.totalorder %s22, 0
    %p190 = por %p188, %p189
    %p191 = scmp.ne.s32.totalorder %s179, %s180
    %p192 = scmp.eq.s32.totalorder %s23, 1
    %p193 = por %p191, %p192
    %p195 = scmp.ne.s32.totalorder %s180, %s194
    %p196 = scmp.eq.s32.totalorder %s23, 0
    %p197 = por %p195, %p196
    %s199 = sadd.s32 %s198, 1
    %p202 = scmp.eq.s32.totalorder %s17, 1
    %p203 = scmp.ne.s32.totalorder %s198, %s200
    %p204 = scmp.eq.s32.totalorder %s17, 0
    %p205 = por %p203, %p204
    %p206 = scmp.ne.s32.totalorder %s198, %s200
    %p207 = scmp.eq.s32.totalorder %s22, 1
    %p208 = por %p206, %p207
    %p209 = scmp.ne.s32.totalorder %s200, %s201
    %p210 = scmp.eq.s32.totalorder %s22, 0
    %p211 = por %p209, %p210
    %p212 = scmp.ne.s32.totalorder %s200, %s201
    %p213 = scmp.eq.s32.totalorder %s23, 1
    %p214 = por %p212, %p213
    %p216 = scmp.ne.s32.totalorder %s201, %s215
    %p217 = scmp.eq.s32.totalorder %s23, 0
    %p218 = por %p216, %p217
    %s220 = sadd.s32 %s219, 1
    %p223 = scmp.eq.s32.totalorder %s17, 1
    %p224 = scmp.ne.s32.totalorder %s219, %s221
    %p225 = scmp.eq.s32.totalorder %s17, 0
    %p226 = por %p224, %p225
    %p227 = scmp.ne.s32.totalorder %s219, %s221
    %p228 = scmp.eq.s32.totalorder %s22, 1
    %p229 = por %p227, %p228
    %p230 = scmp.ne.s32.totalorder %s221, %s222
    %p231 = scmp.eq.s32.totalorder %s22, 0
    %p232 = por %p230, %p231
    %p233 = scmp.ne.s32.totalorder %s221, %s222
    %p234 = scmp.eq.s32.totalorder %s23, 1
    %p235 = por %p233, %p234
    %p237 = scmp.ne.s32.totalorder %s222, %s236
    %p238 = scmp.eq.s32.totalorder %s23, 0
    %p239 = por %p237, %p238
    %s241 = sadd.s32 %s240, 1
    %p244 = scmp.eq.s32.totalorder %s17, 1
    %p245 = scmp.ne.s32.totalorder %s240, %s242
    %p246 = scmp.eq.s32.totalorder %s17, 0
    %p247 = por %p245, %p246
    %p248 = scmp.ne.s32.totalorder %s240, %s242
    %p249 = scmp.eq.s32.totalorder %s22, 1
    %p250 = por %p248, %p249
    %p251 = scmp.ne.s32.totalorder %s242, %s243
    %p252 = scmp.eq.s32.totalorder %s22, 0
    %p253 = por %p251, %p252
    %p254 = scmp.ne.s32.totalorder %s242, %s243
    %p255 = scmp.eq.s32.totalorder %s23, 1
    %p256 = por %p254, %p255
    %p258 = scmp.ne.s32.totalorder %s243, %s257
    %p259 = scmp.eq.s32.totalorder %s23, 0
    %p260 = por %p258, %p259
    %s261 = ssub.s32 %s17, %s24
    %p262 = scmp.eq.s32.totalorder %s261, 0
    %s264 = sadd.s32 %s263, 1
    %s265 = scalar_select %p262, %s263, %s264
    %p268 = pneg %p262
    %p269 = scmp.eq.s32.totalorder %s17, 1
    %p270 = por %p268, %p269
    %p271 = scmp.ne.s32.totalorder %s263, %s266
    %p272 = scmp.eq.s32.totalorder %s17, 0
    %p273 = por %p271, %p272
    %p274 = scmp.ne.s32.totalorder %s263, %s266
    %p275 = scmp.eq.s32.totalorder %s22, 1
    %p276 = por %p274, %p275
    %p277 = scmp.ne.s32.totalorder %s266, %s267
    %p278 = scmp.eq.s32.totalorder %s22, 0
    %p279 = por %p277, %p278
    %p280 = scmp.ne.s32.totalorder %s266, %s267
    %p281 = scmp.eq.s32.totalorder %s23, 1
    %p282 = por %p280, %p281
    %p284 = scmp.ne.s32.totalorder %s267, %s283
    %p285 = scmp.eq.s32.totalorder %s23, 0
    %p286 = por %p284, %p285
    %p287 = scmp.le.s32.totalorder 1, %s17
    %p288 = scmp.lt.s32.totalorder %s17, 3
    %p289 = pnand %p287, %p288
    %p290 = pneg %p289
    // Predicated region
    $region9: #{maskclip_featurizer.9} parent=5 // pred_check
      _
    $region10: #{maskclip_featurizer.9} parent=5 // pred_check_branch
      %292 = sbr.rel (%p289) target = $region12
    $region11: #{maskclip_featurizer.9} parent=5 // pred_region
      %s293 = ssub.s32 %s17, 1
      // Predicated region
      $region13: #{maskclip_featurizer.9} parent=11 // pred_check
        %p294 = pneg %p64
      $region14: #{maskclip_featurizer.9} parent=11 // pred_check_branch
        %296 = sbr.rel (%p294) target = $region16
      $region15: #{maskclip_featurizer.9} parent=11 // pred_region
        _
      $region16: #{maskclip_featurizer.9} parent=11 // pred_fallthru
        _
      // Predicated region
      $region17: #{maskclip_featurizer.9} parent=11 // pred_check
        %p297 = pneg %p85
      $region18: #{maskclip_featurizer.9} parent=11 // pred_check_branch
        %299 = sbr.rel (%p297) target = $region20
      $region19: #{maskclip_featurizer.9} parent=11 // pred_region
        _
      $region20: #{maskclip_featurizer.9} parent=11 // pred_fallthru
        _
      // Predicated region
      $region21: #{maskclip_featurizer.9} parent=11 // pred_check
        %p300 = pneg %p106
      $region22: #{maskclip_featurizer.9} parent=11 // pred_check_branch
        %302 = sbr.rel (%p300) target = $region24
      $region23: #{maskclip_featurizer.9} parent=11 // pred_region
        _
      $region24: #{maskclip_featurizer.9} parent=11 // pred_fallthru
        _
      // Predicated region
      $region25: #{maskclip_featurizer.9} parent=11 // pred_check
        %p303 = pneg %p127
      $region26: #{maskclip_featurizer.9} parent=11 // pred_check_branch
        %305 = sbr.rel (%p303) target = $region28
      $region27: #{maskclip_featurizer.9} parent=11 // pred_region
        _
      $region28: #{maskclip_featurizer.9} parent=11 // pred_fallthru
        _
      // Predicated region
      $region29: #{maskclip_featurizer.9} parent=11 // pred_check
        %p306 = pneg %p148
      $region30: #{maskclip_featurizer.9} parent=11 // pred_check_branch
        %308 = sbr.rel (%p306) target = $region32
      $region31: #{maskclip_featurizer.9} parent=11 // pred_region
        _
      $region32: #{maskclip_featurizer.9} parent=11 // pred_fallthru
        _
      // Predicated region
      $region33: #{maskclip_featurizer.9} parent=11 // pred_check
        %p309 = pneg %p169
      $region34: #{maskclip_featurizer.9} parent=11 // pred_check_branch
        %311 = sbr.rel (%p309) target = $region36
      $region35: #{maskclip_featurizer.9} parent=11 // pred_region
        _
      $region36: #{maskclip_featurizer.9} parent=11 // pred_fallthru
        _
      // Predicated region
      $region37: #{maskclip_featurizer.9} parent=11 // pred_check
        %p312 = pneg %p190
      $region38: #{maskclip_featurizer.9} parent=11 // pred_check_branch
        %314 = sbr.rel (%p312) target = $region40
      $region39: #{maskclip_featurizer.9} parent=11 // pred_region
        _
      $region40: #{maskclip_featurizer.9} parent=11 // pred_fallthru
        _
      // Predicated region
      $region41: #{maskclip_featurizer.9} parent=11 // pred_check
        %p315 = pneg %p211
      $region42: #{maskclip_featurizer.9} parent=11 // pred_check_branch
        %317 = sbr.rel (%p315) target = $region44
      $region43: #{maskclip_featurizer.9} parent=11 // pred_region
        _
      $region44: #{maskclip_featurizer.9} parent=11 // pred_fallthru
        _
      // Predicated region
      $region45: #{maskclip_featurizer.9} parent=11 // pred_check
        %p318 = pneg %p232
      $region46: #{maskclip_featurizer.9} parent=11 // pred_check_branch
        %320 = sbr.rel (%p318) target = $region48
      $region47: #{maskclip_featurizer.9} parent=11 // pred_region
        _
      $region48: #{maskclip_featurizer.9} parent=11 // pred_fallthru
        _
      // Predicated region
      $region49: #{maskclip_featurizer.9} parent=11 // pred_check
        %p321 = pneg %p253
      $region50: #{maskclip_featurizer.9} parent=11 // pred_check_branch
        %323 = sbr.rel (%p321) target = $region52
      $region51: #{maskclip_featurizer.9} parent=11 // pred_region
        _
      $region52: #{maskclip_featurizer.9} parent=11 // pred_fallthru
        _
    $region12: #{maskclip_featurizer.9} parent=5 // pred_fallthru
      _
    %p324 = scmp.lt.s32.totalorder %s17, 2
    // Predicated region
    $region53: #{maskclip_featurizer.9} parent=5 // pred_check
      %p325 = pneg %p324
    $region54: #{maskclip_featurizer.9} parent=5 // pred_check_branch
      %327 = sbr.rel (%p325) target = $region56
    $region55: #{maskclip_featurizer.9} parent=5 // pred_region
      // Predicated region
      $region57: #{maskclip_featurizer.9} parent=55 // pred_check
        %p328 = pneg %p37
      $region58: #{maskclip_featurizer.9} parent=55 // pred_check_branch
        %330 = sbr.rel (%p328) target = $region60
      $region59: #{maskclip_featurizer.9} parent=55 // pred_region
        %p331 = scmp.lt.s32.totalorder %s17, 1
        %s332 = scalar_select %p331, %s17, 1
        %s333 = smul.addr %s332, 3
        %s334 = smul.addr %s333, 8
        %s335 = scalar_lea.vmem %s0, %s334
      $region60: #{maskclip_featurizer.9} parent=55 // pred_fallthru
        _
    $region56: #{maskclip_featurizer.9} parent=5 // pred_fallthru
      _
    %p336 = scmp.le.s32.totalorder 1, %s17
    %p337 = scmp.lt.s32.totalorder %s17, 3
    %p338 = pnand %p336, %p337
    %p339 = pneg %p338
    // Predicated region
    $region61: #{maskclip_featurizer.9} parent=5 // pred_check
      _
    $region62: #{maskclip_featurizer.9} parent=5 // pred_check_branch
      %341 = sbr.rel (%p338) target = $region64
    $region63: #{maskclip_featurizer.9} parent=5 // pred_region
      %s342 = ssub.s32 %s17, 1
      %p343 = scmp.lt.s32.totalorder %s22, 1
      %s344 = scalar_select %p343, %s22, 1
      %s345 = smul.addr %s344, 3
      %s346 = smul.addr %s345, 8
      %s347 = scalar_lea.vmem %s0, %s346
      %p348 = pneg %p43
      %p349 = pneg %p40
      %p350 = pneg %p64
      %p351 = pneg %p61
      %p352 = pneg %p85
      %p353 = pneg %p82
      %p354 = pneg %p106
      %p355 = pneg %p103
      %p356 = pneg %p127
      %p357 = pneg %p124
      %p358 = pneg %p148
      %p359 = pneg %p145
      %p360 = pneg %p169
      %p361 = pneg %p166
      %p362 = pneg %p190
      %p363 = pneg %p187
      %p364 = pneg %p211
      %p365 = pneg %p208
      %p366 = pneg %p232
      %p367 = pneg %p229
      %p368 = pneg %p253
      %p369 = pneg %p250
      %p370 = pneg %p279
      %p371 = pneg %p276
      %p372 = scmp.lt.s32.totalorder %s22, 1
      %s373 = scalar_select %p372, %s22, 1
      %s374 = smul.addr %s373, 3
      %s375 = smul.addr %s374, 8
      %s376 = scalar_lea.vmem %s11, %s375
      %p377 = scmp.lt.s32.totalorder %s22, 1
      %s378 = scalar_select %p377, %s22, 1
      %s379 = smul.addr %s378, 3
      %s380 = smul.addr %s379, 8
      %s381 = scalar_lea.vmem %s0, %s380
      %p382 = scmp.lt.s32.totalorder %s22, 1
      %s383 = scalar_select %p382, %s22, 1
      %s384 = smul.addr %s383, 3
      %s385 = smul.addr %s384, 8
      %s386 = scalar_lea.vmem %s11, %s385
      %v388 = vld [vmem:[%s381] sm:$0xff]
      %v389 = vld [vmem:[%s381 + $0x8] sm:$0xff]
      %v390 = vld [vmem:[%s381 + $0x10] sm:$0x1]
      %v391 = vld [vmem:[%s1] sm:$0x1]
      %v392 = vld [vmem:[%s2] sm:$0x1]
      %vm393 = vcmask 261120
      %v394 = vsel %vm393, %v388, 0.0
      %395 = vadd.xlane.f32.xlu0 %v394
      %v396 = vpop.xlane.xlu0 %395
      %v397 = vsel %vm393, %v389, 0.0
      %398 = vadd.xlane.f32.xlu0 %v397
      %v399 = vpop.xlane.xlu0 %398
      %vm400 = vcmask 253952
      %v401 = vsel %vm400, %v390, 0.0
      %402 = vadd.xlane.f32.xlu0 %v401
      %v403 = vpop.xlane.xlu0 %402
      %v404 = vrcp.pop 32.0
      %v405 = vmul.f32 %v396, %v404
      %v406 = vmul.f32 %v399, %v404
      %v407 = vmul.f32 %v403, %v404
      %v408 = vsub.f32 %v388, %v405
      %v409 = vsub.f32 %v389, %v406
      %v410 = vsub.f32 %v390, %v407
      %v411 = vmul.f32 %v408, %v408
      %v412 = vmul.f32 %v409, %v409
      %v413 = vmul.f32 %v410, %v410
      %v414 = vsel %vm393, %v411, 0.0
      %415 = vadd.xlane.f32.xlu0 %v414
      %v416 = vpop.xlane.xlu0 %415
      %v417 = vsel %vm393, %v412, 0.0
      %418 = vadd.xlane.f32.xlu0 %v417
      %v419 = vpop.xlane.xlu0 %418
      %v420 = vsel %vm400, %v413, 0.0
      %421 = vadd.xlane.f32.xlu0 %v420
      %v422 = vpop.xlane.xlu0 %421
      %v423 = vmul.f32 %v416, %v404
      %v424 = vmul.f32 %v419, %v404
      %v425 = vmul.f32 %v422, %v404
      %v426 = vadd.f32 %v423, 1e-05
      %v427 = vadd.f32 %v424, 1e-05
      %v428 = vadd.f32 %v425, 1e-05
      %v429 = vrsqrt.pop %v426
      %v430 = vrsqrt.pop %v427
      %v431 = vrsqrt.pop %v428
      %v432 = vmul.f32 %v408, %v429
      %v433 = vmul.f32 %v409, %v430
      %v434 = vmul.f32 %v410, %v431
      %v436 = vlaneseq
      %v437 = vshrl.u32 %v436, 7
      %v438 = vsub.s32 0, %v437
      %v439 = vrot.slane %v391, %v438
      %v441 = vmul.f32 %v432, %v439
      %v442 = vmul.f32 %v433, %v439
      %v443 = vmul.f32 %v434, %v439
      %v445 = vlaneseq
      %v446 = vshrl.u32 %v445, 7
      %v447 = vsub.s32 0, %v446
      %v448 = vrot.slane %v392, %v447
      %v450 = vadd.f32 %v441, %v448
      %v451 = vadd.f32 %v442, %v448
      %v452 = vadd.f32 %v443, %v448
      %v453 = vpack.c.bf16 %v451, %v450
      %v454 = vpack.c.bf16 %v452, %v452
      %v455 = vld [vmem:[%s5] sm:$0xf]
      %v456 = vld [vmem:[%s5 + $0x4] sm:$0xf]
      %v457 = vld [vmem:[%s5 + $0x8] sm:$0xf]
      %v458 = vld [vmem:[%s5 + $0xc] sm:$0xf]
      %v459 = vld [vmem:[%s8] sm:$0x1]
      %v461 = vlaneseq
      %v462 = vshrl.u32 %v461, 7
      %v463 = vsub.s32 0, %v462
      %v464 = vrot.slane %v459, %v463
      %v470 = vunpack.c.l.b16 %v455
      %v471 = vunpack.c.l.b16 %v456
      %v472 = vunpack.c.l.b16 %v457
      %v473 = vunpack.c.l.b16 %v458
      %v474 = vpack.c.b16 %v471, %v470
      %v475 = vpack.c.b16 %v473, %v472
      %v479 = vsel %vm393, %v453, 0
      %v482 = vsel %vm393, %v454, 0
      %484 = vmatprep.subr.bf16.mxu0 0
      %485 = vmatpush1.bf16.msra.mxu0 0
      %486 = vmatprep.subr.bf16.mxu0 0
      %487 = vmatpush1.bf16.msra.mxu0 0
      %488 = vmatprep.subr.bf16.mxu0 0
      %489 = vmatpush1.bf16.msra.mxu0 0
      %490 = vmatprep.subr.bf16.mxu0 0
      %491 = vmatpush1.bf16.msra.mxu0 0
      %492 = vmatprep.subr.bf16.mxu0 0
      %493 = vmatpush1.bf16.msra.mxu0 0
      %494 = vmatprep.subr.bf16.mxu0 0
      %495 = vmatpush1.bf16.msra.mxu0 0
      %496 = vmatprep.subr.bf16.mxu0 0
      %497 = vmatpush1.bf16.msra.mxu0 %v475
      %498 = vmatprep.subr.bf16.mxu0 0
      %499 = vmatpush1.bf16.msra.mxu0 %v474
      %500 = vmatprep.subr.bf16.mxu0 0
      %501 = vmatpush2.bf16.msra.mxu0 0
      %502 = vmatprep.subr.bf16.mxu0 0
      %503 = vmatpush2.bf16.msra.mxu0 0
      %504 = vmatprep.subr.bf16.mxu0 0
      %505 = vmatpush2.bf16.msra.mxu0 0
      %506 = vmatprep.subr.bf16.mxu0 0
      %507 = vmatpush2.bf16.msra.mxu0 0
      %508 = vmatprep.subr.bf16.mxu0 0
      %509 = vmatpush2.bf16.msra.mxu0 0
      %510 = vmatprep.subr.bf16.mxu0 0
      %511 = vmatpush2.bf16.msra.mxu0 0
      %512 = vmatprep.subr.bf16.mxu0 0
      %513 = vmatpush2.bf16.msra.mxu0 0
      %514 = vmatprep.subr.bf16.mxu0 0
      %515 = vmatpush2.bf16.msra.mxu0 0
      %516 = vmatprep.mubr.bf16.mxu0 0
      %517 = vmatmul.mubr.bf16.gmra.mxu0 %v479
      %v518 = vpop.f32.mrf.mxu0
      %v519 = vadd.f32 %v464, %v518
      %v520 = vpop.f32.mrf.mxu0
      %v521 = vpop.f32.mrf.mxu0
      %v522 = vadd.f32 %v464, %v521
      %v523 = vpop.f32.mrf.mxu0
      %524 = vmatprep.mubr.bf16.mxu0 0
      %525 = vmatmul.mubr.bf16.gmra.mxu0 %v482
      %v526 = vpop.f32.mrf.mxu0
      %v527 = vadd.f32 %v464, %v526
      %v528 = vpop.f32.mrf.mxu0
      %v529 = vpop.f32.mrf.mxu0
      %v530 = vpop.f32.mrf.mxu0
      %531 = vdwg.mxu0
      %v532 = vld [vmem:[%s3] sm:$0xf]
      %v533 = vld [vmem:[%s3 + $0x4] sm:$0xf]
      %v534 = vld [vmem:[%s3 + $0x8] sm:$0xf]
      %v535 = vld [vmem:[%s3 + $0xc] sm:$0xf]
      %v536 = vld [vmem:[%s6] sm:$0x1]
      %v538 = vlaneseq
      %v539 = vshrl.u32 %v538, 7
      %v540 = vsub.s32 0, %v539
      %v541 = vrot.slane %v536, %v540
      %v547 = vunpack.c.l.b16 %v532
      %v548 = vunpack.c.l.b16 %v533
      %v549 = vunpack.c.l.b16 %v534
      %v550 = vunpack.c.l.b16 %v535
      %v551 = vpack.c.b16 %v548, %v547
      %v552 = vpack.c.b16 %v550, %v549
      %555 = vmatprep.subr.bf16.mxu0 0
      %556 = vmatpush1.bf16.msra.mxu0 0
      %557 = vmatprep.subr.bf16.mxu0 0
      %558 = vmatpush1.bf16.msra.mxu0 0
      %559 = vmatprep.subr.bf16.mxu0 0
      %560 = vmatpush1.bf16.msra.mxu0 0
      %561 = vmatprep.subr.bf16.mxu0 0
      %562 = vmatpush1.bf16.msra.mxu0 0
      %563 = vmatprep.subr.bf16.mxu0 0
      %564 = vmatpush1.bf16.msra.mxu0 0
      %565 = vmatprep.subr.bf16.mxu0 0
      %566 = vmatpush1.bf16.msra.mxu0 0
      %567 = vmatprep.subr.bf16.mxu0 0
      %568 = vmatpush1.bf16.msra.mxu0 %v552
      %569 = vmatprep.subr.bf16.mxu0 0
      %570 = vmatpush1.bf16.msra.mxu0 %v551
      %571 = vmatprep.subr.bf16.mxu0 0
      %572 = vmatpush2.bf16.msra.mxu0 0
      %573 = vmatprep.subr.bf16.mxu0 0
      %574 = vmatpush2.bf16.msra.mxu0 0
      %575 = vmatprep.subr.bf16.mxu0 0
      %576 = vmatpush2.bf16.msra.mxu0 0
      %577 = vmatprep.subr.bf16.mxu0 0
      %578 = vmatpush2.bf16.msra.mxu0 0
      %579 = vmatprep.subr.bf16.mxu0 0
      %580 = vmatpush2.bf16.msra.mxu0 0
      %581 = vmatprep.subr.bf16.mxu0 0
      %582 = vmatpush2.bf16.msra.mxu0 0
      %583 = vmatprep.subr.bf16.mxu0 0
      %584 = vmatpush2.bf16.msra.mxu0 0
      %585 = vmatprep.subr.bf16.mxu0 0
      %586 = vmatpush2.bf16.msra.mxu0 0
      %587 = vmatprep.mubr.bf16.mxu0 0
      %588 = vmatmul.mubr.bf16.gmra.mxu0 %v479
      %v589 = vpop.f32.mrf.mxu0
      %v590 = vadd.f32 %v541, %v589
      %v591 = vpop.f32.mrf.mxu0
      %v592 = vpop.f32.mrf.mxu0
      %v593 = vadd.f32 %v541, %v592
      %v594 = vpop.f32.mrf.mxu0
      %595 = vmatprep.mubr.bf16.mxu0 0
      %596 = vmatmul.mubr.bf16.gmra.mxu0 %v482
      %v597 = vpop.f32.mrf.mxu0
      %v598 = vadd.f32 %v541, %v597
      %v599 = vpop.f32.mrf.mxu0
      %v600 = vpop.f32.mrf.mxu0
      %v601 = vpop.f32.mrf.mxu0
      %602 = vdwg.mxu0
      %v603 = vmul.f32 %v590, 0.35355338
      %v604 = vmul.f32 %v593, 0.35355338
      %v605 = vmul.f32 %v598, 0.35355338
      %v606 = vld [vmem:[%s4] sm:$0xf]
      %v607 = vld [vmem:[%s4 + $0x4] sm:$0xf]
      %v608 = vld [vmem:[%s4 + $0x8] sm:$0xf]
      %v609 = vld [vmem:[%s4 + $0xc] sm:$0xf]
      %v610 = vld [vmem:[%s7] sm:$0x1]
      %v612 = vlaneseq
      %v613 = vshrl.u32 %v612, 7
      %v614 = vsub.s32 0, %v613
      %v615 = vrot.slane %v610, %v614
      %v621 = vunpack.c.l.b16 %v606
      %v622 = vunpack.c.l.b16 %v607
      %v623 = vunpack.c.l.b16 %v608
      %v624 = vunpack.c.l.b16 %v609
      %v625 = vpack.c.b16 %v622, %v621
      %v626 = vpack.c.b16 %v624, %v623
      %629 = vmatprep.subr.bf16.mxu0 0
      %630 = vmatpush1.bf16.msra.mxu0 0
      %631 = vmatprep.subr.bf16.mxu0 0
      %632 = vmatpush1.bf16.msra.mxu0 0
      %633 = vmatprep.subr.bf16.mxu0 0
      %634 = vmatpush1.bf16.msra.mxu0 0
      %635 = vmatprep.subr.bf16.mxu0 0
      %636 = vmatpush1.bf16.msra.mxu0 0
      %637 = vmatprep.subr.bf16.mxu0 0
      %638 = vmatpush1.bf16.msra.mxu0 0
      %639 = vmatprep.subr.bf16.mxu0 0
      %640 = vmatpush1.bf16.msra.mxu0 0
      %641 = vmatprep.subr.bf16.mxu0 0
      %642 = vmatpush1.bf16.msra.mxu0 %v626
      %643 = vmatprep.subr.bf16.mxu0 0
      %644 = vmatpush1.bf16.msra.mxu0 %v625
      %645 = vmatprep.subr.bf16.mxu0 0
      %646 = vmatpush2.bf16.msra.mxu0 0
      %647 = vmatprep.subr.bf16.mxu0 0
      %648 = vmatpush2.bf16.msra.mxu0 0
      %649 = vmatprep.subr.bf16.mxu0 0
      %650 = vmatpush2.bf16.msra.mxu0 0
      %651 = vmatprep.subr.bf16.mxu0 0
      %652 = vmatpush2.bf16.msra.mxu0 0
      %653 = vmatprep.subr.bf16.mxu0 0
      %654 = vmatpush2.bf16.msra.mxu0 0
      %655 = vmatprep.subr.bf16.mxu0 0
      %656 = vmatpush2.bf16.msra.mxu0 0
      %657 = vmatprep.subr.bf16.mxu0 0
      %658 = vmatpush2.bf16.msra.mxu0 0
      %659 = vmatprep.subr.bf16.mxu0 0
      %660 = vmatpush2.bf16.msra.mxu0 0
      %661 = vmatprep.mubr.bf16.mxu0 0
      %662 = vmatmul.mubr.bf16.gmra.mxu0 %v479
      %v663 = vpop.f32.mrf.mxu0
      %v664 = vadd.f32 %v615, %v663
      %v665 = vpop.f32.mrf.mxu0
      %v666 = vpop.f32.mrf.mxu0
      %v667 = vadd.f32 %v615, %v666
      %v668 = vpop.f32.mrf.mxu0
      %669 = vmatprep.mubr.bf16.mxu0 0
      %670 = vmatmul.mubr.bf16.gmra.mxu0 %v482
      %v671 = vpop.f32.mrf.mxu0
      %v672 = vadd.f32 %v615, %v671
      %v673 = vpop.f32.mrf.mxu0
      %v674 = vpop.f32.mrf.mxu0
      %v675 = vpop.f32.mrf.mxu0
      %676 = vdwg.mxu0
      %vm677 = vcmask 64512
      %v679 = vsel %vm677, %v603, 0
      %v682 = vsel %vm677, %v604, 0
      %v685 = vsel %vm677, %v605, 0
      %v688 = vsel %vm677, %v664, 0
      %v691 = vsel %vm677, %v667, 0
      %v694 = vsel %vm677, %v672, 0
      %696 = vmatprep.subr.mxu0 0.0
      %697 = vmatpush1.xpose.msra.mxu0 0.0
      %698 = vmatprep.subr.mxu0 0.0
      %699 = vmatpush1.xpose.msra.mxu0 0.0
      %700 = vmatprep.subr.mxu0 0.0
      %701 = vmatpush1.xpose.msra.mxu0 0.0
      %702 = vmatprep.subr.mxu0 0.0
      %703 = vmatpush1.xpose.msra.mxu0 0.0
      %704 = vmatprep.subr.mxu0 0.0
      %705 = vmatpush1.xpose.msra.mxu0 0.0
      %706 = vmatprep.subr.mxu0 0.0
      %707 = vmatpush1.xpose.msra.mxu0 0.0
      %708 = vmatprep.subr.mxu0 0.0
      %709 = vmatpush1.xpose.msra.mxu0 0.0
      %710 = vmatprep.subr.mxu0 0.0
      %711 = vmatpush1.xpose.msra.mxu0 0.0
      %712 = vmatprep.subr.mxu0 0.0
      %713 = vmatpush1.xpose.msra.mxu0 0.0
      %714 = vmatprep.subr.mxu0 0.0
      %715 = vmatpush1.xpose.msra.mxu0 0.0
      %716 = vmatprep.subr.mxu0 0.0
      %717 = vmatpush1.xpose.msra.mxu0 0.0
      %718 = vmatprep.subr.mxu0 0.0
      %719 = vmatpush1.xpose.msra.mxu0 0.0
      %720 = vmatprep.subr.mxu0 0.0
      %721 = vmatpush1.xpose.msra.mxu0 0.0
      %722 = vmatprep.subr.mxu0 0.0
      %723 = vmatpush1.xpose.msra.mxu0 %v694
      %724 = vmatprep.subr.mxu0 0.0
      %725 = vmatpush1.xpose.msra.mxu0 %v691
      %726 = vmatprep.subr.mxu0 0.0
      %727 = vmatpush1.xpose.msra.mxu0 %v688
      %728 = vmatprep.subr.mxu0 0.0
      %729 = vmatpush2.xpose.msra.mxu0 0.0
      %730 = vmatprep.subr.mxu0 0.0
      %731 = vmatpush2.xpose.msra.mxu0 0.0
      %732 = vmatprep.subr.mxu0 0.0
      %733 = vmatpush2.xpose.msra.mxu0 0.0
      %734 = vmatprep.subr.mxu0 0.0
      %735 = vmatpush2.xpose.msra.mxu0 0.0
      %736 = vmatprep.subr.mxu0 0.0
      %737 = vmatpush2.xpose.msra.mxu0 0.0
      %738 = vmatprep.subr.mxu0 0.0
      %739 = vmatpush2.xpose.msra.mxu0 0.0
      %740 = vmatprep.subr.mxu0 0.0
      %741 = vmatpush2.xpose.msra.mxu0 0.0
      %742 = vmatprep.subr.mxu0 0.0
      %743 = vmatpush2.xpose.msra.mxu0 0.0
      %744 = vmatprep.subr.mxu0 0.0
      %745 = vmatpush2.xpose.msra.mxu0 0.0
      %746 = vmatprep.subr.mxu0 0.0
      %747 = vmatpush2.xpose.msra.mxu0 0.0
      %748 = vmatprep.subr.mxu0 0.0
      %749 = vmatpush2.xpose.msra.mxu0 0.0
      %750 = vmatprep.subr.mxu0 0.0
      %751 = vmatpush2.xpose.msra.mxu0 0.0
      %752 = vmatprep.subr.mxu0 0.0
      %753 = vmatpush2.xpose.msra.mxu0 0.0
      %754 = vmatprep.subr.mxu0 0.0
      %755 = vmatpush2.xpose.msra.mxu0 0.0
      %756 = vmatprep.subr.mxu0 0.0
      %757 = vmatpush2.xpose.msra.mxu0 0.0
      %758 = vmatprep.subr.mxu0 0.0
      %759 = vmatpush2.xpose.msra.mxu0 0.0
      %760 = vmatprep.mubr.f32.mxu0 0.0
      %761 = vmatmul.mubr.f32.gmra.mxu0 %v679
      %v762 = vpop.f32.mrf.mxu0
      %v763 = vadd.f32 0.0, %v762
      %v764 = vpop.f32.mrf.mxu0
      %765 = vmatprep.mubr.f32.mxu0 0.0
      %766 = vmatmul.mubr.f32.gmra.mxu0 %v682
      %v767 = vpop.f32.mrf.mxu0
      %v768 = vadd.f32 0.0, %v767
      %v769 = vpop.f32.mrf.mxu0
      %770 = vmatprep.mubr.f32.mxu0 0.0
      %771 = vmatmul.mubr.f32.gmra.mxu0 %v685
      %v772 = vpop.f32.mrf.mxu0
      %v773 = vadd.f32 0.0, %v772
      %v774 = vpop.f32.mrf.mxu0
      %775 = vdwg.mxu0
      %vm776 = vcmask 138240
      %v777 = vsel %vm776, %v763, -inf
      %778 = vmax.xlane.f32.xlu0 %v777
      %v779 = vpop.xlane.xlu0 %778
      %v780 = vsel %vm776, %v768, -inf
      %781 = vmax.xlane.f32.xlu0 %v780
      %v782 = vpop.xlane.xlu0 %781
      %vm783 = vcmask 131072
      %v784 = vsel %vm783, %v773, -inf
      %785 = vmax.xlane.f32.xlu0 %v784
      %v786 = vpop.xlane.xlu0 %785
      %v787 = vsub.f32 %v763, %v779
      %v788 = vsub.f32 %v768, %v782
      %v789 = vsub.f32 %v773, %v786
      %v790 = vmul.f32 %v787, 1.442695
      %v791 = vpow.pop %v790
      %v792 = vmul.f32 %v788, 1.442695
      %v793 = vpow.pop %v792
      %v794 = vmul.f32 %v789, 1.442695
      %v795 = vpow.pop %v794
      %v796 = vsel %vm776, %v791, 0.0
      %797 = vadd.xlane.f32.xlu0 %v796
      %v798 = vpop.xlane.xlu0 %797
      %v799 = vsel %vm776, %v793, 0.0
      %800 = vadd.xlane.f32.xlu0 %v799
      %v801 = vpop.xlane.xlu0 %800
      %v802 = vsel %vm783, %v795, 0.0
      %803 = vadd.xlane.f32.xlu0 %v802
      %v804 = vpop.xlane.xlu0 %803
      %v805 = vrcp.pop %v798
      %v806 = vrcp.pop %v801
      %v807 = vrcp.pop %v804
      %v808 = vmul.f32 %v791, %v805
      %v809 = vmul.f32 %v793, %v806
      %v810 = vmul.f32 %v795, %v807
      %v812 = vsel %vm776, %v808, 0
      %v815 = vsel %vm776, %v809, 0
      %v818 = vsel %vm776, %v810, 0
      %vm820 = vcmask 1040384
      %v822 = vsel %vm820, %v527, 0
      %824 = vmatprep.subr.mxu0 0.0
      %825 = vmatpush1.msra.mxu0 0.0
      %826 = vmatprep.subr.mxu0 0.0
      %827 = vmatpush1.msra.mxu0 0.0
      %828 = vmatprep.subr.mxu0 0.0
      %829 = vmatpush1.msra.mxu0 0.0
      %830 = vmatprep.subr.mxu0 0.0
      %831 = vmatpush1.msra.mxu0 0.0
      %832 = vmatprep.subr.mxu0 0.0
      %833 = vmatpush1.msra.mxu0 0.0
      %834 = vmatprep.subr.mxu0 0.0
      %835 = vmatpush1.msra.mxu0 0.0
      %836 = vmatprep.subr.mxu0 0.0
      %837 = vmatpush1.msra.mxu0 0.0
      %838 = vmatprep.subr.mxu0 0.0
      %839 = vmatpush1.msra.mxu0 0.0
      %840 = vmatprep.subr.mxu0 0.0
      %841 = vmatpush1.msra.mxu0 0.0
      %842 = vmatprep.subr.mxu0 0.0
      %843 = vmatpush1.msra.mxu0 0.0
      %844 = vmatprep.subr.mxu0 0.0
      %845 = vmatpush1.msra.mxu0 0.0
      %846 = vmatprep.subr.mxu0 0.0
      %847 = vmatpush1.msra.mxu0 0.0
      %848 = vmatprep.subr.mxu0 0.0
      %849 = vmatpush1.msra.mxu0 0.0
      %850 = vmatprep.subr.mxu0 0.0
      %851 = vmatpush1.msra.mxu0 %v822
      %852 = vmatprep.subr.mxu0 0.0
      %853 = vmatpush1.msra.mxu0 %v522
      %854 = vmatprep.subr.mxu0 0.0
      %855 = vmatpush1.msra.mxu0 %v519
      %856 = vmatprep.subr.mxu0 0.0
      %857 = vmatpush2.msra.mxu0 0.0
      %858 = vmatprep.subr.mxu0 0.0
      %859 = vmatpush2.msra.mxu0 0.0
      %860 = vmatprep.subr.mxu0 0.0
      %861 = vmatpush2.msra.mxu0 0.0
      %862 = vmatprep.subr.mxu0 0.0
      %863 = vmatpush2.msra.mxu0 0.0
      %864 = vmatprep.subr.mxu0 0.0
      %865 = vmatpush2.msra.mxu0 0.0
      %866 = vmatprep.subr.mxu0 0.0
      %867 = vmatpush2.msra.mxu0 0.0
      %868 = vmatprep.subr.mxu0 0.0
      %869 = vmatpush2.msra.mxu0 0.0
      %870 = vmatprep.subr.mxu0 0.0
      %871 = vmatpush2.msra.mxu0 0.0
      %872 = vmatprep.subr.mxu0 0.0
      %873 = vmatpush2.msra.mxu0 0.0
      %874 = vmatprep.subr.mxu0 0.0
      %875 = vmatpush2.msra.mxu0 0.0
      %876 = vmatprep.subr.mxu0 0.0
      %877 = vmatpush2.msra.mxu0 0.0
      %878 = vmatprep.subr.mxu0 0.0
      %879 = vmatpush2.msra.mxu0 0.0
      %880 = vmatprep.subr.mxu0 0.0
      %881 = vmatpush2.msra.mxu0 0.0
      %882 = vmatprep.subr.mxu0 0.0
      %883 = vmatpush2.msra.mxu0 0.0
      %884 = vmatprep.subr.mxu0 0.0
      %885 = vmatpush2.msra.mxu0 0.0
      %886 = vmatprep.subr.mxu0 0.0
      %887 = vmatpush2.msra.mxu0 0.0
      %888 = vmatprep.mubr.f32.mxu0 0.0
      %889 = vmatmul.mubr.f32.gmra.mxu0 %v812
      %v890 = vpop.f32.mrf.mxu0
      %v891 = vadd.f32 0.0, %v890
      %v892 = vpop.f32.mrf.mxu0
      %893 = vmatprep.mubr.f32.mxu0 0.0
      %894 = vmatmul.mubr.f32.gmra.mxu0 %v815
      %v895 = vpop.f32.mrf.mxu0
      %v896 = vadd.f32 0.0, %v895
      %v897 = vpop.f32.mrf.mxu0
      %898 = vmatprep.mubr.f32.mxu0 0.0
      %899 = vmatmul.mubr.f32.gmra.mxu0 %v818
      %v900 = vpop.f32.mrf.mxu0
      %v901 = vadd.f32 0.0, %v900
      %v902 = vpop.f32.mrf.mxu0
      %903 = vdwg.mxu0
      %v904 = vpack.c.bf16 %v896, %v891
      %v905 = vpack.c.bf16 %v901, %v901
      %v906 = vld [vmem:[%s9] sm:$0xf]
      %s907 = scalar_lea.vmem %s5, 16
      %v908 = vld [vmem:[%s907] sm:$0xf]
      %v909 = vld [vmem:[%s907 + $0x4] sm:$0xf]
      %v910 = vld [vmem:[%s907 + $0x8] sm:$0xf]
      %v911 = vld [vmem:[%s907 + $0xc] sm:$0xf]
      %s912 = scalar_lea.vmem %s8, 1
      %v913 = vld [vmem:[%s912] sm:$0x1]
      %v915 = vlaneseq
      %v916 = vshrl.u32 %v915, 7
      %v917 = vsub.s32 0, %v916
      %v918 = vrot.slane %v913, %v917
      %v924 = vunpack.c.l.b16 %v908
      %v925 = vunpack.c.l.b16 %v909
      %v926 = vunpack.c.l.b16 %v910
      %v927 = vunpack.c.l.b16 %v911
      %v928 = vpack.c.b16 %v925, %v924
      %v929 = vpack.c.b16 %v927, %v926
      %932 = vmatprep.subr.bf16.mxu0 0
      %933 = vmatpush1.bf16.msra.mxu0 0
      %934 = vmatprep.subr.bf16.mxu0 0
      %935 = vmatpush1.bf16.msra.mxu0 0
      %936 = vmatprep.subr.bf16.mxu0 0
      %937 = vmatpush1.bf16.msra.mxu0 0
      %938 = vmatprep.subr.bf16.mxu0 0
      %939 = vmatpush1.bf16.msra.mxu0 0
      %940 = vmatprep.subr.bf16.mxu0 0
      %941 = vmatpush1.bf16.msra.mxu0 0
      %942 = vmatprep.subr.bf16.mxu0 0
      %943 = vmatpush1.bf16.msra.mxu0 0
      %944 = vmatprep.subr.bf16.mxu0 0
      %945 = vmatpush1.bf16.msra.mxu0 %v929
      %946 = vmatprep.subr.bf16.mxu0 0
      %947 = vmatpush1.bf16.msra.mxu0 %v928
      %948 = vmatprep.subr.bf16.mxu0 0
      %949 = vmatpush2.bf16.msra.mxu0 0
      %950 = vmatprep.subr.bf16.mxu0 0
      %951 = vmatpush2.bf16.msra.mxu0 0
      %952 = vmatprep.subr.bf16.mxu0 0
      %953 = vmatpush2.bf16.msra.mxu0 0
      %954 = vmatprep.subr.bf16.mxu0 0
      %955 = vmatpush2.bf16.msra.mxu0 0
      %956 = vmatprep.subr.bf16.mxu0 0
      %957 = vmatpush2.bf16.msra.mxu0 0
      %958 = vmatprep.subr.bf16.mxu0 0
      %959 = vmatpush2.bf16.msra.mxu0 0
      %960 = vmatprep.subr.bf16.mxu0 0
      %961 = vmatpush2.bf16.msra.mxu0 0
      %962 = vmatprep.subr.bf16.mxu0 0
      %963 = vmatpush2.bf16.msra.mxu0 0
      %964 = vmatprep.mubr.bf16.mxu0 0
      %965 = vmatmul.mubr.bf16.gmra.mxu0 %v479
      %v966 = vpop.f32.mrf.mxu0
      %v967 = vadd.f32 %v918, %v966
      %v968 = vpop.f32.mrf.mxu0
      %v969 = vpop.f32.mrf.mxu0
      %v970 = vadd.f32 %v918, %v969
      %v971 = vpop.f32.mrf.mxu0
      %972 = vmatprep.mubr.bf16.mxu0 0
      %973 = vmatmul.mubr.bf16.gmra.mxu0 %v482
      %v974 = vpop.f32.mrf.mxu0
      %v975 = vadd.f32 %v918, %v974
      %v976 = vpop.f32.mrf.mxu0
      %v977 = vpop.f32.mrf.mxu0
      %v978 = vpop.f32.mrf.mxu0
      %979 = vdwg.mxu0
      %s980 = scalar_lea.vmem %s3, 16
      %v981 = vld [vmem:[%s980] sm:$0xf]
      %v982 = vld [vmem:[%s980 + $0x4] sm:$0xf]
      %v983 = vld [vmem:[%s980 + $0x8] sm:$0xf]
      %v984 = vld [vmem:[%s980 + $0xc] sm:$0xf]
      %s985 = scalar_lea.vmem %s6, 1
      %v986 = vld [vmem:[%s985] sm:$0x1]
      %v988 = vlaneseq
      %v989 = vshrl.u32 %v988, 7
      %v990 = vsub.s32 0, %v989
      %v991 = vrot.slane %v986, %v990
      %v997 = vunpack.c.l.b16 %v981
      %v998 = vunpack.c.l.b16 %v982
      %v999 = vunpack.c.l.b16 %v983
      %v1000 = vunpack.c.l.b16 %v984
      %v1001 = vpack.c.b16 %v998, %v997
      %v1002 = vpack.c.b16 %v1000, %v999
      %1005 = vmatprep.subr.bf16.mxu0 0
      %1006 = vmatpush1.bf16.msra.mxu0 0
      %1007 = vmatprep.subr.bf16.mxu0 0
      %1008 = vmatpush1.bf16.msra.mxu0 0
      %1009 = vmatprep.subr.bf16.mxu0 0
      %1010 = vmatpush1.bf16.msra.mxu0 0
      %1011 = vmatprep.subr.bf16.mxu0 0
      %1012 = vmatpush1.bf16.msra.mxu0 0
      %1013 = vmatprep.subr.bf16.mxu0 0
      %1014 = vmatpush1.bf16.msra.mxu0 0
      %1015 = vmatprep.subr.bf16.mxu0 0
      %1016 = vmatpush1.bf16.msra.mxu0 0
      %1017 = vmatprep.subr.bf16.mxu0 0
      %1018 = vmatpush1.bf16.msra.mxu0 %v1002
      %1019 = vmatprep.subr.bf16.mxu0 0
      %1020 = vmatpush1.bf16.msra.mxu0 %v1001
      %1021 = vmatprep.subr.bf16.mxu0 0
      %1022 = vmatpush2.bf16.msra.mxu0 0
      %1023 = vmatprep.subr.bf16.mxu0 0
      %1024 = vmatpush2.bf16.msra.mxu0 0
      %1025 = vmatprep.subr.bf16.mxu0 0
      %1026 = vmatpush2.bf16.msra.mxu0 0
      %1027 = vmatprep.subr.bf16.mxu0 0
      %1028 = vmatpush2.bf16.msra.mxu0 0
      %1029 = vmatprep.subr.bf16.mxu0 0
      %1030 = vmatpush2.bf16.msra.mxu0 0
      %1031 = vmatprep.subr.bf16.mxu0 0
      %1032 = vmatpush2.bf16.msra.mxu0 0
      %1033 = vmatprep.subr.bf16.mxu0 0
      %1034 = vmatpush2.bf16.msra.mxu0 0
      %1035 = vmatprep.subr.bf16.mxu0 0
      %1036 = vmatpush2.bf16.msra.mxu0 0
      %1037 = vmatprep.mubr.bf16.mxu0 0
      %1038 = vmatmul.mubr.bf16.gmra.mxu0 %v479
      %v1039 = vpop.f32.mrf.mxu0
      %v1040 = vadd.f32 %v991, %v1039
      %v1041 = vpop.f32.mrf.mxu0
      %v1042 = vpop.f32.mrf.mxu0
      %v1043 = vadd.f32 %v991, %v1042
      %v1044 = vpop.f32.mrf.mxu0
      %1045 = vmatprep.mubr.bf16.mxu0 0
      %1046 = vmatmul.mubr.bf16.gmra.mxu0 %v482
      %v1047 = vpop.f32.mrf.mxu0
      %v1048 = vadd.f32 %v991, %v1047
      %v1049 = vpop.f32.mrf.mxu0
      %v1050 = vpop.f32.mrf.mxu0
      %v1051 = vpop.f32.mrf.mxu0
      %1052 = vdwg.mxu0
      %v1053 = vmul.f32 %v1040, 0.35355338
      %v1054 = vmul.f32 %v1043, 0.35355338
      %v1055 = vmul.f32 %v1048, 0.35355338
      %s1056 = scalar_lea.vmem %s4, 16
      %v1057 = vld [vmem:[%s1056] sm:$0xf]
      %v1058 = vld [vmem:[%s1056 + $0x4] sm:$0xf]
      %v1059 = vld [vmem:[%s1056 + $0x8] sm:$0xf]
      %v1060 = vld [vmem:[%s1056 + $0xc] sm:$0xf]
      %s1061 = scalar_lea.vmem %s7, 1
      %v1062 = vld [vmem:[%s1061] sm:$0x1]
      %v1064 = vlaneseq
      %v1065 = vshrl.u32 %v1064, 7
      %v1066 = vsub.s32 0, %v1065
      %v1067 = vrot.slane %v1062, %v1066
      %v1073 = vunpack.c.l.b16 %v1057
      %v1074 = vunpack.c.l.b16 %v1058
      %v1075 = vunpack.c.l.b16 %v1059
      %v1076 = vunpack.c.l.b16 %v1060
      %v1077 = vpack.c.b16 %v1074, %v1073
      %v1078 = vpack.c.b16 %v1076, %v1075
      %1081 = vmatprep.subr.bf16.mxu0 0
      %1082 = vmatpush1.bf16.msra.mxu0 0
      %1083 = vmatprep.subr.bf16.mxu0 0
      %1084 = vmatpush1.bf16.msra.mxu0 0
      %1085 = vmatprep.subr.bf16.mxu0 0
      %1086 = vmatpush1.bf16.msra.mxu0 0
      %1087 = vmatprep.subr.bf16.mxu0 0
      %1088 = vmatpush1.bf16.msra.mxu0 0
      %1089 = vmatprep.subr.bf16.mxu0 0
      %1090 = vmatpush1.bf16.msra.mxu0 0
      %1091 = vmatprep.subr.bf16.mxu0 0
      %1092 = vmatpush1.bf16.msra.mxu0 0
      %1093 = vmatprep.subr.bf16.mxu0 0
      %1094 = vmatpush1.bf16.msra.mxu0 %v1078
      %1095 = vmatprep.subr.bf16.mxu0 0
      %1096 = vmatpush1.bf16.msra.mxu0 %v1077
      %1097 = vmatprep.subr.bf16.mxu0 0
      %1098 = vmatpush2.bf16.msra.mxu0 0
      %1099 = vmatprep.subr.bf16.mxu0 0
      %1100 = vmatpush2.bf16.msra.mxu0 0
      %1101 = vmatprep.subr.bf16.mxu0 0
      %1102 = vmatpush2.bf16.msra.mxu0 0
      %1103 = vmatprep.subr.bf16.mxu0 0
      %1104 = vmatpush2.bf16.msra.mxu0 0
      %1105 = vmatprep.subr.bf16.mxu0 0
      %1106 = vmatpush2.bf16.msra.mxu0 0
      %1107 = vmatprep.subr.bf16.mxu0 0
      %1108 = vmatpush2.bf16.msra.mxu0 0
      %1109 = vmatprep.subr.bf16.mxu0 0
      %1110 = vmatpush2.bf16.msra.mxu0 0
      %1111 = vmatprep.subr.bf16.mxu0 0
      %1112 = vmatpush2.bf16.msra.mxu0 0
      %1113 = vmatprep.mubr.bf16.mxu0 0
      %1114 = vmatmul.mubr.bf16.gmra.mxu0 %v479
      %v1115 = vpop.f32.mrf.mxu0
      %v1116 = vadd.f32 %v1067, %v1115
      %v1117 = vpop.f32.mrf.mxu0
      %v1118 = vpop.f32.mrf.mxu0
      %v1119 = vadd.f32 %v1067, %v1118
      %v1120 = vpop.f32.mrf.mxu0
      %1121 = vmatprep.mubr.bf16.mxu0 0
      %1122 = vmatmul.mubr.bf16.gmra.mxu0 %v482
      %v1123 = vpop.f32.mrf.mxu0
      %v1124 = vadd.f32 %v1067, %v1123
      %v1125 = vpop.f32.mrf.mxu0
      %v1126 = vpop.f32.mrf.mxu0
      %v1127 = vpop.f32.mrf.mxu0
      %1128 = vdwg.mxu0
      %v1130 = vsel %vm677, %v1053, 0
      %v1133 = vsel %vm677, %v1054, 0
      %v1136 = vsel %vm677, %v1055, 0
      %v1139 = vsel %vm677, %v1116, 0
      %v1142 = vsel %vm677, %v1119, 0
      %v1145 = vsel %vm677, %v1124, 0
      %1147 = vmatprep.subr.mxu0 0.0
      %1148 = vmatpush1.xpose.msra.mxu0 0.0
      %1149 = vmatprep.subr.mxu0 0.0
      %1150 = vmatpush1.xpose.msra.mxu0 0.0
      %1151 = vmatprep.subr.mxu0 0.0
      %1152 = vmatpush1.xpose.msra.mxu0 0.0
      %1153 = vmatprep.subr.mxu0 0.0
      %1154 = vmatpush1.xpose.msra.mxu0 0.0
      %1155 = vmatprep.subr.mxu0 0.0
      %1156 = vmatpush1.xpose.msra.mxu0 0.0
      %1157 = vmatprep.subr.mxu0 0.0
      %1158 = vmatpush1.xpose.msra.mxu0 0.0
      %1159 = vmatprep.subr.mxu0 0.0
      %1160 = vmatpush1.xpose.msra.mxu0 0.0
      %1161 = vmatprep.subr.mxu0 0.0
      %1162 = vmatpush1.xpose.msra.mxu0 0.0
      %1163 = vmatprep.subr.mxu0 0.0
      %1164 = vmatpush1.xpose.msra.mxu0 0.0
      %1165 = vmatprep.subr.mxu0 0.0
      %1166 = vmatpush1.xpose.msra.mxu0 0.0
      %1167 = vmatprep.subr.mxu0 0.0
      %1168 = vmatpush1.xpose.msra.mxu0 0.0
      %1169 = vmatprep.subr.mxu0 0.0
      %1170 = vmatpush1.xpose.msra.mxu0 0.0
      %1171 = vmatprep.subr.mxu0 0.0
      %1172 = vmatpush1.xpose.msra.mxu0 0.0
      %1173 = vmatprep.subr.mxu0 0.0
      %1174 = vmatpush1.xpose.msra.mxu0 %v1145
      %1175 = vmatprep.subr.mxu0 0.0
      %1176 = vmatpush1.xpose.msra.mxu0 %v1142
      %1177 = vmatprep.subr.mxu0 0.0
      %1178 = vmatpush1.xpose.msra.mxu0 %v1139
      %1179 = vmatprep.subr.mxu0 0.0
      %1180 = vmatpush2.xpose.msra.mxu0 0.0
      %1181 = vmatprep.subr.mxu0 0.0
      %1182 = vmatpush2.xpose.msra.mxu0 0.0
      %1183 = vmatprep.subr.mxu0 0.0
      %1184 = vmatpush2.xpose.msra.mxu0 0.0
      %1185 = vmatprep.subr.mxu0 0.0
      %1186 = vmatpush2.xpose.msra.mxu0 0.0
      %1187 = vmatprep.subr.mxu0 0.0
      %1188 = vmatpush2.xpose.msra.mxu0 0.0
      %1189 = vmatprep.subr.mxu0 0.0
      %1190 = vmatpush2.xpose.msra.mxu0 0.0
      %1191 = vmatprep.subr.mxu0 0.0
      %1192 = vmatpush2.xpose.msra.mxu0 0.0
      %1193 = vmatprep.subr.mxu0 0.0
      %1194 = vmatpush2.xpose.msra.mxu0 0.0
      %1195 = vmatprep.subr.mxu0 0.0
      %1196 = vmatpush2.xpose.msra.mxu0 0.0
      %1197 = vmatprep.subr.mxu0 0.0
      %1198 = vmatpush2.xpose.msra.mxu0 0.0
      %1199 = vmatprep.subr.mxu0 0.0
      %1200 = vmatpush2.xpose.msra.mxu0 0.0
      %1201 = vmatprep.subr.mxu0 0.0
      %1202 = vmatpush2.xpose.msra.mxu0 0.0
      %1203 = vmatprep.subr.mxu0 0.0
      %1204 = vmatpush2.xpose.msra.mxu0 0.0
      %1205 = vmatprep.subr.mxu0 0.0
      %1206 = vmatpush2.xpose.msra.mxu0 0.0
      %1207 = vmatprep.subr.mxu0 0.0
      %1208 = vmatpush2.xpose.msra.mxu0 0.0
      %1209 = vmatprep.subr.mxu0 0.0
      %1210 = vmatpush2.xpose.msra.mxu0 0.0
      %1211 = vmatprep.mubr.f32.mxu0 0.0
      %1212 = vmatmul.mubr.f32.gmra.mxu0 %v1130
      %v1213 = vpop.f32.mrf.mxu0
      %v1214 = vadd.f32 0.0, %v1213
      %v1215 = vpop.f32.mrf.mxu0
      %1216 = vmatprep.mubr.f32.mxu0 0.0
      %1217 = vmatmul.mubr.f32.gmra.mxu0 %v1133
      %v1218 = vpop.f32.mrf.mxu0
      %v1219 = vadd.f32 0.0, %v1218
      %v1220 = vpop.f32.mrf.mxu0
      %1221 = vmatprep.mubr.f32.mxu0 0.0
      %1222 = vmatmul.mubr.f32.gmra.mxu0 %v1136
      %v1223 = vpop.f32.mrf.mxu0
      %v1224 = vadd.f32 0.0, %v1223
      %v1225 = vpop.f32.mrf.mxu0
      %1226 = vdwg.mxu0
      %v1227 = vsel %vm776, %v1214, -inf
      %1228 = vmax.xlane.f32.xlu0 %v1227
      %v1229 = vpop.xlane.xlu0 %1228
      %v1230 = vsel %vm776, %v1219, -inf
      %1231 = vmax.xlane.f32.xlu0 %v1230
      %v1232 = vpop.xlane.xlu0 %1231
      %v1233 = vsel %vm783, %v1224, -inf
      %1234 = vmax.xlane.f32.xlu0 %v1233
      %v1235 = vpop.xlane.xlu0 %1234
      %v1236 = vsub.f32 %v1214, %v1229
      %v1237 = vsub.f32 %v1219, %v1232
      %v1238 = vsub.f32 %v1224, %v1235
      %v1239 = vmul.f32 %v1236, 1.442695
      %v1240 = vpow.pop %v1239
      %v1241 = vmul.f32 %v1237, 1.442695
      %v1242 = vpow.pop %v1241
      %v1243 = vmul.f32 %v1238, 1.442695
      %v1244 = vpow.pop %v1243
      %v1245 = vsel %vm776, %v1240, 0.0
      %1246 = vadd.xlane.f32.xlu0 %v1245
      %v1247 = vpop.xlane.xlu0 %1246
      %v1248 = vsel %vm776, %v1242, 0.0
      %1249 = vadd.xlane.f32.xlu0 %v1248
      %v1250 = vpop.xlane.xlu0 %1249
      %v1251 = vsel %vm783, %v1244, 0.0
      %1252 = vadd.xlane.f32.xlu0 %v1251
      %v1253 = vpop.xlane.xlu0 %1252
      %v1254 = vrcp.pop %v1247
      %v1255 = vrcp.pop %v1250
      %v1256 = vrcp.pop %v1253
      %v1257 = vmul.f32 %v1240, %v1254
      %v1258 = vmul.f32 %v1242, %v1255
      %v1259 = vmul.f32 %v1244, %v1256
      %v1261 = vsel %vm776, %v1257, 0
      %v1264 = vsel %vm776, %v1258, 0
      %v1267 = vsel %vm776, %v1259, 0
      %v1270 = vsel %vm820, %v975, 0
      %1272 = vmatprep.subr.mxu0 0.0
      %1273 = vmatpush1.msra.mxu0 0.0
      %1274 = vmatprep.subr.mxu0 0.0
      %1275 = vmatpush1.msra.mxu0 0.0
      %1276 = vmatprep.subr.mxu0 0.0
      %1277 = vmatpush1.msra.mxu0 0.0
      %1278 = vmatprep.subr.mxu0 0.0
      %1279 = vmatpush1.msra.mxu0 0.0
      %1280 = vmatprep.subr.mxu0 0.0
      %1281 = vmatpush1.msra.mxu0 0.0
      %1282 = vmatprep.subr.mxu0 0.0
      %1283 = vmatpush1.msra.mxu0 0.0
      %1284 = vmatprep.subr.mxu0 0.0
      %1285 = vmatpush1.msra.mxu0 0.0
      %1286 = vmatprep.subr.mxu0 0.0
      %1287 = vmatpush1.msra.mxu0 0.0
      %1288 = vmatprep.subr.mxu0 0.0
      %1289 = vmatpush1.msra.mxu0 0.0
      %1290 = vmatprep.subr.mxu0 0.0
      %1291 = vmatpush1.msra.mxu0 0.0
      %1292 = vmatprep.subr.mxu0 0.0
      %1293 = vmatpush1.msra.mxu0 0.0
      %1294 = vmatprep.subr.mxu0 0.0
      %1295 = vmatpush1.msra.mxu0 0.0
      %1296 = vmatprep.subr.mxu0 0.0
      %1297 = vmatpush1.msra.mxu0 0.0
      %1298 = vmatprep.subr.mxu0 0.0
      %1299 = vmatpush1.msra.mxu0 %v1270
      %1300 = vmatprep.subr.mxu0 0.0
      %1301 = vmatpush1.msra.mxu0 %v970
      %1302 = vmatprep.subr.mxu0 0.0
      %1303 = vmatpush1.msra.mxu0 %v967
      %1304 = vmatprep.subr.mxu0 0.0
      %1305 = vmatpush2.msra.mxu0 0.0
      %1306 = vmatprep.subr.mxu0 0.0
      %1307 = vmatpush2.msra.mxu0 0.0
      %1308 = vmatprep.subr.mxu0 0.0
      %1309 = vmatpush2.msra.mxu0 0.0
      %1310 = vmatprep.subr.mxu0 0.0
      %1311 = vmatpush2.msra.mxu0 0.0
      %1312 = vmatprep.subr.mxu0 0.0
      %1313 = vmatpush2.msra.mxu0 0.0
      %1314 = vmatprep.subr.mxu0 0.0
      %1315 = vmatpush2.msra.mxu0 0.0
      %1316 = vmatprep.subr.mxu0 0.0
      %1317 = vmatpush2.msra.mxu0 0.0
      %1318 = vmatprep.subr.mxu0 0.0
      %1319 = vmatpush2.msra.mxu0 0.0
      %1320 = vmatprep.subr.mxu0 0.0
      %1321 = vmatpush2.msra.mxu0 0.0
      %1322 = vmatprep.subr.mxu0 0.0
      %1323 = vmatpush2.msra.mxu0 0.0
      %1324 = vmatprep.subr.mxu0 0.0
      %1325 = vmatpush2.msra.mxu0 0.0
      %1326 = vmatprep.subr.mxu0 0.0
      %1327 = vmatpush2.msra.mxu0 0.0
      %1328 = vmatprep.subr.mxu0 0.0
      %1329 = vmatpush2.msra.mxu0 0.0
      %1330 = vmatprep.subr.mxu0 0.0
      %1331 = vmatpush2.msra.mxu0 0.0
      %1332 = vmatprep.subr.mxu0 0.0
      %1333 = vmatpush2.msra.mxu0 0.0
      %1334 = vmatprep.subr.mxu0 0.0
      %1335 = vmatpush2.msra.mxu0 0.0
      %1336 = vmatprep.mubr.f32.mxu0 0.0
      %1337 = vmatmul.mubr.f32.gmra.mxu0 %v1261
      %v1338 = vpop.f32.mrf.mxu0
      %v1339 = vadd.f32 0.0, %v1338
      %v1340 = vpop.f32.mrf.mxu0
      %1341 = vmatprep.mubr.f32.mxu0 0.0
      %1342 = vmatmul.mubr.f32.gmra.mxu0 %v1264
      %v1343 = vpop.f32.mrf.mxu0
      %v1344 = vadd.f32 0.0, %v1343
      %v1345 = vpop.f32.mrf.mxu0
      %1346 = vmatprep.mubr.f32.mxu0 0.0
      %1347 = vmatmul.mubr.f32.gmra.mxu0 %v1267
      %v1348 = vpop.f32.mrf.mxu0
      %v1349 = vadd.f32 0.0, %v1348
      %v1350 = vpop.f32.mrf.mxu0
      %1351 = vdwg.mxu0
      %v1352 = vpack.c.bf16 %v1344, %v1339
      %v1353 = vpack.c.bf16 %v1349, %v1349
      %s1354 = scalar_lea.vmem %s9, 4
      %v1355 = vld [vmem:[%s1354] sm:$0xf]
      %v1357 = vsel %vm677, %v1352, 0
      %v1360 = vsel %vm677, %v1353, 0
      %vm1362 = vcmask 1043456
      %v1364 = vsel %vm1362, %v1355, 0
      %1366 = vmatprep.subr.bf16.mxu0 0
      %1367 = vmatpush1.bf16.msra.mxu0 0
      %1368 = vmatprep.subr.bf16.mxu0 0
      %1369 = vmatpush1.bf16.msra.mxu0 0
      %1370 = vmatprep.subr.bf16.mxu0 0
      %1371 = vmatpush1.bf16.msra.mxu0 0
      %1372 = vmatprep.subr.bf16.mxu0 0
      %1373 = vmatpush1.bf16.msra.mxu0 0
      %1374 = vmatprep.subr.bf16.mxu0 0
      %1375 = vmatpush1.bf16.msra.mxu0 0
      %1376 = vmatprep.subr.bf16.mxu0 0
      %1377 = vmatpush1.bf16.msra.mxu0 0
      %1378 = vmatprep.subr.bf16.mxu0 0
      %1379 = vmatpush1.bf16.msra.mxu0 0
      %1380 = vmatprep.subr.bf16.mxu0 0
      %1381 = vmatpush1.bf16.msra.mxu0 %v1364
      %1382 = vmatprep.subr.bf16.mxu0 0
      %1383 = vmatpush2.bf16.msra.mxu0 0
      %1384 = vmatprep.subr.bf16.mxu0 0
      %1385 = vmatpush2.bf16.msra.mxu0 0
      %1386 = vmatprep.subr.bf16.mxu0 0
      %1387 = vmatpush2.bf16.msra.mxu0 0
      %1388 = vmatprep.subr.bf16.mxu0 0
      %1389 = vmatpush2.bf16.msra.mxu0 0
      %1390 = vmatprep.subr.bf16.mxu0 0
      %1391 = vmatpush2.bf16.msra.mxu0 0
      %1392 = vmatprep.subr.bf16.mxu0 0
      %1393 = vmatpush2.bf16.msra.mxu0 0
      %1394 = vmatprep.subr.bf16.mxu0 0
      %1395 = vmatpush2.bf16.msra.mxu0 0
      %1396 = vmatprep.subr.bf16.mxu0 0
      %1397 = vmatpush2.bf16.msra.mxu0 0
      %1398 = vmatprep.mubr.bf16.mxu0 0
      %1399 = vmatmul.mubr.bf16.gmra.mxu0 %v1357
      %v1400 = vpop.f32.mrf.mxu0
      %v1401 = vadd.f32 0.0, %v1400
      %v1402 = vpop.f32.mrf.mxu0
      %v1403 = vpop.f32.mrf.mxu0
      %v1404 = vadd.f32 0.0, %v1403
      %v1405 = vpop.f32.mrf.mxu0
      %1406 = vmatprep.mubr.bf16.mxu0 0
      %1407 = vmatmul.mubr.bf16.gmra.mxu0 %v1360
      %v1408 = vpop.f32.mrf.mxu0
      %v1409 = vadd.f32 0.0, %v1408
      %v1410 = vpop.f32.mrf.mxu0
      %v1411 = vpop.f32.mrf.mxu0
      %v1412 = vpop.f32.mrf.mxu0
      %1413 = vdwg.mxu0
      %v1415 = vsel %vm677, %v904, 0
      %v1418 = vsel %vm677, %v905, 0
      %v1421 = vsel %vm1362, %v906, 0
      %1423 = vmatprep.subr.bf16.mxu0 0
      %1424 = vmatpush1.bf16.msra.mxu0 0
      %1425 = vmatprep.subr.bf16.mxu0 0
      %1426 = vmatpush1.bf16.msra.mxu0 0
      %1427 = vmatprep.subr.bf16.mxu0 0
      %1428 = vmatpush1.bf16.msra.mxu0 0
      %1429 = vmatprep.subr.bf16.mxu0 0
      %1430 = vmatpush1.bf16.msra.mxu0 0
      %1431 = vmatprep.subr.bf16.mxu0 0
      %1432 = vmatpush1.bf16.msra.mxu0 0
      %1433 = vmatprep.subr.bf16.mxu0 0
      %1434 = vmatpush1.bf16.msra.mxu0 0
      %1435 = vmatprep.subr.bf16.mxu0 0
      %1436 = vmatpush1.bf16.msra.mxu0 0
      %1437 = vmatprep.subr.bf16.mxu0 0
      %1438 = vmatpush1.bf16.msra.mxu0 %v1421
      %1439 = vmatprep.subr.bf16.mxu0 0
      %1440 = vmatpush2.bf16.msra.mxu0 0
      %1441 = vmatprep.subr.bf16.mxu0 0
      %1442 = vmatpush2.bf16.msra.mxu0 0
      %1443 = vmatprep.subr.bf16.mxu0 0
      %1444 = vmatpush2.bf16.msra.mxu0 0
      %1445 = vmatprep.subr.bf16.mxu0 0
      %1446 = vmatpush2.bf16.msra.mxu0 0
      %1447 = vmatprep.subr.bf16.mxu0 0
      %1448 = vmatpush2.bf16.msra.mxu0 0
      %1449 = vmatprep.subr.bf16.mxu0 0
      %1450 = vmatpush2.bf16.msra.mxu0 0
      %1451 = vmatprep.subr.bf16.mxu0 0
      %1452 = vmatpush2.bf16.msra.mxu0 0
      %1453 = vmatprep.subr.bf16.mxu0 0
      %1454 = vmatpush2.bf16.msra.mxu0 0
      %1455 = vmatprep.mubr.bf16.mxu0 0
      %1456 = vmatmul.mubr.bf16.gmra.mxu0 %v1415
      %v1457 = vpop.f32.mrf.mxu0
      %v1458 = vadd.f32 %v1401, %v1457
      %v1459 = vpop.f32.mrf.mxu0
      %v1460 = vpop.f32.mrf.mxu0
      %v1461 = vadd.f32 %v1404, %v1460
      %v1462 = vpop.f32.mrf.mxu0
      %1463 = vmatprep.mubr.bf16.mxu0 0
      %1464 = vmatmul.mubr.bf16.gmra.mxu0 %v1418
      %v1465 = vpop.f32.mrf.mxu0
      %v1466 = vadd.f32 %v1409, %v1465
      %v1467 = vpop.f32.mrf.mxu0
      %v1468 = vpop.f32.mrf.mxu0
      %v1469 = vpop.f32.mrf.mxu0
      %1470 = vdwg.mxu0
      %s1471 = scalar_lea.vmem %s5, 32
      %v1472 = vld [vmem:[%s1471] sm:$0xf]
      %v1473 = vld [vmem:[%s1471 + $0x4] sm:$0xf]
      %v1474 = vld [vmem:[%s1471 + $0x8] sm:$0xf]
      %v1475 = vld [vmem:[%s1471 + $0xc] sm:$0xf]
      %s1476 = scalar_lea.vmem %s8, 2
      %v1477 = vld [vmem:[%s1476] sm:$0x1]
      %v1479 = vlaneseq
      %v1480 = vshrl.u32 %v1479, 7
      %v1481 = vsub.s32 0, %v1480
      %v1482 = vrot.slane %v1477, %v1481
      %v1488 = vunpack.c.l.b16 %v1472
      %v1489 = vunpack.c.l.b16 %v1473
      %v1490 = vunpack.c.l.b16 %v1474
      %v1491 = vunpack.c.l.b16 %v1475
      %v1492 = vpack.c.b16 %v1489, %v1488
      %v1493 = vpack.c.b16 %v1491, %v1490
      %1496 = vmatprep.subr.bf16.mxu0 0
      %1497 = vmatpush1.bf16.msra.mxu0 0
      %1498 = vmatprep.subr.bf16.mxu0 0
      %1499 = vmatpush1.bf16.msra.mxu0 0
      %1500 = vmatprep.subr.bf16.mxu0 0
      %1501 = vmatpush1.bf16.msra.mxu0 0
      %1502 = vmatprep.subr.bf16.mxu0 0
      %1503 = vmatpush1.bf16.msra.mxu0 0
      %1504 = vmatprep.subr.bf16.mxu0 0
      %1505 = vmatpush1.bf16.msra.mxu0 0
      %1506 = vmatprep.subr.bf16.mxu0 0
      %1507 = vmatpush1.bf16.msra.mxu0 0
      %1508 = vmatprep.subr.bf16.mxu0 0
      %1509 = vmatpush1.bf16.msra.mxu0 %v1493
      %1510 = vmatprep.subr.bf16.mxu0 0
      %1511 = vmatpush1.bf16.msra.mxu0 %v1492
      %1512 = vmatprep.subr.bf16.mxu0 0
      %1513 = vmatpush2.bf16.msra.mxu0 0
      %1514 = vmatprep.subr.bf16.mxu0 0
      %1515 = vmatpush2.bf16.msra.mxu0 0
      %1516 = vmatprep.subr.bf16.mxu0 0
      %1517 = vmatpush2.bf16.msra.mxu0 0
      %1518 = vmatprep.subr.bf16.mxu0 0
      %1519 = vmatpush2.bf16.msra.mxu0 0
      %1520 = vmatprep.subr.bf16.mxu0 0
      %1521 = vmatpush2.bf16.msra.mxu0 0
      %1522 = vmatprep.subr.bf16.mxu0 0
      %1523 = vmatpush2.bf16.msra.mxu0 0
      %1524 = vmatprep.subr.bf16.mxu0 0
      %1525 = vmatpush2.bf16.msra.mxu0 0
      %1526 = vmatprep.subr.bf16.mxu0 0
      %1527 = vmatpush2.bf16.msra.mxu0 0
      %1528 = vmatprep.mubr.bf16.mxu0 0
      %1529 = vmatmul.mubr.bf16.gmra.mxu0 %v479
      %v1530 = vpop.f32.mrf.mxu0
      %v1531 = vadd.f32 %v1482, %v1530
      %v1532 = vpop.f32.mrf.mxu0
      %v1533 = vpop.f32.mrf.mxu0
      %v1534 = vadd.f32 %v1482, %v1533
      %v1535 = vpop.f32.mrf.mxu0
      %1536 = vmatprep.mubr.bf16.mxu0 0
      %1537 = vmatmul.mubr.bf16.gmra.mxu0 %v482
      %v1538 = vpop.f32.mrf.mxu0
      %v1539 = vadd.f32 %v1482, %v1538
      %v1540 = vpop.f32.mrf.mxu0
      %v1541 = vpop.f32.mrf.mxu0
      %v1542 = vpop.f32.mrf.mxu0
      %1543 = vdwg.mxu0
      %s1544 = scalar_lea.vmem %s3, 32
      %v1545 = vld [vmem:[%s1544] sm:$0xf]
      %v1546 = vld [vmem:[%s1544 + $0x4] sm:$0xf]
      %v1547 = vld [vmem:[%s1544 + $0x8] sm:$0xf]
      %v1548 = vld [vmem:[%s1544 + $0xc] sm:$0xf]
      %s1549 = scalar_lea.vmem %s6, 2
      %v1550 = vld [vmem:[%s1549] sm:$0x1]
      %v1552 = vlaneseq
      %v1553 = vshrl.u32 %v1552, 7
      %v1554 = vsub.s32 0, %v1553
      %v1555 = vrot.slane %v1550, %v1554
      %v1561 = vunpack.c.l.b16 %v1545
      %v1562 = vunpack.c.l.b16 %v1546
      %v1563 = vunpack.c.l.b16 %v1547
      %v1564 = vunpack.c.l.b16 %v1548
      %v1565 = vpack.c.b16 %v1562, %v1561
      %v1566 = vpack.c.b16 %v1564, %v1563
      %1569 = vmatprep.subr.bf16.mxu0 0
      %1570 = vmatpush1.bf16.msra.mxu0 0
      %1571 = vmatprep.subr.bf16.mxu0 0
      %1572 = vmatpush1.bf16.msra.mxu0 0
      %1573 = vmatprep.subr.bf16.mxu0 0
      %1574 = vmatpush1.bf16.msra.mxu0 0
      %1575 = vmatprep.subr.bf16.mxu0 0
      %1576 = vmatpush1.bf16.msra.mxu0 0
      %1577 = vmatprep.subr.bf16.mxu0 0
      %1578 = vmatpush1.bf16.msra.mxu0 0
      %1579 = vmatprep.subr.bf16.mxu0 0
      %1580 = vmatpush1.bf16.msra.mxu0 0
      %1581 = vmatprep.subr.bf16.mxu0 0
      %1582 = vmatpush1.bf16.msra.mxu0 %v1566
      %1583 = vmatprep.subr.bf16.mxu0 0
      %1584 = vmatpush1.bf16.msra.mxu0 %v1565
      %1585 = vmatprep.subr.bf16.mxu0 0
      %1586 = vmatpush2.bf16.msra.mxu0 0
      %1587 = vmatprep.subr.bf16.mxu0 0
      %1588 = vmatpush2.bf16.msra.mxu0 0
      %1589 = vmatprep.subr.bf16.mxu0 0
      %1590 = vmatpush2.bf16.msra.mxu0 0
      %1591 = vmatprep.subr.bf16.mxu0 0
      %1592 = vmatpush2.bf16.msra.mxu0 0
      %1593 = vmatprep.subr.bf16.mxu0 0
      %1594 = vmatpush2.bf16.msra.mxu0 0
      %1595 = vmatprep.subr.bf16.mxu0 0
      %1596 = vmatpush2.bf16.msra.mxu0 0
      %1597 = vmatprep.subr.bf16.mxu0 0
      %1598 = vmatpush2.bf16.msra.mxu0 0
      %1599 = vmatprep.subr.bf16.mxu0 0
      %1600 = vmatpush2.bf16.msra.mxu0 0
      %1601 = vmatprep.mubr.bf16.mxu0 0
      %1602 = vmatmul.mubr.bf16.gmra.mxu0 %v479
      %v1603 = vpop.f32.mrf.mxu0
      %v1604 = vadd.f32 %v1555, %v1603
      %v1605 = vpop.f32.mrf.mxu0
      %v1606 = vpop.f32.mrf.mxu0
      %v1607 = vadd.f32 %v1555, %v1606
      %v1608 = vpop.f32.mrf.mxu0
      %1609 = vmatprep.mubr.bf16.mxu0 0
      %1610 = vmatmul.mubr.bf16.gmra.mxu0 %v482
      %v1611 = vpop.f32.mrf.mxu0
      %v1612 = vadd.f32 %v1555, %v1611
      %v1613 = vpop.f32.mrf.mxu0
      %v1614 = vpop.f32.mrf.mxu0
      %v1615 = vpop.f32.mrf.mxu0
      %1616 = vdwg.mxu0
      %v1617 = vmul.f32 %v1604, 0.35355338
      %v1618 = vmul.f32 %v1607, 0.35355338
      %v1619 = vmul.f32 %v1612, 0.35355338
      %s1620 = scalar_lea.vmem %s4, 32
      %v1621 = vld [vmem:[%s1620] sm:$0xf]
      %v1622 = vld [vmem:[%s1620 + $0x4] sm:$0xf]
      %v1623 = vld [vmem:[%s1620 + $0x8] sm:$0xf]
      %v1624 = vld [vmem:[%s1620 + $0xc] sm:$0xf]
      %s1625 = scalar_lea.vmem %s7, 2
      %v1626 = vld [vmem:[%s1625] sm:$0x1]
      %v1628 = vlaneseq
      %v1629 = vshrl.u32 %v1628, 7
      %v1630 = vsub.s32 0, %v1629
      %v1631 = vrot.slane %v1626, %v1630
      %v1637 = vunpack.c.l.b16 %v1621
      %v1638 = vunpack.c.l.b16 %v1622
      %v1639 = vunpack.c.l.b16 %v1623
      %v1640 = vunpack.c.l.b16 %v1624
      %v1641 = vpack.c.b16 %v1638, %v1637
      %v1642 = vpack.c.b16 %v1640, %v1639
      %1645 = vmatprep.subr.bf16.mxu0 0
      %1646 = vmatpush1.bf16.msra.mxu0 0
      %1647 = vmatprep.subr.bf16.mxu0 0
      %1648 = vmatpush1.bf16.msra.mxu0 0
      %1649 = vmatprep.subr.bf16.mxu0 0
      %1650 = vmatpush1.bf16.msra.mxu0 0
      %1651 = vmatprep.subr.bf16.mxu0 0
      %1652 = vmatpush1.bf16.msra.mxu0 0
      %1653 = vmatprep.subr.bf16.mxu0 0
      %1654 = vmatpush1.bf16.msra.mxu0 0
      %1655 = vmatprep.subr.bf16.mxu0 0
      %1656 = vmatpush1.bf16.msra.mxu0 0
      %1657 = vmatprep.subr.bf16.mxu0 0
      %1658 = vmatpush1.bf16.msra.mxu0 %v1642
      %1659 = vmatprep.subr.bf16.mxu0 0
      %1660 = vmatpush1.bf16.msra.mxu0 %v1641
      %1661 = vmatprep.subr.bf16.mxu0 0
      %1662 = vmatpush2.bf16.msra.mxu0 0
      %1663 = vmatprep.subr.bf16.mxu0 0
      %1664 = vmatpush2.bf16.msra.mxu0 0
      %1665 = vmatprep.subr.bf16.mxu0 0
      %1666 = vmatpush2.bf16.msra.mxu0 0
      %1667 = vmatprep.subr.bf16.mxu0 0
      %1668 = vmatpush2.bf16.msra.mxu0 0
      %1669 = vmatprep.subr.bf16.mxu0 0
      %1670 = vmatpush2.bf16.msra.mxu0 0
      %1671 = vmatprep.subr.bf16.mxu0 0
      %1672 = vmatpush2.bf16.msra.mxu0 0
      %1673 = vmatprep.subr.bf16.mxu0 0
      %1674 = vmatpush2.bf16.msra.mxu0 0
      %1675 = vmatprep.subr.bf16.mxu0 0
      %1676 = vmatpush2.bf16.msra.mxu0 0
      %1677 = vmatprep.mubr.bf16.mxu0 0
      %1678 = vmatmul.mubr.bf16.gmra.mxu0 %v479
      %v1679 = vpop.f32.mrf.mxu0
      %v1680 = vadd.f32 %v1631, %v1679
      %v1681 = vpop.f32.mrf.mxu0
      %v1682 = vpop.f32.mrf.mxu0
      %v1683 = vadd.f32 %v1631, %v1682
      %v1684 = vpop.f32.mrf.mxu0
      %1685 = vmatprep.mubr.bf16.mxu0 0
      %1686 = vmatmul.mubr.bf16.gmra.mxu0 %v482
      %v1687 = vpop.f32.mrf.mxu0
      %v1688 = vadd.f32 %v1631, %v1687
      %v1689 = vpop.f32.mrf.mxu0
      %v1690 = vpop.f32.mrf.mxu0
      %v1691 = vpop.f32.mrf.mxu0
      %1692 = vdwg.mxu0
      %v1694 = vsel %vm677, %v1617, 0
      %v1697 = vsel %vm677, %v1618, 0
      %v1700 = vsel %vm677, %v1619, 0
      %v1703 = vsel %vm677, %v1680, 0
      %v1706 = vsel %vm677, %v1683, 0
      %v1709 = vsel %vm677, %v1688, 0
      %1711 = vmatprep.subr.mxu0 0.0
      %1712 = vmatpush1.xpose.msra.mxu0 0.0
      %1713 = vmatprep.subr.mxu0 0.0
      %1714 = vmatpush1.xpose.msra.mxu0 0.0
      %1715 = vmatprep.subr.mxu0 0.0
      %1716 = vmatpush1.xpose.msra.mxu0 0.0
      %1717 = vmatprep.subr.mxu0 0.0
      %1718 = vmatpush1.xpose.msra.mxu0 0.0
      %1719 = vmatprep.subr.mxu0 0.0
      %1720 = vmatpush1.xpose.msra.mxu0 0.0
      %1721 = vmatprep.subr.mxu0 0.0
      %1722 = vmatpush1.xpose.msra.mxu0 0.0
      %1723 = vmatprep.subr.mxu0 0.0
      %1724 = vmatpush1.xpose.msra.mxu0 0.0
      %1725 = vmatprep.subr.mxu0 0.0
      %1726 = vmatpush1.xpose.msra.mxu0 0.0
      %1727 = vmatprep.subr.mxu0 0.0
      %1728 = vmatpush1.xpose.msra.mxu0 0.0
      %1729 = vmatprep.subr.mxu0 0.0
      %1730 = vmatpush1.xpose.msra.mxu0 0.0
      %1731 = vmatprep.subr.mxu0 0.0
      %1732 = vmatpush1.xpose.msra.mxu0 0.0
      %1733 = vmatprep.subr.mxu0 0.0
      %1734 = vmatpush1.xpose.msra.mxu0 0.0
      %1735 = vmatprep.subr.mxu0 0.0
      %1736 = vmatpush1.xpose.msra.mxu0 0.0
      %1737 = vmatprep.subr.mxu0 0.0
      %1738 = vmatpush1.xpose.msra.mxu0 %v1709
      %1739 = vmatprep.subr.mxu0 0.0
      %1740 = vmatpush1.xpose.msra.mxu0 %v1706
      %1741 = vmatprep.subr.mxu0 0.0
      %1742 = vmatpush1.xpose.msra.mxu0 %v1703
      %1743 = vmatprep.subr.mxu0 0.0
      %1744 = vmatpush2.xpose.msra.mxu0 0.0
      %1745 = vmatprep.subr.mxu0 0.0
      %1746 = vmatpush2.xpose.msra.mxu0 0.0
      %1747 = vmatprep.subr.mxu0 0.0
      %1748 = vmatpush2.xpose.msra.mxu0 0.0
      %1749 = vmatprep.subr.mxu0 0.0
      %1750 = vmatpush2.xpose.msra.mxu0 0.0
      %1751 = vmatprep.subr.mxu0 0.0
      %1752 = vmatpush2.xpose.msra.mxu0 0.0
      %1753 = vmatprep.subr.mxu0 0.0
      %1754 = vmatpush2.xpose.msra.mxu0 0.0
      %1755 = vmatprep.subr.mxu0 0.0
      %1756 = vmatpush2.xpose.msra.mxu0 0.0
      %1757 = vmatprep.subr.mxu0 0.0
      %1758 = vmatpush2.xpose.msra.mxu0 0.0
      %1759 = vmatprep.subr.mxu0 0.0
      %1760 = vmatpush2.xpose.msra.mxu0 0.0
      %1761 = vmatprep.subr.mxu0 0.0
      %1762 = vmatpush2.xpose.msra.mxu0 0.0
      %1763 = vmatprep.subr.mxu0 0.0
      %1764 = vmatpush2.xpose.msra.mxu0 0.0
      %1765 = vmatprep.subr.mxu0 0.0
      %1766 = vmatpush2.xpose.msra.mxu0 0.0
      %1767 = vmatprep.subr.mxu0 0.0
      %1768 = vmatpush2.xpose.msra.mxu0 0.0
      %1769 = vmatprep.subr.mxu0 0.0
      %1770 = vmatpush2.xpose.msra.mxu0 0.0
      %1771 = vmatprep.subr.mxu0 0.0
      %1772 = vmatpush2.xpose.msra.mxu0 0.0
      %1773 = vmatprep.subr.mxu0 0.0
      %1774 = vmatpush2.xpose.msra.mxu0 0.0
      %1775 = vmatprep.mubr.f32.mxu0 0.0
      %1776 = vmatmul.mubr.f32.gmra.mxu0 %v1694
      %v1777 = vpop.f32.mrf.mxu0
      %v1778 = vadd.f32 0.0, %v1777
      %v1779 = vpop.f32.mrf.mxu0
      %1780 = vmatprep.mubr.f32.mxu0 0.0
      %1781 = vmatmul.mubr.f32.gmra.mxu0 %v1697
      %v1782 = vpop.f32.mrf.mxu0
      %v1783 = vadd.f32 0.0, %v1782
      %v1784 = vpop.f32.mrf.mxu0
      %1785 = vmatprep.mubr.f32.mxu0 0.0
      %1786 = vmatmul.mubr.f32.gmra.mxu0 %v1700
      %v1787 = vpop.f32.mrf.mxu0
      %v1788 = vadd.f32 0.0, %v1787
      %v1789 = vpop.f32.mrf.mxu0
      %1790 = vdwg.mxu0
      %v1791 = vsel %vm776, %v1778, -inf
      %1792 = vmax.xlane.f32.xlu0 %v1791
      %v1793 = vpop.xlane.xlu0 %1792
      %v1794 = vsel %vm776, %v1783, -inf
      %1795 = vmax.xlane.f32.xlu0 %v1794
      %v1796 = vpop.xlane.xlu0 %1795
      %v1797 = vsel %vm783, %v1788, -inf
      %1798 = vmax.xlane.f32.xlu0 %v1797
      %v1799 = vpop.xlane.xlu0 %1798
      %v1800 = vsub.f32 %v1778, %v1793
      %v1801 = vsub.f32 %v1783, %v1796
      %v1802 = vsub.f32 %v1788, %v1799
      %v1803 = vmul.f32 %v1800, 1.442695
      %v1804 = vpow.pop %v1803
      %v1805 = vmul.f32 %v1801, 1.442695
      %v1806 = vpow.pop %v1805
      %v1807 = vmul.f32 %v1802, 1.442695
      %v1808 = vpow.pop %v1807
      %v1809 = vsel %vm776, %v1804, 0.0
      %1810 = vadd.xlane.f32.xlu0 %v1809
      %v1811 = vpop.xlane.xlu0 %1810
      %v1812 = vsel %vm776, %v1806, 0.0
      %1813 = vadd.xlane.f32.xlu0 %v1812
      %v1814 = vpop.xlane.xlu0 %1813
      %v1815 = vsel %vm783, %v1808, 0.0
      %1816 = vadd.xlane.f32.xlu0 %v1815
      %v1817 = vpop.xlane.xlu0 %1816
      %v1818 = vrcp.pop %v1811
      %v1819 = vrcp.pop %v1814
      %v1820 = vrcp.pop %v1817
      %v1821 = vmul.f32 %v1804, %v1818
      %v1822 = vmul.f32 %v1806, %v1819
      %v1823 = vmul.f32 %v1808, %v1820
      %v1825 = vsel %vm776, %v1821, 0
      %v1828 = vsel %vm776, %v1822, 0
      %v1831 = vsel %vm776, %v1823, 0
      %v1834 = vsel %vm820, %v1539, 0
      %1836 = vmatprep.subr.mxu0 0.0
      %1837 = vmatpush1.msra.mxu0 0.0
      %1838 = vmatprep.subr.mxu0 0.0
      %1839 = vmatpush1.msra.mxu0 0.0
      %1840 = vmatprep.subr.mxu0 0.0
      %1841 = vmatpush1.msra.mxu0 0.0
      %1842 = vmatprep.subr.mxu0 0.0
      %1843 = vmatpush1.msra.mxu0 0.0
      %1844 = vmatprep.subr.mxu0 0.0
      %1845 = vmatpush1.msra.mxu0 0.0
      %1846 = vmatprep.subr.mxu0 0.0
      %1847 = vmatpush1.msra.mxu0 0.0
      %1848 = vmatprep.subr.mxu0 0.0
      %1849 = vmatpush1.msra.mxu0 0.0
      %1850 = vmatprep.subr.mxu0 0.0
      %1851 = vmatpush1.msra.mxu0 0.0
      %1852 = vmatprep.subr.mxu0 0.0
      %1853 = vmatpush1.msra.mxu0 0.0
      %1854 = vmatprep.subr.mxu0 0.0
      %1855 = vmatpush1.msra.mxu0 0.0
      %1856 = vmatprep.subr.mxu0 0.0
      %1857 = vmatpush1.msra.mxu0 0.0
      %1858 = vmatprep.subr.mxu0 0.0
      %1859 = vmatpush1.msra.mxu0 0.0
      %1860 = vmatprep.subr.mxu0 0.0
      %1861 = vmatpush1.msra.mxu0 0.0
      %1862 = vmatprep.subr.mxu0 0.0
      %1863 = vmatpush1.msra.mxu0 %v1834
      %1864 = vmatprep.subr.mxu0 0.0
      %1865 = vmatpush1.msra.mxu0 %v1534
      %1866 = vmatprep.subr.mxu0 0.0
      %1867 = vmatpush1.msra.mxu0 %v1531
      %1868 = vmatprep.subr.mxu0 0.0
      %1869 = vmatpush2.msra.mxu0 0.0
      %1870 = vmatprep.subr.mxu0 0.0
      %1871 = vmatpush2.msra.mxu0 0.0
      %1872 = vmatprep.subr.mxu0 0.0
      %1873 = vmatpush2.msra.mxu0 0.0
      %1874 = vmatprep.subr.mxu0 0.0
      %1875 = vmatpush2.msra.mxu0 0.0
      %1876 = vmatprep.subr.mxu0 0.0
      %1877 = vmatpush2.msra.mxu0 0.0
      %1878 = vmatprep.subr.mxu0 0.0
      %1879 = vmatpush2.msra.mxu0 0.0
      %1880 = vmatprep.subr.mxu0 0.0
      %1881 = vmatpush2.msra.mxu0 0.0
      %1882 = vmatprep.subr.mxu0 0.0
      %1883 = vmatpush2.msra.mxu0 0.0
      %1884 = vmatprep.subr.mxu0 0.0
      %1885 = vmatpush2.msra.mxu0 0.0
      %1886 = vmatprep.subr.mxu0 0.0
      %1887 = vmatpush2.msra.mxu0 0.0
      %1888 = vmatprep.subr.mxu0 0.0
      %1889 = vmatpush2.msra.mxu0 0.0
      %1890 = vmatprep.subr.mxu0 0.0
      %1891 = vmatpush2.msra.mxu0 0.0
      %1892 = vmatprep.subr.mxu0 0.0
      %1893 = vmatpush2.msra.mxu0 0.0
      %1894 = vmatprep.subr.mxu0 0.0
      %1895 = vmatpush2.msra.mxu0 0.0
      %1896 = vmatprep.subr.mxu0 0.0
      %1897 = vmatpush2.msra.mxu0 0.0
      %1898 = vmatprep.subr.mxu0 0.0
      %1899 = vmatpush2.msra.mxu0 0.0
      %1900 = vmatprep.mubr.f32.mxu0 0.0
      %1901 = vmatmul.mubr.f32.gmra.mxu0 %v1825
      %v1902 = vpop.f32.mrf.mxu0
      %v1903 = vadd.f32 0.0, %v1902
      %v1904 = vpop.f32.mrf.mxu0
      %1905 = vmatprep.mubr.f32.mxu0 0.0
      %1906 = vmatmul.mubr.f32.gmra.mxu0 %v1828
      %v1907 = vpop.f32.mrf.mxu0
      %v1908 = vadd.f32 0.0, %v1907
      %v1909 = vpop.f32.mrf.mxu0
      %1910 = vmatprep.mubr.f32.mxu0 0.0
      %1911 = vmatmul.mubr.f32.gmra.mxu0 %v1831
      %v1912 = vpop.f32.mrf.mxu0
      %v1913 = vadd.f32 0.0, %v1912
      %v1914 = vpop.f32.mrf.mxu0
      %1915 = vdwg.mxu0
      %v1916 = vpack.c.bf16 %v1908, %v1903
      %v1917 = vpack.c.bf16 %v1913, %v1913
      %s1918 = scalar_lea.vmem %s9, 8
      %v1919 = vld [vmem:[%s1918] sm:$0xf]
      %v1921 = vsel %vm677, %v1916, 0
      %v1924 = vsel %vm677, %v1917, 0
      %v1927 = vsel %vm1362, %v1919, 0
      %1929 = vmatprep.subr.bf16.mxu0 0
      %1930 = vmatpush1.bf16.msra.mxu0 0
      %1931 = vmatprep.subr.bf16.mxu0 0
      %1932 = vmatpush1.bf16.msra.mxu0 0
      %1933 = vmatprep.subr.bf16.mxu0 0
      %1934 = vmatpush1.bf16.msra.mxu0 0
      %1935 = vmatprep.subr.bf16.mxu0 0
      %1936 = vmatpush1.bf16.msra.mxu0 0
      %1937 = vmatprep.subr.bf16.mxu0 0
      %1938 = vmatpush1.bf16.msra.mxu0 0
      %1939 = vmatprep.subr.bf16.mxu0 0
      %1940 = vmatpush1.bf16.msra.mxu0 0
      %1941 = vmatprep.subr.bf16.mxu0 0
      %1942 = vmatpush1.bf16.msra.mxu0 0
      %1943 = vmatprep.subr.bf16.mxu0 0
      %1944 = vmatpush1.bf16.msra.mxu0 %v1927
      %1945 = vmatprep.subr.bf16.mxu0 0
      %1946 = vmatpush2.bf16.msra.mxu0 0
      %1947 = vmatprep.subr.bf16.mxu0 0
      %1948 = vmatpush2.bf16.msra.mxu0 0
      %1949 = vmatprep.subr.bf16.mxu0 0
      %1950 = vmatpush2.bf16.msra.mxu0 0
      %1951 = vmatprep.subr.bf16.mxu0 0
      %1952 = vmatpush2.bf16.msra.mxu0 0
      %1953 = vmatprep.subr.bf16.mxu0 0
      %1954 = vmatpush2.bf16.msra.mxu0 0
      %1955 = vmatprep.subr.bf16.mxu0 0
      %1956 = vmatpush2.bf16.msra.mxu0 0
      %1957 = vmatprep.subr.bf16.mxu0 0
      %1958 = vmatpush2.bf16.msra.mxu0 0
      %1959 = vmatprep.subr.bf16.mxu0 0
      %1960 = vmatpush2.bf16.msra.mxu0 0
      %1961 = vmatprep.mubr.bf16.mxu0 0
      %1962 = vmatmul.mubr.bf16.gmra.mxu0 %v1921
      %v1963 = vpop.f32.mrf.mxu0
      %v1964 = vadd.f32 0.0, %v1963
      %v1965 = vpop.f32.mrf.mxu0
      %v1966 = vpop.f32.mrf.mxu0
      %v1967 = vadd.f32 0.0, %v1966
      %v1968 = vpop.f32.mrf.mxu0
      %1969 = vmatprep.mubr.bf16.mxu0 0
      %1970 = vmatmul.mubr.bf16.gmra.mxu0 %v1924
      %v1971 = vpop.f32.mrf.mxu0
      %v1972 = vadd.f32 0.0, %v1971
      %v1973 = vpop.f32.mrf.mxu0
      %v1974 = vpop.f32.mrf.mxu0
      %v1975 = vpop.f32.mrf.mxu0
      %1976 = vdwg.mxu0
      %v1977 = vadd.f32 %v1458, %v1964
      %v1978 = vadd.f32 %v1461, %v1967
      %v1979 = vadd.f32 %v1466, %v1972
      %s1980 = scalar_lea.vmem %s5, 48
      %v1981 = vld [vmem:[%s1980] sm:$0xf]
      %v1982 = vld [vmem:[%s1980 + $0x4] sm:$0xf]
      %v1983 = vld [vmem:[%s1980 + $0x8] sm:$0xf]
      %v1984 = vld [vmem:[%s1980 + $0xc] sm:$0xf]
      %s1985 = scalar_lea.vmem %s8, 3
      %v1986 = vld [vmem:[%s1985] sm:$0x1]
      %v1988 = vlaneseq
      %v1989 = vshrl.u32 %v1988, 7
      %v1990 = vsub.s32 0, %v1989
      %v1991 = vrot.slane %v1986, %v1990
      %v1997 = vunpack.c.l.b16 %v1981
      %v1998 = vunpack.c.l.b16 %v1982
      %v1999 = vunpack.c.l.b16 %v1983
      %v2000 = vunpack.c.l.b16 %v1984
      %v2001 = vpack.c.b16 %v1998, %v1997
      %v2002 = vpack.c.b16 %v2000, %v1999
      %2005 = vmatprep.subr.bf16.mxu0 0
      %2006 = vmatpush1.bf16.msra.mxu0 0
      %2007 = vmatprep.subr.bf16.mxu0 0
      %2008 = vmatpush1.bf16.msra.mxu0 0
      %2009 = vmatprep.subr.bf16.mxu0 0
      %2010 = vmatpush1.bf16.msra.mxu0 0
      %2011 = vmatprep.subr.bf16.mxu0 0
      %2012 = vmatpush1.bf16.msra.mxu0 0
      %2013 = vmatprep.subr.bf16.mxu0 0
      %2014 = vmatpush1.bf16.msra.mxu0 0
      %2015 = vmatprep.subr.bf16.mxu0 0
      %2016 = vmatpush1.bf16.msra.mxu0 0
      %2017 = vmatprep.subr.bf16.mxu0 0
      %2018 = vmatpush1.bf16.msra.mxu0 %v2002
      %2019 = vmatprep.subr.bf16.mxu0 0
      %2020 = vmatpush1.bf16.msra.mxu0 %v2001
      %2021 = vmatprep.subr.bf16.mxu0 0
      %2022 = vmatpush2.bf16.msra.mxu0 0
      %2023 = vmatprep.subr.bf16.mxu0 0
      %2024 = vmatpush2.bf16.msra.mxu0 0
      %2025 = vmatprep.subr.bf16.mxu0 0
      %2026 = vmatpush2.bf16.msra.mxu0 0
      %2027 = vmatprep.subr.bf16.mxu0 0
      %2028 = vmatpush2.bf16.msra.mxu0 0
      %2029 = vmatprep.subr.bf16.mxu0 0
      %2030 = vmatpush2.bf16.msra.mxu0 0
      %2031 = vmatprep.subr.bf16.mxu0 0
      %2032 = vmatpush2.bf16.msra.mxu0 0
      %2033 = vmatprep.subr.bf16.mxu0 0
      %2034 = vmatpush2.bf16.msra.mxu0 0
      %2035 = vmatprep.subr.bf16.mxu0 0
      %2036 = vmatpush2.bf16.msra.mxu0 0
      %2037 = vmatprep.mubr.bf16.mxu0 0
      %2038 = vmatmul.mubr.bf16.gmra.mxu0 %v479
      %v2039 = vpop.f32.mrf.mxu0
      %v2040 = vadd.f32 %v1991, %v2039
      %v2041 = vpop.f32.mrf.mxu0
      %v2042 = vpop.f32.mrf.mxu0
      %v2043 = vadd.f32 %v1991, %v2042
      %v2044 = vpop.f32.mrf.mxu0
      %2045 = vmatprep.mubr.bf16.mxu0 0
      %2046 = vmatmul.mubr.bf16.gmra.mxu0 %v482
      %v2047 = vpop.f32.mrf.mxu0
      %v2048 = vadd.f32 %v1991, %v2047
      %v2049 = vpop.f32.mrf.mxu0
      %v2050 = vpop.f32.mrf.mxu0
      %v2051 = vpop.f32.mrf.mxu0
      %2052 = vdwg.mxu0
      %s2053 = scalar_lea.vmem %s3, 48
      %v2054 = vld [vmem:[%s2053] sm:$0xf]
      %v2055 = vld [vmem:[%s2053 + $0x4] sm:$0xf]
      %v2056 = vld [vmem:[%s2053 + $0x8] sm:$0xf]
      %v2057 = vld [vmem:[%s2053 + $0xc] sm:$0xf]
      %s2058 = scalar_lea.vmem %s6, 3
      %v2059 = vld [vmem:[%s2058] sm:$0x1]
      %v2061 = vlaneseq
      %v2062 = vshrl.u32 %v2061, 7
      %v2063 = vsub.s32 0, %v2062
      %v2064 = vrot.slane %v2059, %v2063
      %v2070 = vunpack.c.l.b16 %v2054
      %v2071 = vunpack.c.l.b16 %v2055
      %v2072 = vunpack.c.l.b16 %v2056
      %v2073 = vunpack.c.l.b16 %v2057
      %v2074 = vpack.c.b16 %v2071, %v2070
      %v2075 = vpack.c.b16 %v2073, %v2072
      %2078 = vmatprep.subr.bf16.mxu0 0
      %2079 = vmatpush1.bf16.msra.mxu0 0
      %2080 = vmatprep.subr.bf16.mxu0 0
      %2081 = vmatpush1.bf16.msra.mxu0 0
      %2082 = vmatprep.subr.bf16.mxu0 0
      %2083 = vmatpush1.bf16.msra.mxu0 0
      %2084 = vmatprep.subr.bf16.mxu0 0
      %2085 = vmatpush1.bf16.msra.mxu0 0
      %2086 = vmatprep.subr.bf16.mxu0 0
      %2087 = vmatpush1.bf16.msra.mxu0 0
      %2088 = vmatprep.subr.bf16.mxu0 0
      %2089 = vmatpush1.bf16.msra.mxu0 0
      %2090 = vmatprep.subr.bf16.mxu0 0
      %2091 = vmatpush1.bf16.msra.mxu0 %v2075
      %2092 = vmatprep.subr.bf16.mxu0 0
      %2093 = vmatpush1.bf16.msra.mxu0 %v2074
      %2094 = vmatprep.subr.bf16.mxu0 0
      %2095 = vmatpush2.bf16.msra.mxu0 0
      %2096 = vmatprep.subr.bf16.mxu0 0
      %2097 = vmatpush2.bf16.msra.mxu0 0
      %2098 = vmatprep.subr.bf16.mxu0 0
      %2099 = vmatpush2.bf16.msra.mxu0 0
      %2100 = vmatprep.subr.bf16.mxu0 0
      %2101 = vmatpush2.bf16.msra.mxu0 0
      %2102 = vmatprep.subr.bf16.mxu0 0
      %2103 = vmatpush2.bf16.msra.mxu0 0
      %2104 = vmatprep.subr.bf16.mxu0 0
      %2105 = vmatpush2.bf16.msra.mxu0 0
      %2106 = vmatprep.subr.bf16.mxu0 0
      %2107 = vmatpush2.bf16.msra.mxu0 0
      %2108 = vmatprep.subr.bf16.mxu0 0
      %2109 = vmatpush2.bf16.msra.mxu0 0
      %2110 = vmatprep.mubr.bf16.mxu0 0
      %2111 = vmatmul.mubr.bf16.gmra.mxu0 %v479
      %v2112 = vpop.f32.mrf.mxu0
      %v2113 = vadd.f32 %v2064, %v2112
      %v2114 = vpop.f32.mrf.mxu0
      %v2115 = vpop.f32.mrf.mxu0
      %v2116 = vadd.f32 %v2064, %v2115
      %v2117 = vpop.f32.mrf.mxu0
      %2118 = vmatprep.mubr.bf16.mxu0 0
      %2119 = vmatmul.mubr.bf16.gmra.mxu0 %v482
      %v2120 = vpop.f32.mrf.mxu0
      %v2121 = vadd.f32 %v2064, %v2120
      %v2122 = vpop.f32.mrf.mxu0
      %v2123 = vpop.f32.mrf.mxu0
      %v2124 = vpop.f32.mrf.mxu0
      %2125 = vdwg.mxu0
      %v2126 = vmul.f32 %v2113, 0.35355338
      %v2127 = vmul.f32 %v2116, 0.35355338
      %v2128 = vmul.f32 %v2121, 0.35355338
      %s2129 = scalar_lea.vmem %s4, 48
      %v2130 = vld [vmem:[%s2129] sm:$0xf]
      %v2131 = vld [vmem:[%s2129 + $0x4] sm:$0xf]
      %v2132 = vld [vmem:[%s2129 + $0x8] sm:$0xf]
      %v2133 = vld [vmem:[%s2129 + $0xc] sm:$0xf]
      %s2134 = scalar_lea.vmem %s7, 3
      %v2135 = vld [vmem:[%s2134] sm:$0x1]
      %v2137 = vlaneseq
      %v2138 = vshrl.u32 %v2137, 7
      %v2139 = vsub.s32 0, %v2138
      %v2140 = vrot.slane %v2135, %v2139
      %v2146 = vunpack.c.l.b16 %v2130
      %v2147 = vunpack.c.l.b16 %v2131
      %v2148 = vunpack.c.l.b16 %v2132
      %v2149 = vunpack.c.l.b16 %v2133
      %v2150 = vpack.c.b16 %v2147, %v2146
      %v2151 = vpack.c.b16 %v2149, %v2148
      %2154 = vmatprep.subr.bf16.mxu0 0
      %2155 = vmatpush1.bf16.msra.mxu0 0
      %2156 = vmatprep.subr.bf16.mxu0 0
      %2157 = vmatpush1.bf16.msra.mxu0 0
      %2158 = vmatprep.subr.bf16.mxu0 0
      %2159 = vmatpush1.bf16.msra.mxu0 0
      %2160 = vmatprep.subr.bf16.mxu0 0
      %2161 = vmatpush1.bf16.msra.mxu0 0
      %2162 = vmatprep.subr.bf16.mxu0 0
      %2163 = vmatpush1.bf16.msra.mxu0 0
      %2164 = vmatprep.subr.bf16.mxu0 0
      %2165 = vmatpush1.bf16.msra.mxu0 0
      %2166 = vmatprep.subr.bf16.mxu0 0
      %2167 = vmatpush1.bf16.msra.mxu0 %v2151
      %2168 = vmatprep.subr.bf16.mxu0 0
      %2169 = vmatpush1.bf16.msra.mxu0 %v2150
      %2170 = vmatprep.subr.bf16.mxu0 0
      %2171 = vmatpush2.bf16.msra.mxu0 0
      %2172 = vmatprep.subr.bf16.mxu0 0
      %2173 = vmatpush2.bf16.msra.mxu0 0
      %2174 = vmatprep.subr.bf16.mxu0 0
      %2175 = vmatpush2.bf16.msra.mxu0 0
      %2176 = vmatprep.subr.bf16.mxu0 0
      %2177 = vmatpush2.bf16.msra.mxu0 0
      %2178 = vmatprep.subr.bf16.mxu0 0
      %2179 = vmatpush2.bf16.msra.mxu0 0
      %2180 = vmatprep.subr.bf16.mxu0 0
      %2181 = vmatpush2.bf16.msra.mxu0 0
      %2182 = vmatprep.subr.bf16.mxu0 0
      %2183 = vmatpush2.bf16.msra.mxu0 0
      %2184 = vmatprep.subr.bf16.mxu0 0
      %2185 = vmatpush2.bf16.msra.mxu0 0
      %2186 = vmatprep.mubr.bf16.mxu0 0
      %2187 = vmatmul.mubr.bf16.gmra.mxu0 %v479
      %v2188 = vpop.f32.mrf.mxu0
      %v2189 = vadd.f32 %v2140, %v2188
      %v2190 = vpop.f32.mrf.mxu0
      %v2191 = vpop.f32.mrf.mxu0
      %v2192 = vadd.f32 %v2140, %v2191
      %v2193 = vpop.f32.mrf.mxu0
      %2194 = vmatprep.mubr.bf16.mxu0 0
      %2195 = vmatmul.mubr.bf16.gmra.mxu0 %v482
      %v2196 = vpop.f32.mrf.mxu0
      %v2197 = vadd.f32 %v2140, %v2196
      %v2198 = vpop.f32.mrf.mxu0
      %v2199 = vpop.f32.mrf.mxu0
      %v2200 = vpop.f32.mrf.mxu0
      %2201 = vdwg.mxu0
      %v2203 = vsel %vm677, %v2126, 0
      %v2206 = vsel %vm677, %v2127, 0
      %v2209 = vsel %vm677, %v2128, 0
      %v2212 = vsel %vm677, %v2189, 0
      %v2215 = vsel %vm677, %v2192, 0
      %v2218 = vsel %vm677, %v2197, 0
      %2220 = vmatprep.subr.mxu0 0.0
      %2221 = vmatpush1.xpose.msra.mxu0 0.0
      %2222 = vmatprep.subr.mxu0 0.0
      %2223 = vmatpush1.xpose.msra.mxu0 0.0
      %2224 = vmatprep.subr.mxu0 0.0
      %2225 = vmatpush1.xpose.msra.mxu0 0.0
      %2226 = vmatprep.subr.mxu0 0.0
      %2227 = vmatpush1.xpose.msra.mxu0 0.0
      %2228 = vmatprep.subr.mxu0 0.0
      %2229 = vmatpush1.xpose.msra.mxu0 0.0
      %2230 = vmatprep.subr.mxu0 0.0
      %2231 = vmatpush1.xpose.msra.mxu0 0.0
      %2232 = vmatprep.subr.mxu0 0.0
      %2233 = vmatpush1.xpose.msra.mxu0 0.0
      %2234 = vmatprep.subr.mxu0 0.0
      %2235 = vmatpush1.xpose.msra.mxu0 0.0
      %2236 = vmatprep.subr.mxu0 0.0
      %2237 = vmatpush1.xpose.msra.mxu0 0.0
      %2238 = vmatprep.subr.mxu0 0.0
      %2239 = vmatpush1.xpose.msra.mxu0 0.0
      %2240 = vmatprep.subr.mxu0 0.0
      %2241 = vmatpush1.xpose.msra.mxu0 0.0
      %2242 = vmatprep.subr.mxu0 0.0
      %2243 = vmatpush1.xpose.msra.mxu0 0.0
      %2244 = vmatprep.subr.mxu0 0.0
      %2245 = vmatpush1.xpose.msra.mxu0 0.0
      %2246 = vmatprep.subr.mxu0 0.0
      %2247 = vmatpush1.xpose.msra.mxu0 %v2218
      %2248 = vmatprep.subr.mxu0 0.0
      %2249 = vmatpush1.xpose.msra.mxu0 %v2215
      %2250 = vmatprep.subr.mxu0 0.0
      %2251 = vmatpush1.xpose.msra.mxu0 %v2212
      %2252 = vmatprep.subr.mxu0 0.0
      %2253 = vmatpush2.xpose.msra.mxu0 0.0
      %2254 = vmatprep.subr.mxu0 0.0
      %2255 = vmatpush2.xpose.msra.mxu0 0.0
      %2256 = vmatprep.subr.mxu0 0.0
      %2257 = vmatpush2.xpose.msra.mxu0 0.0
      %2258 = vmatprep.subr.mxu0 0.0
      %2259 = vmatpush2.xpose.msra.mxu0 0.0
      %2260 = vmatprep.subr.mxu0 0.0
      %2261 = vmatpush2.xpose.msra.mxu0 0.0
      %2262 = vmatprep.subr.mxu0 0.0
      %2263 = vmatpush2.xpose.msra.mxu0 0.0
      %2264 = vmatprep.subr.mxu0 0.0
      %2265 = vmatpush2.xpose.msra.mxu0 0.0
      %2266 = vmatprep.subr.mxu0 0.0
      %2267 = vmatpush2.xpose.msra.mxu0 0.0
      %2268 = vmatprep.subr.mxu0 0.0
      %2269 = vmatpush2.xpose.msra.mxu0 0.0
      %2270 = vmatprep.subr.mxu0 0.0
      %2271 = vmatpush2.xpose.msra.mxu0 0.0
      %2272 = vmatprep.subr.mxu0 0.0
      %2273 = vmatpush2.xpose.msra.mxu0 0.0
      %2274 = vmatprep.subr.mxu0 0.0
      %2275 = vmatpush2.xpose.msra.mxu0 0.0
      %2276 = vmatprep.subr.mxu0 0.0
      %2277 = vmatpush2.xpose.msra.mxu0 0.0
      %2278 = vmatprep.subr.mxu0 0.0
      %2279 = vmatpush2.xpose.msra.mxu0 0.0
      %2280 = vmatprep.subr.mxu0 0.0
      %2281 = vmatpush2.xpose.msra.mxu0 0.0
      %2282 = vmatprep.subr.mxu0 0.0
      %2283 = vmatpush2.xpose.msra.mxu0 0.0
      %2284 = vmatprep.mubr.f32.mxu0 0.0
      %2285 = vmatmul.mubr.f32.gmra.mxu0 %v2203
      %v2286 = vpop.f32.mrf.mxu0
      %v2287 = vadd.f32 0.0, %v2286
      %v2288 = vpop.f32.mrf.mxu0
      %2289 = vmatprep.mubr.f32.mxu0 0.0
      %2290 = vmatmul.mubr.f32.gmra.mxu0 %v2206
      %v2291 = vpop.f32.mrf.mxu0
      %v2292 = vadd.f32 0.0, %v2291
      %v2293 = vpop.f32.mrf.mxu0
      %2294 = vmatprep.mubr.f32.mxu0 0.0
      %2295 = vmatmul.mubr.f32.gmra.mxu0 %v2209
      %v2296 = vpop.f32.mrf.mxu0
      %v2297 = vadd.f32 0.0, %v2296
      %v2298 = vpop.f32.mrf.mxu0
      %2299 = vdwg.mxu0
      %v2300 = vsel %vm776, %v2287, -inf
      %2301 = vmax.xlane.f32.xlu0 %v2300
      %v2302 = vpop.xlane.xlu0 %2301
      %v2303 = vsel %vm776, %v2292, -inf
      %2304 = vmax.xlane.f32.xlu0 %v2303
      %v2305 = vpop.xlane.xlu0 %2304
      %v2306 = vsel %vm783, %v2297, -inf
      %2307 = vmax.xlane.f32.xlu0 %v2306
      %v2308 = vpop.xlane.xlu0 %2307
      %v2309 = vsub.f32 %v2287, %v2302
      %v2310 = vsub.f32 %v2292, %v2305
      %v2311 = vsub.f32 %v2297, %v2308
      %v2312 = vmul.f32 %v2309, 1.442695
      %v2313 = vpow.pop %v2312
      %v2314 = vmul.f32 %v2310, 1.442695
      %v2315 = vpow.pop %v2314
      %v2316 = vmul.f32 %v2311, 1.442695
      %v2317 = vpow.pop %v2316
      %v2318 = vsel %vm776, %v2313, 0.0
      %2319 = vadd.xlane.f32.xlu0 %v2318
      %v2320 = vpop.xlane.xlu0 %2319
      %v2321 = vsel %vm776, %v2315, 0.0
      %2322 = vadd.xlane.f32.xlu0 %v2321
      %v2323 = vpop.xlane.xlu0 %2322
      %v2324 = vsel %vm783, %v2317, 0.0
      %2325 = vadd.xlane.f32.xlu0 %v2324
      %v2326 = vpop.xlane.xlu0 %2325
      %v2327 = vrcp.pop %v2320
      %v2328 = vrcp.pop %v2323
      %v2329 = vrcp.pop %v2326
      %v2330 = vmul.f32 %v2313, %v2327
      %v2331 = vmul.f32 %v2315, %v2328
      %v2332 = vmul.f32 %v2317, %v2329
      %v2334 = vsel %vm776, %v2330, 0
      %v2337 = vsel %vm776, %v2331, 0
      %v2340 = vsel %vm776, %v2332, 0
      %v2343 = vsel %vm820, %v2048, 0
      %2345 = vmatprep.subr.mxu0 0.0
      %2346 = vmatpush1.msra.mxu0 0.0
      %2347 = vmatprep.subr.mxu0 0.0
      %2348 = vmatpush1.msra.mxu0 0.0
      %2349 = vmatprep.subr.mxu0 0.0
      %2350 = vmatpush1.msra.mxu0 0.0
      %2351 = vmatprep.subr.mxu0 0.0
      %2352 = vmatpush1.msra.mxu0 0.0
      %2353 = vmatprep.subr.mxu0 0.0
      %2354 = vmatpush1.msra.mxu0 0.0
      %2355 = vmatprep.subr.mxu0 0.0
      %2356 = vmatpush1.msra.mxu0 0.0
      %2357 = vmatprep.subr.mxu0 0.0
      %2358 = vmatpush1.msra.mxu0 0.0
      %2359 = vmatprep.subr.mxu0 0.0
      %2360 = vmatpush1.msra.mxu0 0.0
      %2361 = vmatprep.subr.mxu0 0.0
      %2362 = vmatpush1.msra.mxu0 0.0
      %2363 = vmatprep.subr.mxu0 0.0
      %2364 = vmatpush1.msra.mxu0 0.0
      %2365 = vmatprep.subr.mxu0 0.0
      %2366 = vmatpush1.msra.mxu0 0.0
      %2367 = vmatprep.subr.mxu0 0.0
      %2368 = vmatpush1.msra.mxu0 0.0
      %2369 = vmatprep.subr.mxu0 0.0
      %2370 = vmatpush1.msra.mxu0 0.0
      %2371 = vmatprep.subr.mxu0 0.0
      %2372 = vmatpush1.msra.mxu0 %v2343
      %2373 = vmatprep.subr.mxu0 0.0
      %2374 = vmatpush1.msra.mxu0 %v2043
      %2375 = vmatprep.subr.mxu0 0.0
      %2376 = vmatpush1.msra.mxu0 %v2040
      %2377 = vmatprep.subr.mxu0 0.0
      %2378 = vmatpush2.msra.mxu0 0.0
      %2379 = vmatprep.subr.mxu0 0.0
      %2380 = vmatpush2.msra.mxu0 0.0
      %2381 = vmatprep.subr.mxu0 0.0
      %2382 = vmatpush2.msra.mxu0 0.0
      %2383 = vmatprep.subr.mxu0 0.0
      %2384 = vmatpush2.msra.mxu0 0.0
      %2385 = vmatprep.subr.mxu0 0.0
      %2386 = vmatpush2.msra.mxu0 0.0
      %2387 = vmatprep.subr.mxu0 0.0
      %2388 = vmatpush2.msra.mxu0 0.0
      %2389 = vmatprep.subr.mxu0 0.0
      %2390 = vmatpush2.msra.mxu0 0.0
      %2391 = vmatprep.subr.mxu0 0.0
      %2392 = vmatpush2.msra.mxu0 0.0
      %2393 = vmatprep.subr.mxu0 0.0
      %2394 = vmatpush2.msra.mxu0 0.0
      %2395 = vmatprep.subr.mxu0 0.0
      %2396 = vmatpush2.msra.mxu0 0.0
      %2397 = vmatprep.subr.mxu0 0.0
      %2398 = vmatpush2.msra.mxu0 0.0
      %2399 = vmatprep.subr.mxu0 0.0
      %2400 = vmatpush2.msra.mxu0 0.0
      %2401 = vmatprep.subr.mxu0 0.0
      %2402 = vmatpush2.msra.mxu0 0.0
      %2403 = vmatprep.subr.mxu0 0.0
      %2404 = vmatpush2.msra.mxu0 0.0
      %2405 = vmatprep.subr.mxu0 0.0
      %2406 = vmatpush2.msra.mxu0 0.0
      %2407 = vmatprep.subr.mxu0 0.0
      %2408 = vmatpush2.msra.mxu0 0.0
      %2409 = vmatprep.mubr.f32.mxu0 0.0
      %2410 = vmatmul.mubr.f32.gmra.mxu0 %v2334
      %v2411 = vpop.f32.mrf.mxu0
      %v2412 = vadd.f32 0.0, %v2411
      %v2413 = vpop.f32.mrf.mxu0
      %2414 = vmatprep.mubr.f32.mxu0 0.0
      %2415 = vmatmul.mubr.f32.gmra.mxu0 %v2337
      %v2416 = vpop.f32.mrf.mxu0
      %v2417 = vadd.f32 0.0, %v2416
      %v2418 = vpop.f32.mrf.mxu0
      %2419 = vmatprep.mubr.f32.mxu0 0.0
      %2420 = vmatmul.mubr.f32.gmra.mxu0 %v2340
      %v2421 = vpop.f32.mrf.mxu0
      %v2422 = vadd.f32 0.0, %v2421
      %v2423 = vpop.f32.mrf.mxu0
      %2424 = vdwg.mxu0
      %v2425 = vpack.c.bf16 %v2417, %v2412
      %v2426 = vpack.c.bf16 %v2422, %v2422
      %s2427 = scalar_lea.vmem %s9, 12
      %v2428 = vld [vmem:[%s2427] sm:$0xf]
      %v2430 = vsel %vm677, %v2425, 0
      %v2433 = vsel %vm677, %v2426, 0
      %v2436 = vsel %vm1362, %v2428, 0
      %2438 = vmatprep.subr.bf16.mxu0 0
      %2439 = vmatpush1.bf16.msra.mxu0 0
      %2440 = vmatprep.subr.bf16.mxu0 0
      %2441 = vmatpush1.bf16.msra.mxu0 0
      %2442 = vmatprep.subr.bf16.mxu0 0
      %2443 = vmatpush1.bf16.msra.mxu0 0
      %2444 = vmatprep.subr.bf16.mxu0 0
      %2445 = vmatpush1.bf16.msra.mxu0 0
      %2446 = vmatprep.subr.bf16.mxu0 0
      %2447 = vmatpush1.bf16.msra.mxu0 0
      %2448 = vmatprep.subr.bf16.mxu0 0
      %2449 = vmatpush1.bf16.msra.mxu0 0
      %2450 = vmatprep.subr.bf16.mxu0 0
      %2451 = vmatpush1.bf16.msra.mxu0 0
      %2452 = vmatprep.subr.bf16.mxu0 0
      %2453 = vmatpush1.bf16.msra.mxu0 %v2436
      %2454 = vmatprep.subr.bf16.mxu0 0
      %2455 = vmatpush2.bf16.msra.mxu0 0
      %2456 = vmatprep.subr.bf16.mxu0 0
      %2457 = vmatpush2.bf16.msra.mxu0 0
      %2458 = vmatprep.subr.bf16.mxu0 0
      %2459 = vmatpush2.bf16.msra.mxu0 0
      %2460 = vmatprep.subr.bf16.mxu0 0
      %2461 = vmatpush2.bf16.msra.mxu0 0
      %2462 = vmatprep.subr.bf16.mxu0 0
      %2463 = vmatpush2.bf16.msra.mxu0 0
      %2464 = vmatprep.subr.bf16.mxu0 0
      %2465 = vmatpush2.bf16.msra.mxu0 0
      %2466 = vmatprep.subr.bf16.mxu0 0
      %2467 = vmatpush2.bf16.msra.mxu0 0
      %2468 = vmatprep.subr.bf16.mxu0 0
      %2469 = vmatpush2.bf16.msra.mxu0 0
      %2470 = vmatprep.mubr.bf16.mxu0 0
      %2471 = vmatmul.mubr.bf16.gmra.mxu0 %v2430
      %v2472 = vpop.f32.mrf.mxu0
      %v2473 = vadd.f32 0.0, %v2472
      %v2474 = vpop.f32.mrf.mxu0
      %v2475 = vpop.f32.mrf.mxu0
      %v2476 = vadd.f32 0.0, %v2475
      %v2477 = vpop.f32.mrf.mxu0
      %2478 = vmatprep.mubr.bf16.mxu0 0
      %2479 = vmatmul.mubr.bf16.gmra.mxu0 %v2433
      %v2480 = vpop.f32.mrf.mxu0
      %v2481 = vadd.f32 0.0, %v2480
      %v2482 = vpop.f32.mrf.mxu0
      %v2483 = vpop.f32.mrf.mxu0
      %v2484 = vpop.f32.mrf.mxu0
      %2485 = vdwg.mxu0
      %v2486 = vadd.f32 %v1977, %v2473
      %v2487 = vadd.f32 %v1978, %v2476
      %v2488 = vadd.f32 %v1979, %v2481
      %v2489 = vld [vmem:[%s10] sm:$0x1]
      %v2491 = vlaneseq
      %v2492 = vshrl.u32 %v2491, 7
      %v2493 = vsub.s32 0, %v2492
      %v2494 = vrot.slane %v2489, %v2493
      %v2496 = vadd.f32 %v2486, %v2494
      %v2497 = vadd.f32 %v2487, %v2494
      %v2498 = vadd.f32 %v2488, %v2494
      %v2499 = vadd.f32 %v388, %v2496
      %v2500 = vadd.f32 %v389, %v2497
      %v2501 = vadd.f32 %v390, %v2498
      %2502 = vst.msk [vmem:[%s386] sm:$0xff] %vm393, %v2499
      %2503 = vst.msk [vmem:[%s386 + $0x8] sm:$0xff] %vm393, %v2500
      %2504 = vst.msk [vmem:[%s386 + $0x10] sm:$0x1] %vm400, %v2501
      %p2505 = scmp.lt.s32.totalorder %s22, 1
      %s2506 = scalar_select %p2505, %s22, 1
      %s2507 = smul.addr %s2506, 3
      %s2508 = smul.addr %s2507, 8
      %s2509 = scalar_lea.vmem %s11, %s2508
      // Predicated region
      $region65: #{maskclip_featurizer.9} parent=63 // pred_check
        %p2510 = pneg %p276
      $region66: #{maskclip_featurizer.9} parent=63 // pred_check_branch
        %2512 = sbr.rel (%p2510) target = $region68
      $region67: #{maskclip_featurizer.9} parent=63 // pred_region
        _
      $region68: #{maskclip_featurizer.9} parent=63 // pred_fallthru
        _
    $region64: #{maskclip_featurizer.9} parent=5 // pred_fallthru
      _
    %p2513 = scmp.le.s32.totalorder 2, %s17
    // Predicated region
    $region69: #{maskclip_featurizer.9} parent=5 // pred_check
      %p2514 = pneg %p2513
    $region70: #{maskclip_featurizer.9} parent=5 // pred_check_branch
      %2516 = sbr.rel (%p2514) target = $region72
    $region71: #{maskclip_featurizer.9} parent=5 // pred_region
      %s2517 = ssub.s32 %s17, 2
      // Predicated region
      $region73: #{maskclip_featurizer.9} parent=71 // pred_check
        %p2518 = pneg %p282
      $region74: #{maskclip_featurizer.9} parent=71 // pred_check_branch
        %2520 = sbr.rel (%p2518) target = $region76
      $region75: #{maskclip_featurizer.9} parent=71 // pred_region
        %p2521 = scmp.lt.s32.totalorder %s23, 1
        %s2522 = scalar_select %p2521, %s23, 1
        %s2523 = smul.addr %s2522, 3
        %s2524 = smul.addr %s2523, 8
        %s2525 = scalar_lea.vmem %s11, %s2524
      $region76: #{maskclip_featurizer.9} parent=71 // pred_fallthru
        _
    $region72: #{maskclip_featurizer.9} parent=5 // pred_fallthru
      _
  $region6: #{maskclip_featurizer.9} parent=0 // loop_footer
    %s21 = sadd.s32 1, %s17
  $region7: #{maskclip_featurizer.9} parent=0 // loop_footer_branch
    %16 = sbr.rel target = $region3
  $region8: #{maskclip_featurizer.9} parent=0 // loop_exit
    _

// kernel: maskclip_featurizer.13
$region0: #{maskclip_featurizer.13}
  #allocation0 [shape = 'u32[]', space=smem, size = 0x4, offset = 0x4, fixed_abs, tag = 'smem constant byte address 0x4 - core index']
  #allocation1 [shape = 'u32[144,128]{1,0:T(1,128)}', space=vmem, size = 0x12000, scoped, tag = 'internal scratch']
  %s0 = inlined_call_operand.vmem [shape: f32[34,32], index: 0, kind: input, shape index: {}]
  %s1 = inlined_call_operand.vmem [shape: f32[1,32], index: 1, kind: input, shape index: {}]
  %s2 = inlined_call_operand.vmem [shape: f32[1,32], index: 2, kind: input, shape index: {}]
  %s3 = inlined_call_operand.vmem [shape: bf16[32,16], index: 3, kind: input, shape index: {}]
  %s4 = inlined_call_operand.vmem [shape: f32[1,16], index: 4, kind: input, shape index: {}]
  %s5 = inlined_call_operand.vmem [shape: f32[34,16], index: 5, kind: output, shape index: {}]
  %s6 = sld [smem:[#allocation0]]
  $region30: #{maskclip_featurizer.13} parent=0
    _
  %s8 = ssub.s32 1, %s6
  %s9 = scalar_select 0, %s8, %s6
  // Predicated region
  $region2: #{maskclip_featurizer.13} parent=0 // pred_check
    _
  $region3: #{maskclip_featurizer.13} parent=0 // pred_check_branch
    %11 = sbr.rel (0) target = $region5
  $region4: #{maskclip_featurizer.13} parent=0 // pred_region
    _
  $region5: #{maskclip_featurizer.13} parent=0 // pred_fallthru
    _
  // Predicated region
  $region6: #{maskclip_featurizer.13} parent=0 // pred_check
    _
  $region7: #{maskclip_featurizer.13} parent=0 // pred_check_branch
    %13 = sbr.rel (0) target = $region9
  $region8: #{maskclip_featurizer.13} parent=0 // pred_region
    _
  $region9: #{maskclip_featurizer.13} parent=0 // pred_fallthru
    _
  // Predicated region
  $region10: #{maskclip_featurizer.13} parent=0 // pred_check
    _
  $region11: #{maskclip_featurizer.13} parent=0 // pred_check_branch
    %15 = sbr.rel (0) target = $region13
  $region12: #{maskclip_featurizer.13} parent=0 // pred_region
    _
  $region13: #{maskclip_featurizer.13} parent=0 // pred_fallthru
    _
  // Predicated region
  $region14: #{maskclip_featurizer.13} parent=0 // pred_check
    _
  $region15: #{maskclip_featurizer.13} parent=0 // pred_check_branch
    %17 = sbr.rel (0) target = $region17
  $region16: #{maskclip_featurizer.13} parent=0 // pred_region
    _
  $region17: #{maskclip_featurizer.13} parent=0 // pred_fallthru
    _
  // Predicated region
  $region18: #{maskclip_featurizer.13} parent=0 // pred_check
    _
  $region19: #{maskclip_featurizer.13} parent=0 // pred_check_branch
    %19 = sbr.rel (0) target = $region21
  $region20: #{maskclip_featurizer.13} parent=0 // pred_region
    _
  $region21: #{maskclip_featurizer.13} parent=0 // pred_fallthru
    _
  %v21 = vld [vmem:[%s0] sm:$0xff]
  %v22 = vld [vmem:[%s0 + $0x8] sm:$0xff]
  %v23 = vld [vmem:[%s0 + $0x10] sm:$0xff]
  %v24 = vld [vmem:[%s0 + $0x18] sm:$0xff]
  %v25 = vld [vmem:[%s0 + $0x20] sm:$0x3]
  %v26 = vld [vmem:[%s1] sm:$0x1]
  %v27 = vld [vmem:[%s2] sm:$0x1]
  %vm28 = vcmask 261120
  %v29 = vsel %vm28, %v21, 0.0
  %30 = vadd.xlane.f32.xlu0 %v29
  %v31 = vpop.xlane.xlu0 %30
  %v32 = vsel %vm28, %v22, 0.0
  %33 = vadd.xlane.f32.xlu0 %v32
  %v34 = vpop.xlane.xlu0 %33
  %v35 = vsel %vm28, %v23, 0.0
  %36 = vadd.xlane.f32.xlu0 %v35
  %v37 = vpop.xlane.xlu0 %36
  %v38 = vsel %vm28, %v24, 0.0
  %39 = vadd.xlane.f32.xlu0 %v38
  %v40 = vpop.xlane.xlu0 %39
  %vm41 = vcmask 254976
  %v42 = vsel %vm41, %v25, 0.0
  %43 = vadd.xlane.f32.xlu0 %v42
  %v44 = vpop.xlane.xlu0 %43
  %v45 = vrcp.pop 32.0
  %v46 = vmul.f32 %v31, %v45
  %v47 = vmul.f32 %v34, %v45
  %v48 = vmul.f32 %v37, %v45
  %v49 = vmul.f32 %v40, %v45
  %v50 = vmul.f32 %v44, %v45
  %v51 = vsub.f32 %v21, %v46
  %v52 = vsub.f32 %v22, %v47
  %v53 = vsub.f32 %v23, %v48
  %v54 = vsub.f32 %v24, %v49
  %v55 = vsub.f32 %v25, %v50
  %v56 = vmul.f32 %v51, %v51
  %v57 = vmul.f32 %v52, %v52
  %v58 = vmul.f32 %v53, %v53
  %v59 = vmul.f32 %v54, %v54
  %v60 = vmul.f32 %v55, %v55
  %v61 = vsel %vm28, %v56, 0.0
  %62 = vadd.xlane.f32.xlu0 %v61
  %v63 = vpop.xlane.xlu0 %62
  %v64 = vsel %vm28, %v57, 0.0
  %65 = vadd.xlane.f32.xlu0 %v64
  %v66 = vpop.xlane.xlu0 %65
  %v67 = vsel %vm28, %v58, 0.0
  %68 = vadd.xlane.f32.xlu0 %v67
  %v69 = vpop.xlane.xlu0 %68
  %v70 = vsel %vm28, %v59, 0.0
  %71 = vadd.xlane.f32.xlu0 %v70
  %v72 = vpop.xlane.xlu0 %71
  %v73 = vsel %vm41, %v60, 0.0
  %74 = vadd.xlane.f32.xlu0 %v73
  %v75 = vpop.xlane.xlu0 %74
  %v76 = vmul.f32 %v63, %v45
  %v77 = vmul.f32 %v66, %v45
  %v78 = vmul.f32 %v69, %v45
  %v79 = vmul.f32 %v72, %v45
  %v80 = vmul.f32 %v75, %v45
  %v81 = vadd.f32 %v76, 1e-05
  %v82 = vadd.f32 %v77, 1e-05
  %v83 = vadd.f32 %v78, 1e-05
  %v84 = vadd.f32 %v79, 1e-05
  %v85 = vadd.f32 %v80, 1e-05
  %v86 = vrsqrt.pop %v81
  %v87 = vrsqrt.pop %v82
  %v88 = vrsqrt.pop %v83
  %v89 = vrsqrt.pop %v84
  %v90 = vrsqrt.pop %v85
  %v91 = vmul.f32 %v51, %v86
  %v92 = vmul.f32 %v52, %v87
  %v93 = vmul.f32 %v53, %v88
  %v94 = vmul.f32 %v54, %v89
  %v95 = vmul.f32 %v55, %v90
  %v97 = vlaneseq
  %v98 = vshrl.u32 %v97, 7
  %v99 = vsub.s32 0, %v98
  %v100 = vrot.slane %v26, %v99
  %v102 = vmul.f32 %v91, %v100
  %v103 = vmul.f32 %v92, %v100
  %v104 = vmul.f32 %v93, %v100
  %v105 = vmul.f32 %v94, %v100
  %v106 = vmul.f32 %v95, %v100
  %v108 = vlaneseq
  %v109 = vshrl.u32 %v108, 7
  %v110 = vsub.s32 0, %v109
  %v111 = vrot.slane %v27, %v110
  %v113 = vadd.f32 %v102, %v111
  %v114 = vadd.f32 %v103, %v111
  %v115 = vadd.f32 %v104, %v111
  %v116 = vadd.f32 %v105, %v111
  %v117 = vadd.f32 %v106, %v111
  %v118 = vpack.c.bf16 %v114, %v113
  %v119 = vpack.c.bf16 %v116, %v115
  %v120 = vpack.c.bf16 %v117, %v117
  %v121 = vld [vmem:[%s3] sm:$0xf]
  %v122 = vld [vmem:[%s3 + $0x4] sm:$0xf]
  %v123 = vld [vmem:[%s3 + $0x8] sm:$0xf]
  %v124 = vld [vmem:[%s3 + $0xc] sm:$0xf]
  %v125 = vld [vmem:[%s4] sm:$0x1]
  %v127 = vlaneseq
  %v128 = vshrl.u32 %v127, 7
  %v129 = vsub.s32 0, %v128
  %v130 = vrot.slane %v125, %v129
  %v136 = vunpack.c.l.b16 %v121
  %v137 = vunpack.c.l.b16 %v122
  %v138 = vunpack.c.l.b16 %v123
  %v139 = vunpack.c.l.b16 %v124
  %v140 = vpack.c.b16 %v137, %v136
  %v141 = vpack.c.b16 %v139, %v138
  %v145 = vsel %vm28, %v118, 0
  %v148 = vsel %vm28, %v119, 0
  %v151 = vsel %vm28, %v120, 0
  %153 = vmatprep.subr.bf16.mxu0 0
  %154 = vmatpush1.bf16.msra.mxu0 0
  %155 = vmatprep.subr.bf16.mxu0 0
  %156 = vmatpush1.bf16.msra.mxu0 0
  %157 = vmatprep.subr.bf16.mxu0 0
  %158 = vmatpush1.bf16.msra.mxu0 0
  %159 = vmatprep.subr.bf16.mxu0 0
  %160 = vmatpush1.bf16.msra.mxu0 0
  %161 = vmatprep.subr.bf16.mxu0 0
  %162 = vmatpush1.bf16.msra.mxu0 0
  %163 = vmatprep.subr.bf16.mxu0 0
  %164 = vmatpush1.bf16.msra.mxu0 0
  %165 = vmatprep.subr.bf16.mxu0 0
  %166 = vmatpush1.bf16.msra.mxu0 %v141
  %167 = vmatprep.subr.bf16.mxu0 0
  %168 = vmatpush1.bf16.msra.mxu0 %v140
  %169 = vmatprep.subr.bf16.mxu0 0
  %170 = vmatpush2.bf16.msra.mxu0 0
  %171 = vmatprep.subr.bf16.mxu0 0
  %172 = vmatpush2.bf16.msra.mxu0 0
  %173 = vmatprep.subr.bf16.mxu0 0
  %174 = vmatpush2.bf16.msra.mxu0 0
  %175 = vmatprep.subr.bf16.mxu0 0
  %176 = vmatpush2.bf16.msra.mxu0 0
  %177 = vmatprep.subr.bf16.mxu0 0
  %178 = vmatpush2.bf16.msra.mxu0 0
  %179 = vmatprep.subr.bf16.mxu0 0
  %180 = vmatpush2.bf16.msra.mxu0 0
  %181 = vmatprep.subr.bf16.mxu0 0
  %182 = vmatpush2.bf16.msra.mxu0 0
  %183 = vmatprep.subr.bf16.mxu0 0
  %184 = vmatpush2.bf16.msra.mxu0 0
  %185 = vmatprep.mubr.bf16.mxu0 0
  %186 = vmatmul.mubr.bf16.gmra.mxu0 %v145
  %v187 = vpop.f32.mrf.mxu0
  %v188 = vadd.f32 %v130, %v187
  %v189 = vpop.f32.mrf.mxu0
  %v190 = vpop.f32.mrf.mxu0
  %v191 = vadd.f32 %v130, %v190
  %v192 = vpop.f32.mrf.mxu0
  %193 = vmatprep.mubr.bf16.mxu0 0
  %194 = vmatmul.mubr.bf16.gmra.mxu0 %v148
  %v195 = vpop.f32.mrf.mxu0
  %v196 = vadd.f32 %v130, %v195
  %v197 = vpop.f32.mrf.mxu0
  %v198 = vpop.f32.mrf.mxu0
  %v199 = vadd.f32 %v130, %v198
  %v200 = vpop.f32.mrf.mxu0
  %201 = vmatprep.mubr.bf16.mxu0 0
  %202 = vmatmul.mubr.bf16.gmra.mxu0 %v151
  %v203 = vpop.f32.mrf.mxu0
  %v204 = vadd.f32 %v130, %v203
  %v205 = vpop.f32.mrf.mxu0
  %v206 = vpop.f32.mrf.mxu0
  %v207 = vpop.f32.mrf.mxu0
  %208 = vdwg.mxu0
  %vm209 = vcmask 130048
  %210 = vst.msk [vmem:[%s5] sm:$0xff] %vm209, %v188
  %211 = vst.msk [vmem:[%s5 + $0x8] sm:$0xff] %vm209, %v191
  %212 = vst.msk [vmem:[%s5 + $0x10] sm:$0xff] %vm209, %v196
  %213 = vst.msk [vmem:[%s5 + $0x18] sm:$0xff] %vm209, %v199
  %vm214 = vcmask 123904
  %215 = vst.msk [vmem:[%s5 + $0x20] sm:$0x3] %vm214, %v204
  // Predicated region
  $region22: #{maskclip_featurizer.13} parent=0 // pred_check
    _
  $region23: #{maskclip_featurizer.13} parent=0 // pred_check_branch
    %217 = sbr.rel (0) target = $region25
  $region24: #{maskclip_featurizer.13} parent=0 // pred_region
    _
  $region25: #{maskclip_featurizer.13} parent=0 // pred_fallthru
    _
  // Predicated region
  $region26: #{maskclip_featurizer.13} parent=0 // pred_check
    _
  $region27: #{maskclip_featurizer.13} parent=0 // pred_check_branch
    %219 = sbr.rel (0) target = $region29
  $region28: #{maskclip_featurizer.13} parent=0 // pred_region
    _
  $region29: #{maskclip_featurizer.13} parent=0 // pred_fallthru
    _

</llo_original>
